<compile_context>
chip_gen: v7x
topology: tpu7x:2x2x1
jax: 0.10.0
libtpu: 0.0.40
codegen_flags: <defaults>
</compile_context>

<pallas_src>
import math
from functools import partial

import jax
import jax.numpy as jnp
from jax import lax
from jax.experimental import pallas as pl
from jax.experimental.pallas import tpu as pltpu

# ------------------- small hyper-parameters (module ctor args) ---------------
D_MODEL = 32
N_LAYERS = 3          # N decoder blocks (spec default 12; small for the test)
HEADS = 2
D_K = D_MODEL // HEADS
D_FF = 2 * D_MODEL    # TODO(synk): FeedForward hidden width not given in spec
ADJ_SIZE = 4
COORD = 2
VISUAL = 16
D_IN = COORD + ADJ_SIZE + VISUAL
MAX_NODES = 21
NORM_EPS = 1e-6

PARAM_KEYS = (
    'in_W', 'in_b', 'pe',
    'n1a', 'n1b', 'wq', 'bq', 'wk', 'bk', 'wv', 'bv', 'wo', 'bo',
    'n2a', 'n2b', 'f1W', 'f1b', 'f2W', 'f2b',
    'oa1W', 'oa1b', 'oa2W', 'oa2b', 'oc1W', 'oc1b', 'oc2W', 'oc2b',
)


# ------------------------------- fused kernel --------------------------------

def _norm(x, alpha, bias):
    # Annotated-Transformer "Norm": alpha*(x-mean)/(std_unbiased+eps)+bias
    mu = jnp.mean(x, axis=-1, keepdims=True)
    xc = x - mu
    var = jnp.sum(xc * xc, axis=-1, keepdims=True) / (x.shape[-1] - 1)
    return alpha * xc / (jnp.sqrt(var) + NORM_EPS) + bias


def _decoder_kernel(len_ref, x_ref, *rest, seq_len):
    p = dict(zip(PARAM_KEYS, rest[:len(PARAM_KEYS)]))
    adj_ref, coord_ref = rest[len(PARAM_KEYS):]

    b = pl.program_id(0)
    L = len_ref[b]                                     # scalar from SMEM prefetch

    # causal & key-padding mask built in-kernel (no HBM mask traffic)
    qi = lax.broadcasted_iota(jnp.int32, (seq_len, seq_len), 0)
    ki = lax.broadcasted_iota(jnp.int32, (seq_len, seq_len), 1)
    allowed = (ki <= qi) & (ki < L)

    # input linear + ReLU, then positional encoding (x*sqrt(d_model) + pe)
    x = x_ref[0]                                       # (S, D_IN)
    h = jnp.dot(x, p['in_W'][...], preferred_element_type=jnp.float32) + p['in_b'][...]
    h = jnp.maximum(h, 0.0)
    h = h * math.sqrt(D_MODEL) + p['pe'][...]

    inv_sqrt_dk = 1.0 / math.sqrt(D_K)
    for l in range(N_LAYERS):                          # static: fully unrolled
        # --- pre-norm multi-head self-attention + residual ---
        a = _norm(h, p['n1a'][l], p['n1b'][l])
        q = jnp.dot(a, p['wq'][l], preferred_element_type=jnp.float32) + p['bq'][l]
        k = jnp.dot(a, p['wk'][l], preferred_element_type=jnp.float32) + p['bk'][l]
        v = jnp.dot(a, p['wv'][l], preferred_element_type=jnp.float32) + p['bv'][l]
        head_outs = []
        for hh in range(HEADS):                        # static: fully unrolled
            sl = slice(hh * D_K, (hh + 1) * D_K)
            s = jnp.dot(q[:, sl], k[:, sl].T,
                        preferred_element_type=jnp.float32) * inv_sqrt_dk
            s = jnp.where(allowed, s, -1e9)            # masked_fill(mask==0, -1e9)
            s = s - jnp.max(s, axis=-1, keepdims=True)
            e = jnp.exp(s)
            pr = e / jnp.sum(e, axis=-1, keepdims=True)
            head_outs.append(jnp.dot(pr, v[:, sl], preferred_element_type=jnp.float32))
        att = jnp.concatenate(head_outs, axis=-1)
        att = jnp.dot(att, p['wo'][l], preferred_element_type=jnp.float32) + p['bo'][l]
        h = h + att

        # --- pre-norm feed-forward + residual ---
        a2 = _norm(h, p['n2a'][l], p['n2b'][l])
        f = jnp.dot(a2, p['f1W'][l], preferred_element_type=jnp.float32) + p['f1b'][l]
        f = jnp.maximum(f, 0.0)
        f = jnp.dot(f, p['f2W'][l], preferred_element_type=jnp.float32) + p['f2b'][l]
        h = h + f

    # NOTE: the spec's final self.norm is not applied in forward() -> output = x

    # adjacency head: relu -> sigmoid
    a1 = jnp.maximum(
        jnp.dot(h, p['oa1W'][...], preferred_element_type=jnp.float32) + p['oa1b'][...], 0.0)
    adj_ref[0] = jax.nn.sigmoid(
        jnp.dot(a1, p['oa2W'][...], preferred_element_type=jnp.float32) + p['oa2b'][...])

    # coordinate head: relu -> tanh
    c1 = jnp.maximum(
        jnp.dot(h, p['oc1W'][...], preferred_element_type=jnp.float32) + p['oc1b'][...], 0.0)
    coord_ref[0] = jnp.tanh(
        jnp.dot(c1, p['oc2W'][...], preferred_element_type=jnp.float32) + p['oc2b'][...])


# --------------------------------- wrapper -----------------------------------

def forward(params, x, input_len):
    B, S, Din = x.shape

    flat = []
    for kname in PARAM_KEYS:
        a = params[kname]
        if kname == 'pe':
            a = a[:S]                                   # pe[:, :seq_len]
        flat.append(a)

    def const_spec(arr):
        nd = arr.ndim
        return pl.BlockSpec(arr.shape, lambda b, lens, nd=nd: (0,) * nd)

    grid_spec = pltpu.PrefetchScalarGridSpec(
        num_scalar_prefetch=1,                          # input_len -> SMEM
        grid=(B,),
        in_specs=[pl.BlockSpec((1, S, Din), lambda b, lens: (b, 0, 0))]
                 + [const_spec(a) for a in flat],
        out_specs=[pl.BlockSpec((1, S, ADJ_SIZE), lambda b, lens: (b, 0, 0)),
                   pl.BlockSpec((1, S, COORD), lambda b, lens: (b, 0, 0))],
    )
    out_shape = (jax.ShapeDtypeStruct((B, S, ADJ_SIZE), jnp.float32),
                 jax.ShapeDtypeStruct((B, S, COORD), jnp.float32))

    return pl.pallas_call(
        partial(_decoder_kernel, seq_len=S),
        out_shape=out_shape,
        grid_spec=grid_spec,
        compiler_params=pltpu.CompilerParams(dimension_semantics=("parallel",)),
    )(input_len.astype(jnp.int32), x, *flat)


# ------------------------------ parameter init -------------------------------

def _make_pe(max_len, d_model):
    pos = jnp.arange(max_len, dtype=jnp.float32)[:, None]
    even = jnp.arange(0, d_model, 2, dtype=jnp.float32)
    odd = even + 1.0
    pe = jnp.zeros((max_len, d_model), jnp.float32)
    pe = pe.at[:, 0::2].set(jnp.sin(pos / 10000.0 ** (2.0 * even / d_model)))
    pe = pe.at[:, 1::2].set(jnp.cos(pos / 10000.0 ** (2.0 * odd / d_model)))
    return pe


def init_params(key):
    keys = iter(jax.random.split(key, 128))

    def xavier(in_f, out_f):
        bound = math.sqrt(6.0 / (in_f + out_f))
        w = jax.random.uniform(next(keys), (out_f, in_f), jnp.float32, -bound, bound)
        return w.T, jnp.full((1, out_f), 0.01, jnp.float32)   # (in,out) layout, bias=0.01

    def stack(make, n):
        ws, bs = zip(*[make() for _ in range(n)])
        return jnp.stack(ws), jnp.stack(bs)

    p = {}
    p['in_W'], p['in_b'] = xavier(D_IN, D_MODEL)
    p['pe'] = _make_pe(MAX_NODES, D_MODEL)
    ones = jnp.ones((N_LAYERS, 1, D_MODEL), jnp.float32)
    zeros = jnp.zeros((N_LAYERS, 1, D_MODEL), jnp.float32)
    p['n1a'], p['n1b'] = ones, zeros
    p['n2a'], p['n2b'] = ones, zeros
    for name in ('q', 'k', 'v', 'o'):
        p['w' + name], p['b' + name] = stack(lambda: xavier(D_MODEL, D_MODEL), N_LAYERS)
    p['f1W'], p['f1b'] = stack(lambda: xavier(D_MODEL, D_FF), N_LAYERS)
    p['f2W'], p['f2b'] = stack(lambda: xavier(D_FF, D_MODEL), N_LAYERS)
    p['oa1W'], p['oa1b'] = xavier(D_MODEL, D_MODEL // 2)
    p['oa2W'], p['oa2b'] = xavier(D_MODEL // 2, ADJ_SIZE)
    p['oc1W'], p['oc1b'] = xavier(D_MODEL, D_MODEL // 2)
    p['oc2W'], p['oc2b'] = xavier(D_MODEL // 2, COORD)
    return p


# ----------------------------------- main -------------------------------------

if __name__ == "__main__":
    key = jax.random.PRNGKey(0)
    kp, kx = jax.random.split(key)
    params = init_params(kp)

    B, S = 2, 8
    x = jax.random.normal(kx, (B, S, D_IN), jnp.float32)
    input_len = jnp.array([8, 6], jnp.int32)

    fwd = jax.jit(forward)
    output_adj, output_coord = fwd(params, x, input_len)
    jax.block_until_ready((output_adj, output_coord))

    assert output_adj.shape == (B, S, ADJ_SIZE)
    assert output_coord.shape == (B, S, COORD)
    assert bool(jnp.all(jnp.isfinite(output_adj))) and bool(jnp.all(jnp.isfinite(output_coord)))
    print("KERNEL_OK")
</pallas_src>

<mosaic_0001>
module attributes {stable_mosaic.version = 11 : i64} {
  func.func @_decoder_kernel(%arg0: i32, %arg1: memref<2xi32, #tpu.memory_space<smem>>, %arg2: memref<1x8x22xf32, #tpu.memory_space<vmem>>, %arg3: memref<22x32xf32, #tpu.memory_space<vmem>>, %arg4: memref<1x32xf32, #tpu.memory_space<vmem>>, %arg5: memref<8x32xf32, #tpu.memory_space<vmem>>, %arg6: memref<3x1x32xf32, #tpu.memory_space<vmem>>, %arg7: memref<3x1x32xf32, #tpu.memory_space<vmem>>, %arg8: memref<3x32x32xf32, #tpu.memory_space<vmem>>, %arg9: memref<3x1x32xf32, #tpu.memory_space<vmem>>, %arg10: memref<3x32x32xf32, #tpu.memory_space<vmem>>, %arg11: memref<3x1x32xf32, #tpu.memory_space<vmem>>, %arg12: memref<3x32x32xf32, #tpu.memory_space<vmem>>, %arg13: memref<3x1x32xf32, #tpu.memory_space<vmem>>, %arg14: memref<3x32x32xf32, #tpu.memory_space<vmem>>, %arg15: memref<3x1x32xf32, #tpu.memory_space<vmem>>, %arg16: memref<3x1x32xf32, #tpu.memory_space<vmem>>, %arg17: memref<3x1x32xf32, #tpu.memory_space<vmem>>, %arg18: memref<3x32x64xf32, #tpu.memory_space<vmem>>, %arg19: memref<3x1x64xf32, #tpu.memory_space<vmem>>, %arg20: memref<3x64x32xf32, #tpu.memory_space<vmem>>, %arg21: memref<3x1x32xf32, #tpu.memory_space<vmem>>, %arg22: memref<32x16xf32, #tpu.memory_space<vmem>>, %arg23: memref<1x16xf32, #tpu.memory_space<vmem>>, %arg24: memref<16x4xf32, #tpu.memory_space<vmem>>, %arg25: memref<1x4xf32, #tpu.memory_space<vmem>>, %arg26: memref<32x16xf32, #tpu.memory_space<vmem>>, %arg27: memref<1x16xf32, #tpu.memory_space<vmem>>, %arg28: memref<16x2xf32, #tpu.memory_space<vmem>>, %arg29: memref<1x2xf32, #tpu.memory_space<vmem>>, %arg30: memref<1x8x4xf32, #tpu.memory_space<vmem>>, %arg31: memref<1x8x2xf32, #tpu.memory_space<vmem>>) attributes {dimension_semantics = [#tpu.dimension_semantics<parallel>], iteration_bounds = array<i64: 2>, scalar_prefetch = 1 : i64, scratch_operands = 0 : i64, tpu.core_type = #tpu.core_type<tc>, window_params = [{transform_indices = @transform_0, window_bounds = array<i64: 1, 8, 22>}, {pipeline_mode = #tpu.pipeline_mode<synchronous>, transform_indices = @transform_1, window_bounds = array<i64: 22, 32>}, {pipeline_mode = #tpu.pipeline_mode<synchronous>, transform_indices = @transform_2, window_bounds = array<i64: 1, 32>}, {pipeline_mode = #tpu.pipeline_mode<synchronous>, transform_indices = @transform_3, window_bounds = array<i64: 8, 32>}, {pipeline_mode = #tpu.pipeline_mode<synchronous>, transform_indices = @transform_4, window_bounds = array<i64: 3, 1, 32>}, {pipeline_mode = #tpu.pipeline_mode<synchronous>, transform_indices = @transform_5, window_bounds = array<i64: 3, 1, 32>}, {pipeline_mode = #tpu.pipeline_mode<synchronous>, transform_indices = @transform_6, window_bounds = array<i64: 3, 32, 32>}, {pipeline_mode = #tpu.pipeline_mode<synchronous>, transform_indices = @transform_7, window_bounds = array<i64: 3, 1, 32>}, {pipeline_mode = #tpu.pipeline_mode<synchronous>, transform_indices = @transform_8, window_bounds = array<i64: 3, 32, 32>}, {pipeline_mode = #tpu.pipeline_mode<synchronous>, transform_indices = @transform_9, window_bounds = array<i64: 3, 1, 32>}, {pipeline_mode = #tpu.pipeline_mode<synchronous>, transform_indices = @transform_10, window_bounds = array<i64: 3, 32, 32>}, {pipeline_mode = #tpu.pipeline_mode<synchronous>, transform_indices = @transform_11, window_bounds = array<i64: 3, 1, 32>}, {pipeline_mode = #tpu.pipeline_mode<synchronous>, transform_indices = @transform_12, window_bounds = array<i64: 3, 32, 32>}, {pipeline_mode = #tpu.pipeline_mode<synchronous>, transform_indices = @transform_13, window_bounds = array<i64: 3, 1, 32>}, {pipeline_mode = #tpu.pipeline_mode<synchronous>, transform_indices = @transform_14, window_bounds = array<i64: 3, 1, 32>}, {pipeline_mode = #tpu.pipeline_mode<synchronous>, transform_indices = @transform_15, window_bounds = array<i64: 3, 1, 32>}, {pipeline_mode = #tpu.pipeline_mode<synchronous>, transform_indices = @transform_16, window_bounds = array<i64: 3, 32, 64>}, {pipeline_mode = #tpu.pipeline_mode<synchronous>, transform_indices = @transform_17, window_bounds = array<i64: 3, 1, 64>}, {pipeline_mode = #tpu.pipeline_mode<synchronous>, transform_indices = @transform_18, window_bounds = array<i64: 3, 64, 32>}, {pipeline_mode = #tpu.pipeline_mode<synchronous>, transform_indices = @transform_19, window_bounds = array<i64: 3, 1, 32>}, {pipeline_mode = #tpu.pipeline_mode<synchronous>, transform_indices = @transform_20, window_bounds = array<i64: 32, 16>}, {pipeline_mode = #tpu.pipeline_mode<synchronous>, transform_indices = @transform_21, window_bounds = array<i64: 1, 16>}, {pipeline_mode = #tpu.pipeline_mode<synchronous>, transform_indices = @transform_22, window_bounds = array<i64: 16, 4>}, {pipeline_mode = #tpu.pipeline_mode<synchronous>, transform_indices = @transform_23, window_bounds = array<i64: 1, 4>}, {pipeline_mode = #tpu.pipeline_mode<synchronous>, transform_indices = @transform_24, window_bounds = array<i64: 32, 16>}, {pipeline_mode = #tpu.pipeline_mode<synchronous>, transform_indices = @transform_25, window_bounds = array<i64: 1, 16>}, {pipeline_mode = #tpu.pipeline_mode<synchronous>, transform_indices = @transform_26, window_bounds = array<i64: 16, 2>}, {pipeline_mode = #tpu.pipeline_mode<synchronous>, transform_indices = @transform_27, window_bounds = array<i64: 1, 2>}, {transform_indices = @transform_28, window_bounds = array<i64: 1, 8, 4>}, {transform_indices = @transform_29, window_bounds = array<i64: 1, 8, 2>}]} {
    %0 = arith.index_cast %arg0 : i32 to index
    %1 = memref.load %arg1[%0] : memref<2xi32, #tpu.memory_space<smem>>
    %2 = tpu.iota {dimensions = array<i32: 0>} : vector<8x8xi32>
    %3 = tpu.iota {dimensions = array<i32: 1>} : vector<8x8xi32>
    %4 = arith.cmpi sle, %3, %2 : vector<8x8xi32>
    %5 = vector.broadcast %1 : i32 to vector<8x8xi32>
    %6 = arith.cmpi slt, %3, %5 : vector<8x8xi32>
    %7 = arith.andi %4, %6 : vector<8x8xi1>
    %c0 = arith.constant 0 : index
    %c0_0 = arith.constant 0 : index
    %c0_1 = arith.constant 0 : index
    %8 = vector.load %arg2[%c0, %c0_0, %c0_1] : memref<1x8x22xf32, #tpu.memory_space<vmem>>, vector<1x8x22xf32>
    %9 = vector.shape_cast %8 : vector<1x8x22xf32> to vector<8x22xf32>
    %c0_2 = arith.constant 0 : index
    %c0_3 = arith.constant 0 : index
    %10 = vector.load %arg3[%c0_2, %c0_3] : memref<22x32xf32, #tpu.memory_space<vmem>>, vector<22x32xf32>
    %cst = arith.constant dense<0.000000e+00> : vector<8x32xf32>
    %11 = tpu.matmul %9, %10, %cst {dimension_numbers = #tpu.dot_dimension_numbers<[1], [0], [0], [1], [0, 0, 1, 1], [], []>} : vector<8x22xf32>, vector<22x32xf32>, vector<8x32xf32> -> vector<8x32xf32>
    %c0_4 = arith.constant 0 : index
    %c0_5 = arith.constant 0 : index
    %12 = vector.load %arg4[%c0_4, %c0_5] : memref<1x32xf32, #tpu.memory_space<vmem>>, vector<1x32xf32>
    %13 = vector.broadcast %12 : vector<1x32xf32> to vector<8x32xf32>
    %14 = arith.addf %11, %13 : vector<8x32xf32>
    %cst_6 = arith.constant 0.000000e+00 : f32
    %15 = vector.broadcast %cst_6 : f32 to vector<8x32xf32>
    %16 = arith.maximumf %14, %15 : vector<8x32xf32>
    %cst_7 = arith.constant 5.65685415 : f32
    %17 = vector.broadcast %cst_7 : f32 to vector<8x32xf32>
    %18 = arith.mulf %16, %17 : vector<8x32xf32>
    %c0_8 = arith.constant 0 : index
    %c0_9 = arith.constant 0 : index
    %19 = vector.load %arg5[%c0_8, %c0_9] : memref<8x32xf32, #tpu.memory_space<vmem>>, vector<8x32xf32>
    %20 = arith.addf %18, %19 : vector<8x32xf32>
    %c0_10 = arith.constant 0 : index
    %c0_11 = arith.constant 0 : index
    %c0_12 = arith.constant 0 : index
    %21 = vector.load %arg6[%c0_10, %c0_11, %c0_12] : memref<3x1x32xf32, #tpu.memory_space<vmem>>, vector<1x1x32xf32>
    %22 = vector.shape_cast %21 : vector<1x1x32xf32> to vector<1x32xf32>
    %c0_13 = arith.constant 0 : index
    %c0_14 = arith.constant 0 : index
    %c0_15 = arith.constant 0 : index
    %23 = vector.load %arg7[%c0_13, %c0_14, %c0_15] : memref<3x1x32xf32, #tpu.memory_space<vmem>>, vector<1x1x32xf32>
    %24 = vector.shape_cast %23 : vector<1x1x32xf32> to vector<1x32xf32>
    %cst_16 = arith.constant dense<0.000000e+00> : vector<8xf32>
    %25 = vector.multi_reduction <add>, %20, %cst_16 [1] : vector<8x32xf32> to vector<8xf32>
    %26 = vector.shape_cast %25 : vector<8xf32> to vector<8x1xf32>
    %cst_17 = arith.constant 3.200000e+01 : f32
    %27 = vector.broadcast %cst_17 : f32 to vector<8x1xf32>
    %28 = arith.divf %26, %27 : vector<8x1xf32>
    %29 = vector.broadcast %28 : vector<8x1xf32> to vector<8x32xf32>
    %30 = arith.subf %20, %29 : vector<8x32xf32>
    %31 = arith.mulf %30, %30 : vector<8x32xf32>
    %cst_18 = arith.constant dense<0.000000e+00> : vector<8xf32>
    %32 = vector.multi_reduction <add>, %31, %cst_18 [1] : vector<8x32xf32> to vector<8xf32>
    %33 = vector.shape_cast %32 : vector<8xf32> to vector<8x1xf32>
    %cst_19 = arith.constant 3.100000e+01 : f32
    %34 = vector.broadcast %cst_19 : f32 to vector<8x1xf32>
    %35 = arith.divf %33, %34 : vector<8x1xf32>
    %36 = vector.broadcast %22 : vector<1x32xf32> to vector<8x32xf32>
    %37 = arith.mulf %36, %30 : vector<8x32xf32>
    %38 = math.sqrt %35 : vector<8x1xf32>
    %cst_20 = arith.constant 9.99999997E-7 : f32
    %39 = vector.broadcast %cst_20 : f32 to vector<8x1xf32>
    %40 = arith.addf %38, %39 : vector<8x1xf32>
    %41 = vector.broadcast %40 : vector<8x1xf32> to vector<8x32xf32>
    %42 = arith.divf %37, %41 : vector<8x32xf32>
    %43 = vector.broadcast %24 : vector<1x32xf32> to vector<8x32xf32>
    %44 = arith.addf %42, %43 : vector<8x32xf32>
    %c0_21 = arith.constant 0 : index
    %c0_22 = arith.constant 0 : index
    %c0_23 = arith.constant 0 : index
    %45 = vector.load %arg8[%c0_21, %c0_22, %c0_23] : memref<3x32x32xf32, #tpu.memory_space<vmem>>, vector<1x32x32xf32>
    %46 = vector.shape_cast %45 : vector<1x32x32xf32> to vector<32x32xf32>
    %cst_24 = arith.constant dense<0.000000e+00> : vector<8x32xf32>
    %47 = tpu.matmul %44, %46, %cst_24 {dimension_numbers = #tpu.dot_dimension_numbers<[1], [0], [0], [1], [0, 0, 1, 1], [], []>} : vector<8x32xf32>, vector<32x32xf32>, vector<8x32xf32> -> vector<8x32xf32>
    %c0_25 = arith.constant 0 : index
    %c0_26 = arith.constant 0 : index
    %c0_27 = arith.constant 0 : index
    %48 = vector.load %arg9[%c0_25, %c0_26, %c0_27] : memref<3x1x32xf32, #tpu.memory_space<vmem>>, vector<1x1x32xf32>
    %49 = vector.shape_cast %48 : vector<1x1x32xf32> to vector<1x32xf32>
    %50 = vector.broadcast %49 : vector<1x32xf32> to vector<8x32xf32>
    %51 = arith.addf %47, %50 : vector<8x32xf32>
    %c0_28 = arith.constant 0 : index
    %c0_29 = arith.constant 0 : index
    %c0_30 = arith.constant 0 : index
    %52 = vector.load %arg10[%c0_28, %c0_29, %c0_30] : memref<3x32x32xf32, #tpu.memory_space<vmem>>, vector<1x32x32xf32>
    %53 = vector.shape_cast %52 : vector<1x32x32xf32> to vector<32x32xf32>
    %cst_31 = arith.constant dense<0.000000e+00> : vector<8x32xf32>
    %54 = tpu.matmul %44, %53, %cst_31 {dimension_numbers = #tpu.dot_dimension_numbers<[1], [0], [0], [1], [0, 0, 1, 1], [], []>} : vector<8x32xf32>, vector<32x32xf32>, vector<8x32xf32> -> vector<8x32xf32>
    %c0_32 = arith.constant 0 : index
    %c0_33 = arith.constant 0 : index
    %c0_34 = arith.constant 0 : index
    %55 = vector.load %arg11[%c0_32, %c0_33, %c0_34] : memref<3x1x32xf32, #tpu.memory_space<vmem>>, vector<1x1x32xf32>
    %56 = vector.shape_cast %55 : vector<1x1x32xf32> to vector<1x32xf32>
    %57 = vector.broadcast %56 : vector<1x32xf32> to vector<8x32xf32>
    %58 = arith.addf %54, %57 : vector<8x32xf32>
    %c0_35 = arith.constant 0 : index
    %c0_36 = arith.constant 0 : index
    %c0_37 = arith.constant 0 : index
    %59 = vector.load %arg12[%c0_35, %c0_36, %c0_37] : memref<3x32x32xf32, #tpu.memory_space<vmem>>, vector<1x32x32xf32>
    %60 = vector.shape_cast %59 : vector<1x32x32xf32> to vector<32x32xf32>
    %cst_38 = arith.constant dense<0.000000e+00> : vector<8x32xf32>
    %61 = tpu.matmul %44, %60, %cst_38 {dimension_numbers = #tpu.dot_dimension_numbers<[1], [0], [0], [1], [0, 0, 1, 1], [], []>} : vector<8x32xf32>, vector<32x32xf32>, vector<8x32xf32> -> vector<8x32xf32>
    %c0_39 = arith.constant 0 : index
    %c0_40 = arith.constant 0 : index
    %c0_41 = arith.constant 0 : index
    %62 = vector.load %arg13[%c0_39, %c0_40, %c0_41] : memref<3x1x32xf32, #tpu.memory_space<vmem>>, vector<1x1x32xf32>
    %63 = vector.shape_cast %62 : vector<1x1x32xf32> to vector<1x32xf32>
    %64 = vector.broadcast %63 : vector<1x32xf32> to vector<8x32xf32>
    %65 = arith.addf %61, %64 : vector<8x32xf32>
    %66 = vector.extract_strided_slice %51 {offsets = [0, 0], sizes = [8, 16], strides = [1, 1]} : vector<8x32xf32> to vector<8x16xf32>
    %67 = vector.extract_strided_slice %58 {offsets = [0, 0], sizes = [8, 16], strides = [1, 1]} : vector<8x32xf32> to vector<8x16xf32>
    %68 = tpu.transpose %67, [1, 0] : vector<8x16xf32> -> vector<16x8xf32>
    %cst_42 = arith.constant dense<0.000000e+00> : vector<8x8xf32>
    %69 = tpu.matmul %66, %68, %cst_42 {dimension_numbers = #tpu.dot_dimension_numbers<[1], [0], [0], [1], [0, 0, 1, 1], [], []>} : vector<8x16xf32>, vector<16x8xf32>, vector<8x8xf32> -> vector<8x8xf32>
    %cst_43 = arith.constant 2.500000e-01 : f32
    %70 = vector.broadcast %cst_43 : f32 to vector<8x8xf32>
    %71 = arith.mulf %69, %70 : vector<8x8xf32>
    %cst_44 = arith.constant -1.000000e+09 : f32
    %72 = vector.broadcast %cst_44 : f32 to vector<8x8xf32>
    %73 = arith.select %7, %71, %72 : vector<8x8xi1>, vector<8x8xf32>
    %cst_45 = arith.constant dense<0xFF800000> : vector<8xf32>
    %74 = vector.multi_reduction <maximumf>, %73, %cst_45 [1] : vector<8x8xf32> to vector<8xf32>
    %75 = vector.shape_cast %74 : vector<8xf32> to vector<8x1xf32>
    %76 = vector.broadcast %75 : vector<8x1xf32> to vector<8x8xf32>
    %77 = arith.subf %73, %76 : vector<8x8xf32>
    %78 = math.exp %77 : vector<8x8xf32>
    %cst_46 = arith.constant dense<0.000000e+00> : vector<8xf32>
    %79 = vector.multi_reduction <add>, %78, %cst_46 [1] : vector<8x8xf32> to vector<8xf32>
    %80 = vector.shape_cast %79 : vector<8xf32> to vector<8x1xf32>
    %81 = vector.broadcast %80 : vector<8x1xf32> to vector<8x8xf32>
    %82 = arith.divf %78, %81 : vector<8x8xf32>
    %83 = vector.extract_strided_slice %65 {offsets = [0, 0], sizes = [8, 16], strides = [1, 1]} : vector<8x32xf32> to vector<8x16xf32>
    %cst_47 = arith.constant dense<0.000000e+00> : vector<8x16xf32>
    %84 = tpu.matmul %82, %83, %cst_47 {dimension_numbers = #tpu.dot_dimension_numbers<[1], [0], [0], [1], [0, 0, 1, 1], [], []>} : vector<8x8xf32>, vector<8x16xf32>, vector<8x16xf32> -> vector<8x16xf32>
    %85 = vector.extract_strided_slice %51 {offsets = [0, 16], sizes = [8, 16], strides = [1, 1]} : vector<8x32xf32> to vector<8x16xf32>
    %86 = vector.extract_strided_slice %58 {offsets = [0, 16], sizes = [8, 16], strides = [1, 1]} : vector<8x32xf32> to vector<8x16xf32>
    %87 = tpu.transpose %86, [1, 0] : vector<8x16xf32> -> vector<16x8xf32>
    %cst_48 = arith.constant dense<0.000000e+00> : vector<8x8xf32>
    %88 = tpu.matmul %85, %87, %cst_48 {dimension_numbers = #tpu.dot_dimension_numbers<[1], [0], [0], [1], [0, 0, 1, 1], [], []>} : vector<8x16xf32>, vector<16x8xf32>, vector<8x8xf32> -> vector<8x8xf32>
    %cst_49 = arith.constant 2.500000e-01 : f32
    %89 = vector.broadcast %cst_49 : f32 to vector<8x8xf32>
    %90 = arith.mulf %88, %89 : vector<8x8xf32>
    %cst_50 = arith.constant -1.000000e+09 : f32
    %91 = vector.broadcast %cst_50 : f32 to vector<8x8xf32>
    %92 = arith.select %7, %90, %91 : vector<8x8xi1>, vector<8x8xf32>
    %cst_51 = arith.constant dense<0xFF800000> : vector<8xf32>
    %93 = vector.multi_reduction <maximumf>, %92, %cst_51 [1] : vector<8x8xf32> to vector<8xf32>
    %94 = vector.shape_cast %93 : vector<8xf32> to vector<8x1xf32>
    %95 = vector.broadcast %94 : vector<8x1xf32> to vector<8x8xf32>
    %96 = arith.subf %92, %95 : vector<8x8xf32>
    %97 = math.exp %96 : vector<8x8xf32>
    %cst_52 = arith.constant dense<0.000000e+00> : vector<8xf32>
    %98 = vector.multi_reduction <add>, %97, %cst_52 [1] : vector<8x8xf32> to vector<8xf32>
    %99 = vector.shape_cast %98 : vector<8xf32> to vector<8x1xf32>
    %100 = vector.broadcast %99 : vector<8x1xf32> to vector<8x8xf32>
    %101 = arith.divf %97, %100 : vector<8x8xf32>
    %102 = vector.extract_strided_slice %65 {offsets = [0, 16], sizes = [8, 16], strides = [1, 1]} : vector<8x32xf32> to vector<8x16xf32>
    %cst_53 = arith.constant dense<0.000000e+00> : vector<8x16xf32>
    %103 = tpu.matmul %101, %102, %cst_53 {dimension_numbers = #tpu.dot_dimension_numbers<[1], [0], [0], [1], [0, 0, 1, 1], [], []>} : vector<8x8xf32>, vector<8x16xf32>, vector<8x16xf32> -> vector<8x16xf32>
    %104 = tpu.concatenate %84, %103 in 1 : vector<8x16xf32>, vector<8x16xf32> -> vector<8x32xf32>
    %c0_54 = arith.constant 0 : index
    %c0_55 = arith.constant 0 : index
    %c0_56 = arith.constant 0 : index
    %105 = vector.load %arg14[%c0_54, %c0_55, %c0_56] : memref<3x32x32xf32, #tpu.memory_space<vmem>>, vector<1x32x32xf32>
    %106 = vector.shape_cast %105 : vector<1x32x32xf32> to vector<32x32xf32>
    %cst_57 = arith.constant dense<0.000000e+00> : vector<8x32xf32>
    %107 = tpu.matmul %104, %106, %cst_57 {dimension_numbers = #tpu.dot_dimension_numbers<[1], [0], [0], [1], [0, 0, 1, 1], [], []>} : vector<8x32xf32>, vector<32x32xf32>, vector<8x32xf32> -> vector<8x32xf32>
    %c0_58 = arith.constant 0 : index
    %c0_59 = arith.constant 0 : index
    %c0_60 = arith.constant 0 : index
    %108 = vector.load %arg15[%c0_58, %c0_59, %c0_60] : memref<3x1x32xf32, #tpu.memory_space<vmem>>, vector<1x1x32xf32>
    %109 = vector.shape_cast %108 : vector<1x1x32xf32> to vector<1x32xf32>
    %110 = vector.broadcast %109 : vector<1x32xf32> to vector<8x32xf32>
    %111 = arith.addf %107, %110 : vector<8x32xf32>
    %112 = arith.addf %20, %111 : vector<8x32xf32>
    %c0_61 = arith.constant 0 : index
    %c0_62 = arith.constant 0 : index
    %c0_63 = arith.constant 0 : index
    %113 = vector.load %arg16[%c0_61, %c0_62, %c0_63] : memref<3x1x32xf32, #tpu.memory_space<vmem>>, vector<1x1x32xf32>
    %114 = vector.shape_cast %113 : vector<1x1x32xf32> to vector<1x32xf32>
    %c0_64 = arith.constant 0 : index
    %c0_65 = arith.constant 0 : index
    %c0_66 = arith.constant 0 : index
    %115 = vector.load %arg17[%c0_64, %c0_65, %c0_66] : memref<3x1x32xf32, #tpu.memory_space<vmem>>, vector<1x1x32xf32>
    %116 = vector.shape_cast %115 : vector<1x1x32xf32> to vector<1x32xf32>
    %cst_67 = arith.constant dense<0.000000e+00> : vector<8xf32>
    %117 = vector.multi_reduction <add>, %112, %cst_67 [1] : vector<8x32xf32> to vector<8xf32>
    %118 = vector.shape_cast %117 : vector<8xf32> to vector<8x1xf32>
    %cst_68 = arith.constant 3.200000e+01 : f32
    %119 = vector.broadcast %cst_68 : f32 to vector<8x1xf32>
    %120 = arith.divf %118, %119 : vector<8x1xf32>
    %121 = vector.broadcast %120 : vector<8x1xf32> to vector<8x32xf32>
    %122 = arith.subf %112, %121 : vector<8x32xf32>
    %123 = arith.mulf %122, %122 : vector<8x32xf32>
    %cst_69 = arith.constant dense<0.000000e+00> : vector<8xf32>
    %124 = vector.multi_reduction <add>, %123, %cst_69 [1] : vector<8x32xf32> to vector<8xf32>
    %125 = vector.shape_cast %124 : vector<8xf32> to vector<8x1xf32>
    %cst_70 = arith.constant 3.100000e+01 : f32
    %126 = vector.broadcast %cst_70 : f32 to vector<8x1xf32>
    %127 = arith.divf %125, %126 : vector<8x1xf32>
    %128 = vector.broadcast %114 : vector<1x32xf32> to vector<8x32xf32>
    %129 = arith.mulf %128, %122 : vector<8x32xf32>
    %130 = math.sqrt %127 : vector<8x1xf32>
    %cst_71 = arith.constant 9.99999997E-7 : f32
    %131 = vector.broadcast %cst_71 : f32 to vector<8x1xf32>
    %132 = arith.addf %130, %131 : vector<8x1xf32>
    %133 = vector.broadcast %132 : vector<8x1xf32> to vector<8x32xf32>
    %134 = arith.divf %129, %133 : vector<8x32xf32>
    %135 = vector.broadcast %116 : vector<1x32xf32> to vector<8x32xf32>
    %136 = arith.addf %134, %135 : vector<8x32xf32>
    %c0_72 = arith.constant 0 : index
    %c0_73 = arith.constant 0 : index
    %c0_74 = arith.constant 0 : index
    %137 = vector.load %arg18[%c0_72, %c0_73, %c0_74] : memref<3x32x64xf32, #tpu.memory_space<vmem>>, vector<1x32x64xf32>
    %138 = vector.shape_cast %137 : vector<1x32x64xf32> to vector<32x64xf32>
    %cst_75 = arith.constant dense<0.000000e+00> : vector<8x64xf32>
    %139 = tpu.matmul %136, %138, %cst_75 {dimension_numbers = #tpu.dot_dimension_numbers<[1], [0], [0], [1], [0, 0, 1, 1], [], []>} : vector<8x32xf32>, vector<32x64xf32>, vector<8x64xf32> -> vector<8x64xf32>
    %c0_76 = arith.constant 0 : index
    %c0_77 = arith.constant 0 : index
    %c0_78 = arith.constant 0 : index
    %140 = vector.load %arg19[%c0_76, %c0_77, %c0_78] : memref<3x1x64xf32, #tpu.memory_space<vmem>>, vector<1x1x64xf32>
    %141 = vector.shape_cast %140 : vector<1x1x64xf32> to vector<1x64xf32>
    %142 = vector.broadcast %141 : vector<1x64xf32> to vector<8x64xf32>
    %143 = arith.addf %139, %142 : vector<8x64xf32>
    %cst_79 = arith.constant 0.000000e+00 : f32
    %144 = vector.broadcast %cst_79 : f32 to vector<8x64xf32>
    %145 = arith.maximumf %143, %144 : vector<8x64xf32>
    %c0_80 = arith.constant 0 : index
    %c0_81 = arith.constant 0 : index
    %c0_82 = arith.constant 0 : index
    %146 = vector.load %arg20[%c0_80, %c0_81, %c0_82] : memref<3x64x32xf32, #tpu.memory_space<vmem>>, vector<1x64x32xf32>
    %147 = vector.shape_cast %146 : vector<1x64x32xf32> to vector<64x32xf32>
    %cst_83 = arith.constant dense<0.000000e+00> : vector<8x32xf32>
    %148 = tpu.matmul %145, %147, %cst_83 {dimension_numbers = #tpu.dot_dimension_numbers<[1], [0], [0], [1], [0, 0, 1, 1], [], []>} : vector<8x64xf32>, vector<64x32xf32>, vector<8x32xf32> -> vector<8x32xf32>
    %c0_84 = arith.constant 0 : index
    %c0_85 = arith.constant 0 : index
    %c0_86 = arith.constant 0 : index
    %149 = vector.load %arg21[%c0_84, %c0_85, %c0_86] : memref<3x1x32xf32, #tpu.memory_space<vmem>>, vector<1x1x32xf32>
    %150 = vector.shape_cast %149 : vector<1x1x32xf32> to vector<1x32xf32>
    %151 = vector.broadcast %150 : vector<1x32xf32> to vector<8x32xf32>
    %152 = arith.addf %148, %151 : vector<8x32xf32>
    %153 = arith.addf %112, %152 : vector<8x32xf32>
    %c1 = arith.constant 1 : index
    %c0_87 = arith.constant 0 : index
    %c0_88 = arith.constant 0 : index
    %154 = vector.load %arg6[%c1, %c0_87, %c0_88] : memref<3x1x32xf32, #tpu.memory_space<vmem>>, vector<1x1x32xf32>
    %155 = vector.shape_cast %154 : vector<1x1x32xf32> to vector<1x32xf32>
    %c1_89 = arith.constant 1 : index
    %c0_90 = arith.constant 0 : index
    %c0_91 = arith.constant 0 : index
    %156 = vector.load %arg7[%c1_89, %c0_90, %c0_91] : memref<3x1x32xf32, #tpu.memory_space<vmem>>, vector<1x1x32xf32>
    %157 = vector.shape_cast %156 : vector<1x1x32xf32> to vector<1x32xf32>
    %cst_92 = arith.constant dense<0.000000e+00> : vector<8xf32>
    %158 = vector.multi_reduction <add>, %153, %cst_92 [1] : vector<8x32xf32> to vector<8xf32>
    %159 = vector.shape_cast %158 : vector<8xf32> to vector<8x1xf32>
    %cst_93 = arith.constant 3.200000e+01 : f32
    %160 = vector.broadcast %cst_93 : f32 to vector<8x1xf32>
    %161 = arith.divf %159, %160 : vector<8x1xf32>
    %162 = vector.broadcast %161 : vector<8x1xf32> to vector<8x32xf32>
    %163 = arith.subf %153, %162 : vector<8x32xf32>
    %164 = arith.mulf %163, %163 : vector<8x32xf32>
    %cst_94 = arith.constant dense<0.000000e+00> : vector<8xf32>
    %165 = vector.multi_reduction <add>, %164, %cst_94 [1] : vector<8x32xf32> to vector<8xf32>
    %166 = vector.shape_cast %165 : vector<8xf32> to vector<8x1xf32>
    %cst_95 = arith.constant 3.100000e+01 : f32
    %167 = vector.broadcast %cst_95 : f32 to vector<8x1xf32>
    %168 = arith.divf %166, %167 : vector<8x1xf32>
    %169 = vector.broadcast %155 : vector<1x32xf32> to vector<8x32xf32>
    %170 = arith.mulf %169, %163 : vector<8x32xf32>
    %171 = math.sqrt %168 : vector<8x1xf32>
    %cst_96 = arith.constant 9.99999997E-7 : f32
    %172 = vector.broadcast %cst_96 : f32 to vector<8x1xf32>
    %173 = arith.addf %171, %172 : vector<8x1xf32>
    %174 = vector.broadcast %173 : vector<8x1xf32> to vector<8x32xf32>
    %175 = arith.divf %170, %174 : vector<8x32xf32>
    %176 = vector.broadcast %157 : vector<1x32xf32> to vector<8x32xf32>
    %177 = arith.addf %175, %176 : vector<8x32xf32>
    %c1_97 = arith.constant 1 : index
    %c0_98 = arith.constant 0 : index
    %c0_99 = arith.constant 0 : index
    %178 = vector.load %arg8[%c1_97, %c0_98, %c0_99] : memref<3x32x32xf32, #tpu.memory_space<vmem>>, vector<1x32x32xf32>
    %179 = vector.shape_cast %178 : vector<1x32x32xf32> to vector<32x32xf32>
    %cst_100 = arith.constant dense<0.000000e+00> : vector<8x32xf32>
    %180 = tpu.matmul %177, %179, %cst_100 {dimension_numbers = #tpu.dot_dimension_numbers<[1], [0], [0], [1], [0, 0, 1, 1], [], []>} : vector<8x32xf32>, vector<32x32xf32>, vector<8x32xf32> -> vector<8x32xf32>
    %c1_101 = arith.constant 1 : index
    %c0_102 = arith.constant 0 : index
    %c0_103 = arith.constant 0 : index
    %181 = vector.load %arg9[%c1_101, %c0_102, %c0_103] : memref<3x1x32xf32, #tpu.memory_space<vmem>>, vector<1x1x32xf32>
    %182 = vector.shape_cast %181 : vector<1x1x32xf32> to vector<1x32xf32>
    %183 = vector.broadcast %182 : vector<1x32xf32> to vector<8x32xf32>
    %184 = arith.addf %180, %183 : vector<8x32xf32>
    %c1_104 = arith.constant 1 : index
    %c0_105 = arith.constant 0 : index
    %c0_106 = arith.constant 0 : index
    %185 = vector.load %arg10[%c1_104, %c0_105, %c0_106] : memref<3x32x32xf32, #tpu.memory_space<vmem>>, vector<1x32x32xf32>
    %186 = vector.shape_cast %185 : vector<1x32x32xf32> to vector<32x32xf32>
    %cst_107 = arith.constant dense<0.000000e+00> : vector<8x32xf32>
    %187 = tpu.matmul %177, %186, %cst_107 {dimension_numbers = #tpu.dot_dimension_numbers<[1], [0], [0], [1], [0, 0, 1, 1], [], []>} : vector<8x32xf32>, vector<32x32xf32>, vector<8x32xf32> -> vector<8x32xf32>
    %c1_108 = arith.constant 1 : index
    %c0_109 = arith.constant 0 : index
    %c0_110 = arith.constant 0 : index
    %188 = vector.load %arg11[%c1_108, %c0_109, %c0_110] : memref<3x1x32xf32, #tpu.memory_space<vmem>>, vector<1x1x32xf32>
    %189 = vector.shape_cast %188 : vector<1x1x32xf32> to vector<1x32xf32>
    %190 = vector.broadcast %189 : vector<1x32xf32> to vector<8x32xf32>
    %191 = arith.addf %187, %190 : vector<8x32xf32>
    %c1_111 = arith.constant 1 : index
    %c0_112 = arith.constant 0 : index
    %c0_113 = arith.constant 0 : index
    %192 = vector.load %arg12[%c1_111, %c0_112, %c0_113] : memref<3x32x32xf32, #tpu.memory_space<vmem>>, vector<1x32x32xf32>
    %193 = vector.shape_cast %192 : vector<1x32x32xf32> to vector<32x32xf32>
    %cst_114 = arith.constant dense<0.000000e+00> : vector<8x32xf32>
    %194 = tpu.matmul %177, %193, %cst_114 {dimension_numbers = #tpu.dot_dimension_numbers<[1], [0], [0], [1], [0, 0, 1, 1], [], []>} : vector<8x32xf32>, vector<32x32xf32>, vector<8x32xf32> -> vector<8x32xf32>
    %c1_115 = arith.constant 1 : index
    %c0_116 = arith.constant 0 : index
    %c0_117 = arith.constant 0 : index
    %195 = vector.load %arg13[%c1_115, %c0_116, %c0_117] : memref<3x1x32xf32, #tpu.memory_space<vmem>>, vector<1x1x32xf32>
    %196 = vector.shape_cast %195 : vector<1x1x32xf32> to vector<1x32xf32>
    %197 = vector.broadcast %196 : vector<1x32xf32> to vector<8x32xf32>
    %198 = arith.addf %194, %197 : vector<8x32xf32>
    %199 = vector.extract_strided_slice %184 {offsets = [0, 0], sizes = [8, 16], strides = [1, 1]} : vector<8x32xf32> to vector<8x16xf32>
    %200 = vector.extract_strided_slice %191 {offsets = [0, 0], sizes = [8, 16], strides = [1, 1]} : vector<8x32xf32> to vector<8x16xf32>
    %201 = tpu.transpose %200, [1, 0] : vector<8x16xf32> -> vector<16x8xf32>
    %cst_118 = arith.constant dense<0.000000e+00> : vector<8x8xf32>
    %202 = tpu.matmul %199, %201, %cst_118 {dimension_numbers = #tpu.dot_dimension_numbers<[1], [0], [0], [1], [0, 0, 1, 1], [], []>} : vector<8x16xf32>, vector<16x8xf32>, vector<8x8xf32> -> vector<8x8xf32>
    %cst_119 = arith.constant 2.500000e-01 : f32
    %203 = vector.broadcast %cst_119 : f32 to vector<8x8xf32>
    %204 = arith.mulf %202, %203 : vector<8x8xf32>
    %cst_120 = arith.constant -1.000000e+09 : f32
    %205 = vector.broadcast %cst_120 : f32 to vector<8x8xf32>
    %206 = arith.select %7, %204, %205 : vector<8x8xi1>, vector<8x8xf32>
    %cst_121 = arith.constant dense<0xFF800000> : vector<8xf32>
    %207 = vector.multi_reduction <maximumf>, %206, %cst_121 [1] : vector<8x8xf32> to vector<8xf32>
    %208 = vector.shape_cast %207 : vector<8xf32> to vector<8x1xf32>
    %209 = vector.broadcast %208 : vector<8x1xf32> to vector<8x8xf32>
    %210 = arith.subf %206, %209 : vector<8x8xf32>
    %211 = math.exp %210 : vector<8x8xf32>
    %cst_122 = arith.constant dense<0.000000e+00> : vector<8xf32>
    %212 = vector.multi_reduction <add>, %211, %cst_122 [1] : vector<8x8xf32> to vector<8xf32>
    %213 = vector.shape_cast %212 : vector<8xf32> to vector<8x1xf32>
    %214 = vector.broadcast %213 : vector<8x1xf32> to vector<8x8xf32>
    %215 = arith.divf %211, %214 : vector<8x8xf32>
    %216 = vector.extract_strided_slice %198 {offsets = [0, 0], sizes = [8, 16], strides = [1, 1]} : vector<8x32xf32> to vector<8x16xf32>
    %cst_123 = arith.constant dense<0.000000e+00> : vector<8x16xf32>
    %217 = tpu.matmul %215, %216, %cst_123 {dimension_numbers = #tpu.dot_dimension_numbers<[1], [0], [0], [1], [0, 0, 1, 1], [], []>} : vector<8x8xf32>, vector<8x16xf32>, vector<8x16xf32> -> vector<8x16xf32>
    %218 = vector.extract_strided_slice %184 {offsets = [0, 16], sizes = [8, 16], strides = [1, 1]} : vector<8x32xf32> to vector<8x16xf32>
    %219 = vector.extract_strided_slice %191 {offsets = [0, 16], sizes = [8, 16], strides = [1, 1]} : vector<8x32xf32> to vector<8x16xf32>
    %220 = tpu.transpose %219, [1, 0] : vector<8x16xf32> -> vector<16x8xf32>
    %cst_124 = arith.constant dense<0.000000e+00> : vector<8x8xf32>
    %221 = tpu.matmul %218, %220, %cst_124 {dimension_numbers = #tpu.dot_dimension_numbers<[1], [0], [0], [1], [0, 0, 1, 1], [], []>} : vector<8x16xf32>, vector<16x8xf32>, vector<8x8xf32> -> vector<8x8xf32>
    %cst_125 = arith.constant 2.500000e-01 : f32
    %222 = vector.broadcast %cst_125 : f32 to vector<8x8xf32>
    %223 = arith.mulf %221, %222 : vector<8x8xf32>
    %cst_126 = arith.constant -1.000000e+09 : f32
    %224 = vector.broadcast %cst_126 : f32 to vector<8x8xf32>
    %225 = arith.select %7, %223, %224 : vector<8x8xi1>, vector<8x8xf32>
    %cst_127 = arith.constant dense<0xFF800000> : vector<8xf32>
    %226 = vector.multi_reduction <maximumf>, %225, %cst_127 [1] : vector<8x8xf32> to vector<8xf32>
    %227 = vector.shape_cast %226 : vector<8xf32> to vector<8x1xf32>
    %228 = vector.broadcast %227 : vector<8x1xf32> to vector<8x8xf32>
    %229 = arith.subf %225, %228 : vector<8x8xf32>
    %230 = math.exp %229 : vector<8x8xf32>
    %cst_128 = arith.constant dense<0.000000e+00> : vector<8xf32>
    %231 = vector.multi_reduction <add>, %230, %cst_128 [1] : vector<8x8xf32> to vector<8xf32>
    %232 = vector.shape_cast %231 : vector<8xf32> to vector<8x1xf32>
    %233 = vector.broadcast %232 : vector<8x1xf32> to vector<8x8xf32>
    %234 = arith.divf %230, %233 : vector<8x8xf32>
    %235 = vector.extract_strided_slice %198 {offsets = [0, 16], sizes = [8, 16], strides = [1, 1]} : vector<8x32xf32> to vector<8x16xf32>
    %cst_129 = arith.constant dense<0.000000e+00> : vector<8x16xf32>
    %236 = tpu.matmul %234, %235, %cst_129 {dimension_numbers = #tpu.dot_dimension_numbers<[1], [0], [0], [1], [0, 0, 1, 1], [], []>} : vector<8x8xf32>, vector<8x16xf32>, vector<8x16xf32> -> vector<8x16xf32>
    %237 = tpu.concatenate %217, %236 in 1 : vector<8x16xf32>, vector<8x16xf32> -> vector<8x32xf32>
    %c1_130 = arith.constant 1 : index
    %c0_131 = arith.constant 0 : index
    %c0_132 = arith.constant 0 : index
    %238 = vector.load %arg14[%c1_130, %c0_131, %c0_132] : memref<3x32x32xf32, #tpu.memory_space<vmem>>, vector<1x32x32xf32>
    %239 = vector.shape_cast %238 : vector<1x32x32xf32> to vector<32x32xf32>
    %cst_133 = arith.constant dense<0.000000e+00> : vector<8x32xf32>
    %240 = tpu.matmul %237, %239, %cst_133 {dimension_numbers = #tpu.dot_dimension_numbers<[1], [0], [0], [1], [0, 0, 1, 1], [], []>} : vector<8x32xf32>, vector<32x32xf32>, vector<8x32xf32> -> vector<8x32xf32>
    %c1_134 = arith.constant 1 : index
    %c0_135 = arith.constant 0 : index
    %c0_136 = arith.constant 0 : index
    %241 = vector.load %arg15[%c1_134, %c0_135, %c0_136] : memref<3x1x32xf32, #tpu.memory_space<vmem>>, vector<1x1x32xf32>
    %242 = vector.shape_cast %241 : vector<1x1x32xf32> to vector<1x32xf32>
    %243 = vector.broadcast %242 : vector<1x32xf32> to vector<8x32xf32>
    %244 = arith.addf %240, %243 : vector<8x32xf32>
    %245 = arith.addf %153, %244 : vector<8x32xf32>
    %c1_137 = arith.constant 1 : index
    %c0_138 = arith.constant 0 : index
    %c0_139 = arith.constant 0 : index
    %246 = vector.load %arg16[%c1_137, %c0_138, %c0_139] : memref<3x1x32xf32, #tpu.memory_space<vmem>>, vector<1x1x32xf32>
    %247 = vector.shape_cast %246 : vector<1x1x32xf32> to vector<1x32xf32>
    %c1_140 = arith.constant 1 : index
    %c0_141 = arith.constant 0 : index
    %c0_142 = arith.constant 0 : index
    %248 = vector.load %arg17[%c1_140, %c0_141, %c0_142] : memref<3x1x32xf32, #tpu.memory_space<vmem>>, vector<1x1x32xf32>
    %249 = vector.shape_cast %248 : vector<1x1x32xf32> to vector<1x32xf32>
    %cst_143 = arith.constant dense<0.000000e+00> : vector<8xf32>
    %250 = vector.multi_reduction <add>, %245, %cst_143 [1] : vector<8x32xf32> to vector<8xf32>
    %251 = vector.shape_cast %250 : vector<8xf32> to vector<8x1xf32>
    %cst_144 = arith.constant 3.200000e+01 : f32
    %252 = vector.broadcast %cst_144 : f32 to vector<8x1xf32>
    %253 = arith.divf %251, %252 : vector<8x1xf32>
    %254 = vector.broadcast %253 : vector<8x1xf32> to vector<8x32xf32>
    %255 = arith.subf %245, %254 : vector<8x32xf32>
    %256 = arith.mulf %255, %255 : vector<8x32xf32>
    %cst_145 = arith.constant dense<0.000000e+00> : vector<8xf32>
    %257 = vector.multi_reduction <add>, %256, %cst_145 [1] : vector<8x32xf32> to vector<8xf32>
    %258 = vector.shape_cast %257 : vector<8xf32> to vector<8x1xf32>
    %cst_146 = arith.constant 3.100000e+01 : f32
    %259 = vector.broadcast %cst_146 : f32 to vector<8x1xf32>
    %260 = arith.divf %258, %259 : vector<8x1xf32>
    %261 = vector.broadcast %247 : vector<1x32xf32> to vector<8x32xf32>
    %262 = arith.mulf %261, %255 : vector<8x32xf32>
    %263 = math.sqrt %260 : vector<8x1xf32>
    %cst_147 = arith.constant 9.99999997E-7 : f32
    %264 = vector.broadcast %cst_147 : f32 to vector<8x1xf32>
    %265 = arith.addf %263, %264 : vector<8x1xf32>
    %266 = vector.broadcast %265 : vector<8x1xf32> to vector<8x32xf32>
    %267 = arith.divf %262, %266 : vector<8x32xf32>
    %268 = vector.broadcast %249 : vector<1x32xf32> to vector<8x32xf32>
    %269 = arith.addf %267, %268 : vector<8x32xf32>
    %c1_148 = arith.constant 1 : index
    %c0_149 = arith.constant 0 : index
    %c0_150 = arith.constant 0 : index
    %270 = vector.load %arg18[%c1_148, %c0_149, %c0_150] : memref<3x32x64xf32, #tpu.memory_space<vmem>>, vector<1x32x64xf32>
    %271 = vector.shape_cast %270 : vector<1x32x64xf32> to vector<32x64xf32>
    %cst_151 = arith.constant dense<0.000000e+00> : vector<8x64xf32>
    %272 = tpu.matmul %269, %271, %cst_151 {dimension_numbers = #tpu.dot_dimension_numbers<[1], [0], [0], [1], [0, 0, 1, 1], [], []>} : vector<8x32xf32>, vector<32x64xf32>, vector<8x64xf32> -> vector<8x64xf32>
    %c1_152 = arith.constant 1 : index
    %c0_153 = arith.constant 0 : index
    %c0_154 = arith.constant 0 : index
    %273 = vector.load %arg19[%c1_152, %c0_153, %c0_154] : memref<3x1x64xf32, #tpu.memory_space<vmem>>, vector<1x1x64xf32>
    %274 = vector.shape_cast %273 : vector<1x1x64xf32> to vector<1x64xf32>
    %275 = vector.broadcast %274 : vector<1x64xf32> to vector<8x64xf32>
    %276 = arith.addf %272, %275 : vector<8x64xf32>
    %cst_155 = arith.constant 0.000000e+00 : f32
    %277 = vector.broadcast %cst_155 : f32 to vector<8x64xf32>
    %278 = arith.maximumf %276, %277 : vector<8x64xf32>
    %c1_156 = arith.constant 1 : index
    %c0_157 = arith.constant 0 : index
    %c0_158 = arith.constant 0 : index
    %279 = vector.load %arg20[%c1_156, %c0_157, %c0_158] : memref<3x64x32xf32, #tpu.memory_space<vmem>>, vector<1x64x32xf32>
    %280 = vector.shape_cast %279 : vector<1x64x32xf32> to vector<64x32xf32>
    %cst_159 = arith.constant dense<0.000000e+00> : vector<8x32xf32>
    %281 = tpu.matmul %278, %280, %cst_159 {dimension_numbers = #tpu.dot_dimension_numbers<[1], [0], [0], [1], [0, 0, 1, 1], [], []>} : vector<8x64xf32>, vector<64x32xf32>, vector<8x32xf32> -> vector<8x32xf32>
    %c1_160 = arith.constant 1 : index
    %c0_161 = arith.constant 0 : index
    %c0_162 = arith.constant 0 : index
    %282 = vector.load %arg21[%c1_160, %c0_161, %c0_162] : memref<3x1x32xf32, #tpu.memory_space<vmem>>, vector<1x1x32xf32>
    %283 = vector.shape_cast %282 : vector<1x1x32xf32> to vector<1x32xf32>
    %284 = vector.broadcast %283 : vector<1x32xf32> to vector<8x32xf32>
    %285 = arith.addf %281, %284 : vector<8x32xf32>
    %286 = arith.addf %245, %285 : vector<8x32xf32>
    %c2 = arith.constant 2 : index
    %c0_163 = arith.constant 0 : index
    %c0_164 = arith.constant 0 : index
    %287 = vector.load %arg6[%c2, %c0_163, %c0_164] : memref<3x1x32xf32, #tpu.memory_space<vmem>>, vector<1x1x32xf32>
    %288 = vector.shape_cast %287 : vector<1x1x32xf32> to vector<1x32xf32>
    %c2_165 = arith.constant 2 : index
    %c0_166 = arith.constant 0 : index
    %c0_167 = arith.constant 0 : index
    %289 = vector.load %arg7[%c2_165, %c0_166, %c0_167] : memref<3x1x32xf32, #tpu.memory_space<vmem>>, vector<1x1x32xf32>
    %290 = vector.shape_cast %289 : vector<1x1x32xf32> to vector<1x32xf32>
    %cst_168 = arith.constant dense<0.000000e+00> : vector<8xf32>
    %291 = vector.multi_reduction <add>, %286, %cst_168 [1] : vector<8x32xf32> to vector<8xf32>
    %292 = vector.shape_cast %291 : vector<8xf32> to vector<8x1xf32>
    %cst_169 = arith.constant 3.200000e+01 : f32
    %293 = vector.broadcast %cst_169 : f32 to vector<8x1xf32>
    %294 = arith.divf %292, %293 : vector<8x1xf32>
    %295 = vector.broadcast %294 : vector<8x1xf32> to vector<8x32xf32>
    %296 = arith.subf %286, %295 : vector<8x32xf32>
    %297 = arith.mulf %296, %296 : vector<8x32xf32>
    %cst_170 = arith.constant dense<0.000000e+00> : vector<8xf32>
    %298 = vector.multi_reduction <add>, %297, %cst_170 [1] : vector<8x32xf32> to vector<8xf32>
    %299 = vector.shape_cast %298 : vector<8xf32> to vector<8x1xf32>
    %cst_171 = arith.constant 3.100000e+01 : f32
    %300 = vector.broadcast %cst_171 : f32 to vector<8x1xf32>
    %301 = arith.divf %299, %300 : vector<8x1xf32>
    %302 = vector.broadcast %288 : vector<1x32xf32> to vector<8x32xf32>
    %303 = arith.mulf %302, %296 : vector<8x32xf32>
    %304 = math.sqrt %301 : vector<8x1xf32>
    %cst_172 = arith.constant 9.99999997E-7 : f32
    %305 = vector.broadcast %cst_172 : f32 to vector<8x1xf32>
    %306 = arith.addf %304, %305 : vector<8x1xf32>
    %307 = vector.broadcast %306 : vector<8x1xf32> to vector<8x32xf32>
    %308 = arith.divf %303, %307 : vector<8x32xf32>
    %309 = vector.broadcast %290 : vector<1x32xf32> to vector<8x32xf32>
    %310 = arith.addf %308, %309 : vector<8x32xf32>
    %c2_173 = arith.constant 2 : index
    %c0_174 = arith.constant 0 : index
    %c0_175 = arith.constant 0 : index
    %311 = vector.load %arg8[%c2_173, %c0_174, %c0_175] : memref<3x32x32xf32, #tpu.memory_space<vmem>>, vector<1x32x32xf32>
    %312 = vector.shape_cast %311 : vector<1x32x32xf32> to vector<32x32xf32>
    %cst_176 = arith.constant dense<0.000000e+00> : vector<8x32xf32>
    %313 = tpu.matmul %310, %312, %cst_176 {dimension_numbers = #tpu.dot_dimension_numbers<[1], [0], [0], [1], [0, 0, 1, 1], [], []>} : vector<8x32xf32>, vector<32x32xf32>, vector<8x32xf32> -> vector<8x32xf32>
    %c2_177 = arith.constant 2 : index
    %c0_178 = arith.constant 0 : index
    %c0_179 = arith.constant 0 : index
    %314 = vector.load %arg9[%c2_177, %c0_178, %c0_179] : memref<3x1x32xf32, #tpu.memory_space<vmem>>, vector<1x1x32xf32>
    %315 = vector.shape_cast %314 : vector<1x1x32xf32> to vector<1x32xf32>
    %316 = vector.broadcast %315 : vector<1x32xf32> to vector<8x32xf32>
    %317 = arith.addf %313, %316 : vector<8x32xf32>
    %c2_180 = arith.constant 2 : index
    %c0_181 = arith.constant 0 : index
    %c0_182 = arith.constant 0 : index
    %318 = vector.load %arg10[%c2_180, %c0_181, %c0_182] : memref<3x32x32xf32, #tpu.memory_space<vmem>>, vector<1x32x32xf32>
    %319 = vector.shape_cast %318 : vector<1x32x32xf32> to vector<32x32xf32>
    %cst_183 = arith.constant dense<0.000000e+00> : vector<8x32xf32>
    %320 = tpu.matmul %310, %319, %cst_183 {dimension_numbers = #tpu.dot_dimension_numbers<[1], [0], [0], [1], [0, 0, 1, 1], [], []>} : vector<8x32xf32>, vector<32x32xf32>, vector<8x32xf32> -> vector<8x32xf32>
    %c2_184 = arith.constant 2 : index
    %c0_185 = arith.constant 0 : index
    %c0_186 = arith.constant 0 : index
    %321 = vector.load %arg11[%c2_184, %c0_185, %c0_186] : memref<3x1x32xf32, #tpu.memory_space<vmem>>, vector<1x1x32xf32>
    %322 = vector.shape_cast %321 : vector<1x1x32xf32> to vector<1x32xf32>
    %323 = vector.broadcast %322 : vector<1x32xf32> to vector<8x32xf32>
    %324 = arith.addf %320, %323 : vector<8x32xf32>
    %c2_187 = arith.constant 2 : index
    %c0_188 = arith.constant 0 : index
    %c0_189 = arith.constant 0 : index
    %325 = vector.load %arg12[%c2_187, %c0_188, %c0_189] : memref<3x32x32xf32, #tpu.memory_space<vmem>>, vector<1x32x32xf32>
    %326 = vector.shape_cast %325 : vector<1x32x32xf32> to vector<32x32xf32>
    %cst_190 = arith.constant dense<0.000000e+00> : vector<8x32xf32>
    %327 = tpu.matmul %310, %326, %cst_190 {dimension_numbers = #tpu.dot_dimension_numbers<[1], [0], [0], [1], [0, 0, 1, 1], [], []>} : vector<8x32xf32>, vector<32x32xf32>, vector<8x32xf32> -> vector<8x32xf32>
    %c2_191 = arith.constant 2 : index
    %c0_192 = arith.constant 0 : index
    %c0_193 = arith.constant 0 : index
    %328 = vector.load %arg13[%c2_191, %c0_192, %c0_193] : memref<3x1x32xf32, #tpu.memory_space<vmem>>, vector<1x1x32xf32>
    %329 = vector.shape_cast %328 : vector<1x1x32xf32> to vector<1x32xf32>
    %330 = vector.broadcast %329 : vector<1x32xf32> to vector<8x32xf32>
    %331 = arith.addf %327, %330 : vector<8x32xf32>
    %332 = vector.extract_strided_slice %317 {offsets = [0, 0], sizes = [8, 16], strides = [1, 1]} : vector<8x32xf32> to vector<8x16xf32>
    %333 = vector.extract_strided_slice %324 {offsets = [0, 0], sizes = [8, 16], strides = [1, 1]} : vector<8x32xf32> to vector<8x16xf32>
    %334 = tpu.transpose %333, [1, 0] : vector<8x16xf32> -> vector<16x8xf32>
    %cst_194 = arith.constant dense<0.000000e+00> : vector<8x8xf32>
    %335 = tpu.matmul %332, %334, %cst_194 {dimension_numbers = #tpu.dot_dimension_numbers<[1], [0], [0], [1], [0, 0, 1, 1], [], []>} : vector<8x16xf32>, vector<16x8xf32>, vector<8x8xf32> -> vector<8x8xf32>
    %cst_195 = arith.constant 2.500000e-01 : f32
    %336 = vector.broadcast %cst_195 : f32 to vector<8x8xf32>
    %337 = arith.mulf %335, %336 : vector<8x8xf32>
    %cst_196 = arith.constant -1.000000e+09 : f32
    %338 = vector.broadcast %cst_196 : f32 to vector<8x8xf32>
    %339 = arith.select %7, %337, %338 : vector<8x8xi1>, vector<8x8xf32>
    %cst_197 = arith.constant dense<0xFF800000> : vector<8xf32>
    %340 = vector.multi_reduction <maximumf>, %339, %cst_197 [1] : vector<8x8xf32> to vector<8xf32>
    %341 = vector.shape_cast %340 : vector<8xf32> to vector<8x1xf32>
    %342 = vector.broadcast %341 : vector<8x1xf32> to vector<8x8xf32>
    %343 = arith.subf %339, %342 : vector<8x8xf32>
    %344 = math.exp %343 : vector<8x8xf32>
    %cst_198 = arith.constant dense<0.000000e+00> : vector<8xf32>
    %345 = vector.multi_reduction <add>, %344, %cst_198 [1] : vector<8x8xf32> to vector<8xf32>
    %346 = vector.shape_cast %345 : vector<8xf32> to vector<8x1xf32>
    %347 = vector.broadcast %346 : vector<8x1xf32> to vector<8x8xf32>
    %348 = arith.divf %344, %347 : vector<8x8xf32>
    %349 = vector.extract_strided_slice %331 {offsets = [0, 0], sizes = [8, 16], strides = [1, 1]} : vector<8x32xf32> to vector<8x16xf32>
    %cst_199 = arith.constant dense<0.000000e+00> : vector<8x16xf32>
    %350 = tpu.matmul %348, %349, %cst_199 {dimension_numbers = #tpu.dot_dimension_numbers<[1], [0], [0], [1], [0, 0, 1, 1], [], []>} : vector<8x8xf32>, vector<8x16xf32>, vector<8x16xf32> -> vector<8x16xf32>
    %351 = vector.extract_strided_slice %317 {offsets = [0, 16], sizes = [8, 16], strides = [1, 1]} : vector<8x32xf32> to vector<8x16xf32>
    %352 = vector.extract_strided_slice %324 {offsets = [0, 16], sizes = [8, 16], strides = [1, 1]} : vector<8x32xf32> to vector<8x16xf32>
    %353 = tpu.transpose %352, [1, 0] : vector<8x16xf32> -> vector<16x8xf32>
    %cst_200 = arith.constant dense<0.000000e+00> : vector<8x8xf32>
    %354 = tpu.matmul %351, %353, %cst_200 {dimension_numbers = #tpu.dot_dimension_numbers<[1], [0], [0], [1], [0, 0, 1, 1], [], []>} : vector<8x16xf32>, vector<16x8xf32>, vector<8x8xf32> -> vector<8x8xf32>
    %cst_201 = arith.constant 2.500000e-01 : f32
    %355 = vector.broadcast %cst_201 : f32 to vector<8x8xf32>
    %356 = arith.mulf %354, %355 : vector<8x8xf32>
    %cst_202 = arith.constant -1.000000e+09 : f32
    %357 = vector.broadcast %cst_202 : f32 to vector<8x8xf32>
    %358 = arith.select %7, %356, %357 : vector<8x8xi1>, vector<8x8xf32>
    %cst_203 = arith.constant dense<0xFF800000> : vector<8xf32>
    %359 = vector.multi_reduction <maximumf>, %358, %cst_203 [1] : vector<8x8xf32> to vector<8xf32>
    %360 = vector.shape_cast %359 : vector<8xf32> to vector<8x1xf32>
    %361 = vector.broadcast %360 : vector<8x1xf32> to vector<8x8xf32>
    %362 = arith.subf %358, %361 : vector<8x8xf32>
    %363 = math.exp %362 : vector<8x8xf32>
    %cst_204 = arith.constant dense<0.000000e+00> : vector<8xf32>
    %364 = vector.multi_reduction <add>, %363, %cst_204 [1] : vector<8x8xf32> to vector<8xf32>
    %365 = vector.shape_cast %364 : vector<8xf32> to vector<8x1xf32>
    %366 = vector.broadcast %365 : vector<8x1xf32> to vector<8x8xf32>
    %367 = arith.divf %363, %366 : vector<8x8xf32>
    %368 = vector.extract_strided_slice %331 {offsets = [0, 16], sizes = [8, 16], strides = [1, 1]} : vector<8x32xf32> to vector<8x16xf32>
    %cst_205 = arith.constant dense<0.000000e+00> : vector<8x16xf32>
    %369 = tpu.matmul %367, %368, %cst_205 {dimension_numbers = #tpu.dot_dimension_numbers<[1], [0], [0], [1], [0, 0, 1, 1], [], []>} : vector<8x8xf32>, vector<8x16xf32>, vector<8x16xf32> -> vector<8x16xf32>
    %370 = tpu.concatenate %350, %369 in 1 : vector<8x16xf32>, vector<8x16xf32> -> vector<8x32xf32>
    %c2_206 = arith.constant 2 : index
    %c0_207 = arith.constant 0 : index
    %c0_208 = arith.constant 0 : index
    %371 = vector.load %arg14[%c2_206, %c0_207, %c0_208] : memref<3x32x32xf32, #tpu.memory_space<vmem>>, vector<1x32x32xf32>
    %372 = vector.shape_cast %371 : vector<1x32x32xf32> to vector<32x32xf32>
    %cst_209 = arith.constant dense<0.000000e+00> : vector<8x32xf32>
    %373 = tpu.matmul %370, %372, %cst_209 {dimension_numbers = #tpu.dot_dimension_numbers<[1], [0], [0], [1], [0, 0, 1, 1], [], []>} : vector<8x32xf32>, vector<32x32xf32>, vector<8x32xf32> -> vector<8x32xf32>
    %c2_210 = arith.constant 2 : index
    %c0_211 = arith.constant 0 : index
    %c0_212 = arith.constant 0 : index
    %374 = vector.load %arg15[%c2_210, %c0_211, %c0_212] : memref<3x1x32xf32, #tpu.memory_space<vmem>>, vector<1x1x32xf32>
    %375 = vector.shape_cast %374 : vector<1x1x32xf32> to vector<1x32xf32>
    %376 = vector.broadcast %375 : vector<1x32xf32> to vector<8x32xf32>
    %377 = arith.addf %373, %376 : vector<8x32xf32>
    %378 = arith.addf %286, %377 : vector<8x32xf32>
    %c2_213 = arith.constant 2 : index
    %c0_214 = arith.constant 0 : index
    %c0_215 = arith.constant 0 : index
    %379 = vector.load %arg16[%c2_213, %c0_214, %c0_215] : memref<3x1x32xf32, #tpu.memory_space<vmem>>, vector<1x1x32xf32>
    %380 = vector.shape_cast %379 : vector<1x1x32xf32> to vector<1x32xf32>
    %c2_216 = arith.constant 2 : index
    %c0_217 = arith.constant 0 : index
    %c0_218 = arith.constant 0 : index
    %381 = vector.load %arg17[%c2_216, %c0_217, %c0_218] : memref<3x1x32xf32, #tpu.memory_space<vmem>>, vector<1x1x32xf32>
    %382 = vector.shape_cast %381 : vector<1x1x32xf32> to vector<1x32xf32>
    %cst_219 = arith.constant dense<0.000000e+00> : vector<8xf32>
    %383 = vector.multi_reduction <add>, %378, %cst_219 [1] : vector<8x32xf32> to vector<8xf32>
    %384 = vector.shape_cast %383 : vector<8xf32> to vector<8x1xf32>
    %cst_220 = arith.constant 3.200000e+01 : f32
    %385 = vector.broadcast %cst_220 : f32 to vector<8x1xf32>
    %386 = arith.divf %384, %385 : vector<8x1xf32>
    %387 = vector.broadcast %386 : vector<8x1xf32> to vector<8x32xf32>
    %388 = arith.subf %378, %387 : vector<8x32xf32>
    %389 = arith.mulf %388, %388 : vector<8x32xf32>
    %cst_221 = arith.constant dense<0.000000e+00> : vector<8xf32>
    %390 = vector.multi_reduction <add>, %389, %cst_221 [1] : vector<8x32xf32> to vector<8xf32>
    %391 = vector.shape_cast %390 : vector<8xf32> to vector<8x1xf32>
    %cst_222 = arith.constant 3.100000e+01 : f32
    %392 = vector.broadcast %cst_222 : f32 to vector<8x1xf32>
    %393 = arith.divf %391, %392 : vector<8x1xf32>
    %394 = vector.broadcast %380 : vector<1x32xf32> to vector<8x32xf32>
    %395 = arith.mulf %394, %388 : vector<8x32xf32>
    %396 = math.sqrt %393 : vector<8x1xf32>
    %cst_223 = arith.constant 9.99999997E-7 : f32
    %397 = vector.broadcast %cst_223 : f32 to vector<8x1xf32>
    %398 = arith.addf %396, %397 : vector<8x1xf32>
    %399 = vector.broadcast %398 : vector<8x1xf32> to vector<8x32xf32>
    %400 = arith.divf %395, %399 : vector<8x32xf32>
    %401 = vector.broadcast %382 : vector<1x32xf32> to vector<8x32xf32>
    %402 = arith.addf %400, %401 : vector<8x32xf32>
    %c2_224 = arith.constant 2 : index
    %c0_225 = arith.constant 0 : index
    %c0_226 = arith.constant 0 : index
    %403 = vector.load %arg18[%c2_224, %c0_225, %c0_226] : memref<3x32x64xf32, #tpu.memory_space<vmem>>, vector<1x32x64xf32>
    %404 = vector.shape_cast %403 : vector<1x32x64xf32> to vector<32x64xf32>
    %cst_227 = arith.constant dense<0.000000e+00> : vector<8x64xf32>
    %405 = tpu.matmul %402, %404, %cst_227 {dimension_numbers = #tpu.dot_dimension_numbers<[1], [0], [0], [1], [0, 0, 1, 1], [], []>} : vector<8x32xf32>, vector<32x64xf32>, vector<8x64xf32> -> vector<8x64xf32>
    %c2_228 = arith.constant 2 : index
    %c0_229 = arith.constant 0 : index
    %c0_230 = arith.constant 0 : index
    %406 = vector.load %arg19[%c2_228, %c0_229, %c0_230] : memref<3x1x64xf32, #tpu.memory_space<vmem>>, vector<1x1x64xf32>
    %407 = vector.shape_cast %406 : vector<1x1x64xf32> to vector<1x64xf32>
    %408 = vector.broadcast %407 : vector<1x64xf32> to vector<8x64xf32>
    %409 = arith.addf %405, %408 : vector<8x64xf32>
    %cst_231 = arith.constant 0.000000e+00 : f32
    %410 = vector.broadcast %cst_231 : f32 to vector<8x64xf32>
    %411 = arith.maximumf %409, %410 : vector<8x64xf32>
    %c2_232 = arith.constant 2 : index
    %c0_233 = arith.constant 0 : index
    %c0_234 = arith.constant 0 : index
    %412 = vector.load %arg20[%c2_232, %c0_233, %c0_234] : memref<3x64x32xf32, #tpu.memory_space<vmem>>, vector<1x64x32xf32>
    %413 = vector.shape_cast %412 : vector<1x64x32xf32> to vector<64x32xf32>
    %cst_235 = arith.constant dense<0.000000e+00> : vector<8x32xf32>
    %414 = tpu.matmul %411, %413, %cst_235 {dimension_numbers = #tpu.dot_dimension_numbers<[1], [0], [0], [1], [0, 0, 1, 1], [], []>} : vector<8x64xf32>, vector<64x32xf32>, vector<8x32xf32> -> vector<8x32xf32>
    %c2_236 = arith.constant 2 : index
    %c0_237 = arith.constant 0 : index
    %c0_238 = arith.constant 0 : index
    %415 = vector.load %arg21[%c2_236, %c0_237, %c0_238] : memref<3x1x32xf32, #tpu.memory_space<vmem>>, vector<1x1x32xf32>
    %416 = vector.shape_cast %415 : vector<1x1x32xf32> to vector<1x32xf32>
    %417 = vector.broadcast %416 : vector<1x32xf32> to vector<8x32xf32>
    %418 = arith.addf %414, %417 : vector<8x32xf32>
    %419 = arith.addf %378, %418 : vector<8x32xf32>
    %c0_239 = arith.constant 0 : index
    %c0_240 = arith.constant 0 : index
    %420 = vector.load %arg22[%c0_239, %c0_240] : memref<32x16xf32, #tpu.memory_space<vmem>>, vector<32x16xf32>
    %cst_241 = arith.constant dense<0.000000e+00> : vector<8x16xf32>
    %421 = tpu.matmul %419, %420, %cst_241 {dimension_numbers = #tpu.dot_dimension_numbers<[1], [0], [0], [1], [0, 0, 1, 1], [], []>} : vector<8x32xf32>, vector<32x16xf32>, vector<8x16xf32> -> vector<8x16xf32>
    %c0_242 = arith.constant 0 : index
    %c0_243 = arith.constant 0 : index
    %422 = vector.load %arg23[%c0_242, %c0_243] : memref<1x16xf32, #tpu.memory_space<vmem>>, vector<1x16xf32>
    %423 = vector.broadcast %422 : vector<1x16xf32> to vector<8x16xf32>
    %424 = arith.addf %421, %423 : vector<8x16xf32>
    %cst_244 = arith.constant 0.000000e+00 : f32
    %425 = vector.broadcast %cst_244 : f32 to vector<8x16xf32>
    %426 = arith.maximumf %424, %425 : vector<8x16xf32>
    %c0_245 = arith.constant 0 : index
    %c0_246 = arith.constant 0 : index
    %427 = vector.load %arg24[%c0_245, %c0_246] : memref<16x4xf32, #tpu.memory_space<vmem>>, vector<16x4xf32>
    %cst_247 = arith.constant dense<0.000000e+00> : vector<8x4xf32>
    %428 = tpu.matmul %426, %427, %cst_247 {dimension_numbers = #tpu.dot_dimension_numbers<[1], [0], [0], [1], [0, 0, 1, 1], [], []>} : vector<8x16xf32>, vector<16x4xf32>, vector<8x4xf32> -> vector<8x4xf32>
    %c0_248 = arith.constant 0 : index
    %c0_249 = arith.constant 0 : index
    %429 = vector.load %arg25[%c0_248, %c0_249] : memref<1x4xf32, #tpu.memory_space<vmem>>, vector<1x4xf32>
    %430 = vector.broadcast %429 : vector<1x4xf32> to vector<8x4xf32>
    %431 = arith.addf %428, %430 : vector<8x4xf32>
    %432 = arith.negf %431 : vector<8x4xf32>
    %433 = math.exp %432 : vector<8x4xf32>
    %cst_250 = arith.constant 1.000000e+00 : f32
    %434 = vector.broadcast %cst_250 : f32 to vector<8x4xf32>
    %435 = arith.addf %434, %433 : vector<8x4xf32>
    %436 = arith.divf %434, %435 : vector<8x4xf32>
    %c0_251 = arith.constant 0 : index
    %c0_252 = arith.constant 0 : index
    %c0_253 = arith.constant 0 : index
    %437 = vector.load %arg30[%c0_251, %c0_252, %c0_253] : memref<1x8x4xf32, #tpu.memory_space<vmem>>, vector<1x8x4xf32>
    %438 = vector.shape_cast %437 : vector<1x8x4xf32> to vector<8x4xf32>
    %439 = vector.shape_cast %436 : vector<8x4xf32> to vector<1x8x4xf32>
    tpu.vector_store %arg30[%c0_251, %c0_252, %c0_253], %439 {strides = array<i32>} : memref<1x8x4xf32, #tpu.memory_space<vmem>>, vector<1x8x4xf32>,
    %c0_254 = arith.constant 0 : index
    %c0_255 = arith.constant 0 : index
    %440 = vector.load %arg26[%c0_254, %c0_255] : memref<32x16xf32, #tpu.memory_space<vmem>>, vector<32x16xf32>
    %cst_256 = arith.constant dense<0.000000e+00> : vector<8x16xf32>
    %441 = tpu.matmul %419, %440, %cst_256 {dimension_numbers = #tpu.dot_dimension_numbers<[1], [0], [0], [1], [0, 0, 1, 1], [], []>} : vector<8x32xf32>, vector<32x16xf32>, vector<8x16xf32> -> vector<8x16xf32>
    %c0_257 = arith.constant 0 : index
    %c0_258 = arith.constant 0 : index
    %442 = vector.load %arg27[%c0_257, %c0_258] : memref<1x16xf32, #tpu.memory_space<vmem>>, vector<1x16xf32>
    %443 = vector.broadcast %442 : vector<1x16xf32> to vector<8x16xf32>
    %444 = arith.addf %441, %443 : vector<8x16xf32>
    %cst_259 = arith.constant 0.000000e+00 : f32
    %445 = vector.broadcast %cst_259 : f32 to vector<8x16xf32>
    %446 = arith.maximumf %444, %445 : vector<8x16xf32>
    %c0_260 = arith.constant 0 : index
    %c0_261 = arith.constant 0 : index
    %447 = vector.load %arg28[%c0_260, %c0_261] : memref<16x2xf32, #tpu.memory_space<vmem>>, vector<16x2xf32>
    %cst_262 = arith.constant dense<0.000000e+00> : vector<8x2xf32>
    %448 = tpu.matmul %446, %447, %cst_262 {dimension_numbers = #tpu.dot_dimension_numbers<[1], [0], [0], [1], [0, 0, 1, 1], [], []>} : vector<8x16xf32>, vector<16x2xf32>, vector<8x2xf32> -> vector<8x2xf32>
    %c0_263 = arith.constant 0 : index
    %c0_264 = arith.constant 0 : index
    %449 = vector.load %arg29[%c0_263, %c0_264] : memref<1x2xf32, #tpu.memory_space<vmem>>, vector<1x2xf32>
    %450 = vector.broadcast %449 : vector<1x2xf32> to vector<8x2xf32>
    %451 = arith.addf %448, %450 : vector<8x2xf32>
    %452 = math.tanh %451 : vector<8x2xf32>
    %c0_265 = arith.constant 0 : index
    %c0_266 = arith.constant 0 : index
    %c0_267 = arith.constant 0 : index
    %453 = vector.load %arg31[%c0_265, %c0_266, %c0_267] : memref<1x8x2xf32, #tpu.memory_space<vmem>>, vector<1x8x2xf32>
    %454 = vector.shape_cast %453 : vector<1x8x2xf32> to vector<8x2xf32>
    %455 = vector.shape_cast %452 : vector<8x2xf32> to vector<1x8x2xf32>
    tpu.vector_store %arg31[%c0_265, %c0_266, %c0_267], %455 {strides = array<i32>} : memref<1x8x2xf32, #tpu.memory_space<vmem>>, vector<1x8x2xf32>,
    return
  }
  func.func @transform_0(%arg0: i32, %arg1: memref<2xi32, #tpu.memory_space<smem>>) -> (i32, i32, i32) {
    %c0_i32 = arith.constant 0 : i32
    %c0_i32_0 = arith.constant 0 : i32
    %c0_i32_1 = arith.constant 0 : i32
    return %arg0, %c0_i32, %c0_i32_0 : i32, i32, i32
  }
  func.func @transform_1(%arg0: i32, %arg1: memref<2xi32, #tpu.memory_space<smem>>) -> (i32, i32) {
    %c0_i32 = arith.constant 0 : i32
    %c0_i32_0 = arith.constant 0 : i32
    %c0_i32_1 = arith.constant 0 : i32
    return %c0_i32, %c0_i32_0 : i32, i32
  }
  func.func @transform_2(%arg0: i32, %arg1: memref<2xi32, #tpu.memory_space<smem>>) -> (i32, i32) {
    %c0_i32 = arith.constant 0 : i32
    %c0_i32_0 = arith.constant 0 : i32
    %c0_i32_1 = arith.constant 0 : i32
    return %c0_i32, %c0_i32_0 : i32, i32
  }
  func.func @transform_3(%arg0: i32, %arg1: memref<2xi32, #tpu.memory_space<smem>>) -> (i32, i32) {
    %c0_i32 = arith.constant 0 : i32
    %c0_i32_0 = arith.constant 0 : i32
    %c0_i32_1 = arith.constant 0 : i32
    return %c0_i32, %c0_i32_0 : i32, i32
  }
  func.func @transform_4(%arg0: i32, %arg1: memref<2xi32, #tpu.memory_space<smem>>) -> (i32, i32, i32) {
    %c0_i32 = arith.constant 0 : i32
    %c0_i32_0 = arith.constant 0 : i32
    %c0_i32_1 = arith.constant 0 : i32
    %c0_i32_2 = arith.constant 0 : i32
    return %c0_i32, %c0_i32_0, %c0_i32_1 : i32, i32, i32
  }
  func.func @transform_5(%arg0: i32, %arg1: memref<2xi32, #tpu.memory_space<smem>>) -> (i32, i32, i32) {
    %c0_i32 = arith.constant 0 : i32
    %c0_i32_0 = arith.constant 0 : i32
    %c0_i32_1 = arith.constant 0 : i32
    %c0_i32_2 = arith.constant 0 : i32
    return %c0_i32, %c0_i32_0, %c0_i32_1 : i32, i32, i32
  }
  func.func @transform_6(%arg0: i32, %arg1: memref<2xi32, #tpu.memory_space<smem>>) -> (i32, i32, i32) {
    %c0_i32 = arith.constant 0 : i32
    %c0_i32_0 = arith.constant 0 : i32
    %c0_i32_1 = arith.constant 0 : i32
    %c0_i32_2 = arith.constant 0 : i32
    return %c0_i32, %c0_i32_0, %c0_i32_1 : i32, i32, i32
  }
  func.func @transform_7(%arg0: i32, %arg1: memref<2xi32, #tpu.memory_space<smem>>) -> (i32, i32, i32) {
    %c0_i32 = arith.constant 0 : i32
    %c0_i32_0 = arith.constant 0 : i32
    %c0_i32_1 = arith.constant 0 : i32
    %c0_i32_2 = arith.constant 0 : i32
    return %c0_i32, %c0_i32_0, %c0_i32_1 : i32, i32, i32
  }
  func.func @transform_8(%arg0: i32, %arg1: memref<2xi32, #tpu.memory_space<smem>>) -> (i32, i32, i32) {
    %c0_i32 = arith.constant 0 : i32
    %c0_i32_0 = arith.constant 0 : i32
    %c0_i32_1 = arith.constant 0 : i32
    %c0_i32_2 = arith.constant 0 : i32
    return %c0_i32, %c0_i32_0, %c0_i32_1 : i32, i32, i32
  }
  func.func @transform_9(%arg0: i32, %arg1: memref<2xi32, #tpu.memory_space<smem>>) -> (i32, i32, i32) {
    %c0_i32 = arith.constant 0 : i32
    %c0_i32_0 = arith.constant 0 : i32
    %c0_i32_1 = arith.constant 0 : i32
    %c0_i32_2 = arith.constant 0 : i32
    return %c0_i32, %c0_i32_0, %c0_i32_1 : i32, i32, i32
  }
  func.func @transform_10(%arg0: i32, %arg1: memref<2xi32, #tpu.memory_space<smem>>) -> (i32, i32, i32) {
    %c0_i32 = arith.constant 0 : i32
    %c0_i32_0 = arith.constant 0 : i32
    %c0_i32_1 = arith.constant 0 : i32
    %c0_i32_2 = arith.constant 0 : i32
    return %c0_i32, %c0_i32_0, %c0_i32_1 : i32, i32, i32
  }
  func.func @transform_11(%arg0: i32, %arg1: memref<2xi32, #tpu.memory_space<smem>>) -> (i32, i32, i32) {
    %c0_i32 = arith.constant 0 : i32
    %c0_i32_0 = arith.constant 0 : i32
    %c0_i32_1 = arith.constant 0 : i32
    %c0_i32_2 = arith.constant 0 : i32
    return %c0_i32, %c0_i32_0, %c0_i32_1 : i32, i32, i32
  }
  func.func @transform_12(%arg0: i32, %arg1: memref<2xi32, #tpu.memory_space<smem>>) -> (i32, i32, i32) {
    %c0_i32 = arith.constant 0 : i32
    %c0_i32_0 = arith.constant 0 : i32
    %c0_i32_1 = arith.constant 0 : i32
    %c0_i32_2 = arith.constant 0 : i32
    return %c0_i32, %c0_i32_0, %c0_i32_1 : i32, i32, i32
  }
  func.func @transform_13(%arg0: i32, %arg1: memref<2xi32, #tpu.memory_space<smem>>) -> (i32, i32, i32) {
    %c0_i32 = arith.constant 0 : i32
    %c0_i32_0 = arith.constant 0 : i32
    %c0_i32_1 = arith.constant 0 : i32
    %c0_i32_2 = arith.constant 0 : i32
    return %c0_i32, %c0_i32_0, %c0_i32_1 : i32, i32, i32
  }
  func.func @transform_14(%arg0: i32, %arg1: memref<2xi32, #tpu.memory_space<smem>>) -> (i32, i32, i32) {
    %c0_i32 = arith.constant 0 : i32
    %c0_i32_0 = arith.constant 0 : i32
    %c0_i32_1 = arith.constant 0 : i32
    %c0_i32_2 = arith.constant 0 : i32
    return %c0_i32, %c0_i32_0, %c0_i32_1 : i32, i32, i32
  }
  func.func @transform_15(%arg0: i32, %arg1: memref<2xi32, #tpu.memory_space<smem>>) -> (i32, i32, i32) {
    %c0_i32 = arith.constant 0 : i32
    %c0_i32_0 = arith.constant 0 : i32
    %c0_i32_1 = arith.constant 0 : i32
    %c0_i32_2 = arith.constant 0 : i32
    return %c0_i32, %c0_i32_0, %c0_i32_1 : i32, i32, i32
  }
  func.func @transform_16(%arg0: i32, %arg1: memref<2xi32, #tpu.memory_space<smem>>) -> (i32, i32, i32) {
    %c0_i32 = arith.constant 0 : i32
    %c0_i32_0 = arith.constant 0 : i32
    %c0_i32_1 = arith.constant 0 : i32
    %c0_i32_2 = arith.constant 0 : i32
    return %c0_i32, %c0_i32_0, %c0_i32_1 : i32, i32, i32
  }
  func.func @transform_17(%arg0: i32, %arg1: memref<2xi32, #tpu.memory_space<smem>>) -> (i32, i32, i32) {
    %c0_i32 = arith.constant 0 : i32
    %c0_i32_0 = arith.constant 0 : i32
    %c0_i32_1 = arith.constant 0 : i32
    %c0_i32_2 = arith.constant 0 : i32
    return %c0_i32, %c0_i32_0, %c0_i32_1 : i32, i32, i32
  }
  func.func @transform_18(%arg0: i32, %arg1: memref<2xi32, #tpu.memory_space<smem>>) -> (i32, i32, i32) {
    %c0_i32 = arith.constant 0 : i32
    %c0_i32_0 = arith.constant 0 : i32
    %c0_i32_1 = arith.constant 0 : i32
    %c0_i32_2 = arith.constant 0 : i32
    return %c0_i32, %c0_i32_0, %c0_i32_1 : i32, i32, i32
  }
  func.func @transform_19(%arg0: i32, %arg1: memref<2xi32, #tpu.memory_space<smem>>) -> (i32, i32, i32) {
    %c0_i32 = arith.constant 0 : i32
    %c0_i32_0 = arith.constant 0 : i32
    %c0_i32_1 = arith.constant 0 : i32
    %c0_i32_2 = arith.constant 0 : i32
    return %c0_i32, %c0_i32_0, %c0_i32_1 : i32, i32, i32
  }
  func.func @transform_20(%arg0: i32, %arg1: memref<2xi32, #tpu.memory_space<smem>>) -> (i32, i32) {
    %c0_i32 = arith.constant 0 : i32
    %c0_i32_0 = arith.constant 0 : i32
    %c0_i32_1 = arith.constant 0 : i32
    return %c0_i32, %c0_i32_0 : i32, i32
  }
  func.func @transform_21(%arg0: i32, %arg1: memref<2xi32, #tpu.memory_space<smem>>) -> (i32, i32) {
    %c0_i32 = arith.constant 0 : i32
    %c0_i32_0 = arith.constant 0 : i32
    %c0_i32_1 = arith.constant 0 : i32
    return %c0_i32, %c0_i32_0 : i32, i32
  }
  func.func @transform_22(%arg0: i32, %arg1: memref<2xi32, #tpu.memory_space<smem>>) -> (i32, i32) {
    %c0_i32 = arith.constant 0 : i32
    %c0_i32_0 = arith.constant 0 : i32
    %c0_i32_1 = arith.constant 0 : i32
    return %c0_i32, %c0_i32_0 : i32, i32
  }
  func.func @transform_23(%arg0: i32, %arg1: memref<2xi32, #tpu.memory_space<smem>>) -> (i32, i32) {
    %c0_i32 = arith.constant 0 : i32
    %c0_i32_0 = arith.constant 0 : i32
    %c0_i32_1 = arith.constant 0 : i32
    return %c0_i32, %c0_i32_0 : i32, i32
  }
  func.func @transform_24(%arg0: i32, %arg1: memref<2xi32, #tpu.memory_space<smem>>) -> (i32, i32) {
    %c0_i32 = arith.constant 0 : i32
    %c0_i32_0 = arith.constant 0 : i32
    %c0_i32_1 = arith.constant 0 : i32
    return %c0_i32, %c0_i32_0 : i32, i32
  }
  func.func @transform_25(%arg0: i32, %arg1: memref<2xi32, #tpu.memory_space<smem>>) -> (i32, i32) {
    %c0_i32 = arith.constant 0 : i32
    %c0_i32_0 = arith.constant 0 : i32
    %c0_i32_1 = arith.constant 0 : i32
    return %c0_i32, %c0_i32_0 : i32, i32
  }
  func.func @transform_26(%arg0: i32, %arg1: memref<2xi32, #tpu.memory_space<smem>>) -> (i32, i32) {
    %c0_i32 = arith.constant 0 : i32
    %c0_i32_0 = arith.constant 0 : i32
    %c0_i32_1 = arith.constant 0 : i32
    return %c0_i32, %c0_i32_0 : i32, i32
  }
  func.func @transform_27(%arg0: i32, %arg1: memref<2xi32, #tpu.memory_space<smem>>) -> (i32, i32) {
    %c0_i32 = arith.constant 0 : i32
    %c0_i32_0 = arith.constant 0 : i32
    %c0_i32_1 = arith.constant 0 : i32
    return %c0_i32, %c0_i32_0 : i32, i32
  }
  func.func @transform_28(%arg0: i32, %arg1: memref<2xi32, #tpu.memory_space<smem>>) -> (i32, i32, i32) {
    %c0_i32 = arith.constant 0 : i32
    %c0_i32_0 = arith.constant 0 : i32
    %c0_i32_1 = arith.constant 0 : i32
    return %arg0, %c0_i32, %c0_i32_0 : i32, i32, i32
  }
  func.func @transform_29(%arg0: i32, %arg1: memref<2xi32, #tpu.memory_space<smem>>) -> (i32, i32, i32) {
    %c0_i32 = arith.constant 0 : i32
    %c0_i32_0 = arith.constant 0 : i32
    %c0_i32_1 = arith.constant 0 : i32
    return %arg0, %c0_i32, %c0_i32_0 : i32, i32, i32
  }
}

</mosaic_0001>

<llo_original>
// kernel: forward.1
$region0: #{forward.1}
  #allocation0 [shape = 'u32[]', space=smem, size = 0x4, offset = 0x4, fixed_abs, tag = 'smem constant byte address 0x4 - core index']
  #allocation1 [shape = 'u32[144,128]{1,0:T(1,128)}', space=vmem, size = 0x12000, scoped, tag = 'internal scratch']
  #allocation2 [shape = 's32[1]{0}', space=sflag, size = 0x4, scoped, tag = 'scoped memory for forward.1']
  #allocation3 [shape = 'u8[512]{0}', space=smem, size = 0x200, scoped, tag = 'prefetched SMEM operand 0']
  %s0 = inlined_call_operand.smem [shape: u32[31], index: -1, kind: input, shape index: {}]
  %s1 = sld [smem:[%s0]]
  %s2 = scalar_lea.smem %s0, 1
  %s3 = sld [smem:[%s2]]
  %s4 = scalar_lea.smem %s0, 2
  %s5 = sld [smem:[%s4]]
  %s6 = scalar_lea.smem %s0, 3
  %s7 = sld [smem:[%s6]]
  %s8 = scalar_lea.smem %s0, 4
  %s9 = sld [smem:[%s8]]
  %s10 = scalar_lea.smem %s0, 5
  %s11 = sld [smem:[%s10]]
  %s12 = scalar_lea.smem %s0, 6
  %s13 = sld [smem:[%s12]]
  %s14 = scalar_lea.smem %s0, 7
  %s15 = sld [smem:[%s14]]
  %s16 = scalar_lea.smem %s0, 8
  %s17 = sld [smem:[%s16]]
  %s18 = scalar_lea.smem %s0, 9
  %s19 = sld [smem:[%s18]]
  %s20 = scalar_lea.smem %s0, 10
  %s21 = sld [smem:[%s20]]
  %s22 = scalar_lea.smem %s0, 11
  %s23 = sld [smem:[%s22]]
  %s24 = scalar_lea.smem %s0, 12
  %s25 = sld [smem:[%s24]]
  %s26 = scalar_lea.smem %s0, 13
  %s27 = sld [smem:[%s26]]
  %s28 = scalar_lea.smem %s0, 14
  %s29 = sld [smem:[%s28]]
  %s30 = scalar_lea.smem %s0, 15
  %s31 = sld [smem:[%s30]]
  %s32 = scalar_lea.smem %s0, 16
  %s33 = sld [smem:[%s32]]
  %s34 = scalar_lea.smem %s0, 17
  %s35 = sld [smem:[%s34]]
  %s36 = scalar_lea.smem %s0, 18
  %s37 = sld [smem:[%s36]]
  %s38 = scalar_lea.smem %s0, 19
  %s39 = sld [smem:[%s38]]
  %s40 = scalar_lea.smem %s0, 20
  %s41 = sld [smem:[%s40]]
  %s42 = scalar_lea.smem %s0, 21
  %s43 = sld [smem:[%s42]]
  %s44 = scalar_lea.smem %s0, 22
  %s45 = sld [smem:[%s44]]
  %s46 = scalar_lea.smem %s0, 23
  %s47 = sld [smem:[%s46]]
  %s48 = scalar_lea.smem %s0, 24
  %s49 = sld [smem:[%s48]]
  %s50 = scalar_lea.smem %s0, 25
  %s51 = sld [smem:[%s50]]
  %s52 = scalar_lea.smem %s0, 26
  %s53 = sld [smem:[%s52]]
  %s54 = scalar_lea.smem %s0, 27
  %s55 = sld [smem:[%s54]]
  %s56 = scalar_lea.smem %s0, 28
  %s57 = sld [smem:[%s56]]
  %s58 = scalar_lea.smem %s0, 29
  %s59 = sld [smem:[%s58]]
  %s60 = scalar_lea.smem %s0, 30
  %s61 = sld [smem:[%s60]]
  %62 = xla_tuple %s59, %s61
  %s63 = sld [smem:[#allocation0]]
  $region221: #{forward.1} parent=0
    _
  %s65 = ssub.s32 1, %s63
  %s66 = scalar_select 0, %s65, %s63
  %s67 = sshll.u32 %s1, 4
  %s68 = int_to_ptr.vmem [resolvable:$true] %s67
  %70 = dma.vmem_to_smem %s68, 16, [#allocation3], [#allocation2]
  %71 = dma.done [#allocation2], 16
  %72 = sfence
  $region1: #{forward.1} parent=0
    #allocation4 [shape = 'u8[12288]{0}', space=vmem, size = 0x3000, scoped, tag = 'input window, operand 2, single buffered']
    #allocation5 [shape = 's32[2]{0}', space=sflag, size = 0x8, scoped, tag = 'scoped memory for forward.1']
    #allocation6 [shape = 'u8[512]{0}', space=vmem, size = 0x400, scoped, tag = 'input window, operand 3, single buffered']
    #allocation7 [shape = 's32[1]{0}', space=sflag, size = 0x4, scoped, tag = 'scoped memory for forward.1']
    #allocation8 [shape = 'u8[1536]{0}', space=vmem, size = 0x800, scoped, tag = 'input window, operand 5, single buffered']
    #allocation9 [shape = 'u8[1536]{0}', space=vmem, size = 0x800, scoped, tag = 'input window, operand 6, single buffered']
    #allocation10 [shape = 's32[1]{0}', space=sflag, size = 0x4, scoped, tag = 'scoped memory for forward.1']
    #allocation11 [shape = 'u8[1536]{0}', space=vmem, size = 0x800, scoped, tag = 'input window, operand 8, single buffered']
    #allocation12 [shape = 'u8[1536]{0}', space=vmem, size = 0x800, scoped, tag = 'input window, operand 10, single buffered']
    #allocation13 [shape = 's32[1]{0}', space=sflag, size = 0x4, scoped, tag = 'scoped memory for forward.1']
    #allocation14 [shape = 'u8[1536]{0}', space=vmem, size = 0x800, scoped, tag = 'input window, operand 12, single buffered']
    #allocation15 [shape = 'u8[1536]{0}', space=vmem, size = 0x800, scoped, tag = 'input window, operand 14, single buffered']
    #allocation16 [shape = 's32[1]{0}', space=sflag, size = 0x4, scoped, tag = 'scoped memory for forward.1']
    #allocation17 [shape = 'u8[1536]{0}', space=vmem, size = 0x800, scoped, tag = 'input window, operand 15, single buffered']
    #allocation18 [shape = 'u8[1536]{0}', space=vmem, size = 0x800, scoped, tag = 'input window, operand 16, single buffered']
    #allocation19 [shape = 's32[1]{0}', space=sflag, size = 0x4, scoped, tag = 'scoped memory for forward.1']
    #allocation20 [shape = 'u8[49152]{0}', space=vmem, size = 0xc000, scoped, tag = 'input window, operand 17, single buffered']
    #allocation21 [shape = 'u8[1536]{0}', space=vmem, size = 0x800, scoped, tag = 'input window, operand 18, single buffered']
    #allocation22 [shape = 's32[1]{0}', space=sflag, size = 0x4, scoped, tag = 'scoped memory for forward.1']
    #allocation23 [shape = 'u8[1536]{0}', space=vmem, size = 0x800, scoped, tag = 'input window, operand 20, single buffered']
    #allocation24 [shape = 'u8[512]{0}', space=vmem, size = 0x400, scoped, tag = 'input window, operand 22, single buffered']
    #allocation25 [shape = 's32[1]{0}', space=sflag, size = 0x4, scoped, tag = 'scoped memory for forward.1']
    #allocation26 [shape = 'u8[512]{0}', space=vmem, size = 0x400, scoped, tag = 'input window, operand 24, single buffered']
    #allocation27 [shape = 'u8[512]{0}', space=vmem, size = 0x400, scoped, tag = 'input window, operand 26, single buffered']
    #allocation28 [shape = 's32[1]{0}', space=sflag, size = 0x4, scoped, tag = 'scoped memory for forward.1']
    #allocation29 [shape = 'u8[512]{0}', space=vmem, size = 0x400, scoped, tag = 'input window, operand 28, single buffered']
    %73 = vsyncpa [#allocation5], 0
    %74 = vsyncpa [#allocation7], 0
    %75 = vsyncpa [#allocation10], 0
    %76 = vsyncpa [#allocation13], 0
    %77 = vsyncpa [#allocation16], 0
    %78 = vsyncpa [#allocation19], 0
    %79 = vsyncpa [#allocation22], 0
    %80 = vsyncpa [#allocation25], 0
    %81 = vsyncpa [#allocation28], 0
    loop: start=0, step=1, limit=4
    $region2: #{forward.1} parent=1 // loop_pre_header
      _
    $region3: #{forward.1} parent=1 // loop_header
      %s83 = sphi 0, %s87
      %p84 = scmp.ge.s32.totalorder %s83, 4
      %s93 = sphi 0, %s95
      %s96 = sphi 0, %s93
      %s97 = sphi 0, %s96
      %s113 = sphi 0, %s97
      %s117 = sphi 0, %s117
      %s119 = sphi 0, %s117
      %s120 = sphi 0, %s119
      %s134 = sphi 0, %s120
      %s138 = sphi 0, %s138
      %s140 = sphi 0, %s138
      %s141 = sphi 0, %s140
      %s155 = sphi 0, %s141
      %s159 = sphi 0, %s159
      %s161 = sphi 0, %s159
      %s162 = sphi 0, %s161
      %s176 = sphi 0, %s162
      %s180 = sphi 0, %s180
      %s182 = sphi 0, %s180
      %s183 = sphi 0, %s182
      %s197 = sphi 0, %s183
      %s201 = sphi 0, %s201
      %s203 = sphi 0, %s201
      %s204 = sphi 0, %s203
      %s218 = sphi 0, %s204
      %s222 = sphi 0, %s222
      %s224 = sphi 0, %s222
      %s225 = sphi 0, %s224
      %s239 = sphi 0, %s225
      %s243 = sphi 0, %s243
      %s245 = sphi 0, %s243
      %s246 = sphi 0, %s245
      %s260 = sphi 0, %s246
      %s264 = sphi 0, %s264
      %s266 = sphi 0, %s264
      %s267 = sphi 0, %s266
      %s281 = sphi 0, %s267
      %s285 = sphi 0, %s285
      %s287 = sphi 0, %s285
      %s288 = sphi 0, %s287
      %s302 = sphi 0, %s288
      %s306 = sphi 0, %s306
      %s308 = sphi 0, %s306
      %s309 = sphi 0, %s308
      %s323 = sphi 0, %s309
      %s327 = sphi 0, %s327
      %s329 = sphi 0, %s327
      %s330 = sphi 0, %s329
      %s344 = sphi 0, %s330
      %s348 = sphi 0, %s348
      %s350 = sphi 0, %s348
      %s351 = sphi 0, %s350
      %s365 = sphi 0, %s351
      %s369 = sphi 0, %s369
      %s371 = sphi 0, %s369
      %s372 = sphi 0, %s371
      %s386 = sphi 0, %s372
      %s390 = sphi 0, %s390
      %s392 = sphi 0, %s390
      %s393 = sphi 0, %s392
      %s407 = sphi 0, %s393
      %s411 = sphi 0, %s411
      %s413 = sphi 0, %s411
      %s414 = sphi 0, %s413
      %s428 = sphi 0, %s414
      %s432 = sphi 0, %s432
      %s434 = sphi 0, %s432
      %s435 = sphi 0, %s434
      %s449 = sphi 0, %s435
      %s453 = sphi 0, %s453
      %s455 = sphi 0, %s453
      %s456 = sphi 0, %s455
      %s470 = sphi 0, %s456
      %s474 = sphi 0, %s474
      %s476 = sphi 0, %s474
      %s477 = sphi 0, %s476
      %s491 = sphi 0, %s477
      %s495 = sphi 0, %s495
      %s497 = sphi 0, %s495
      %s498 = sphi 0, %s497
      %s512 = sphi 0, %s498
      %s516 = sphi 0, %s516
      %s518 = sphi 0, %s516
      %s519 = sphi 0, %s518
      %s533 = sphi 0, %s519
      %s537 = sphi 0, %s537
      %s539 = sphi 0, %s537
      %s540 = sphi 0, %s539
      %s554 = sphi 0, %s540
      %s558 = sphi 0, %s558
      %s560 = sphi 0, %s558
      %s561 = sphi 0, %s560
      %s575 = sphi 0, %s561
      %s579 = sphi 0, %s579
      %s581 = sphi 0, %s579
      %s582 = sphi 0, %s581
      %s596 = sphi 0, %s582
      %s600 = sphi 0, %s600
      %s602 = sphi 0, %s600
      %s603 = sphi 0, %s602
      %s617 = sphi 0, %s603
      %s621 = sphi 0, %s621
      %s623 = sphi 0, %s621
      %s624 = sphi 0, %s623
      %s638 = sphi 0, %s624
      %s642 = sphi 0, %s642
      %s644 = sphi 0, %s642
      %s645 = sphi 0, %s644
      %s659 = sphi 0, %s645
      %s663 = sphi 0, %s663
      %s665 = sphi 0, %s663
      %s666 = sphi 0, %s665
      %s680 = sphi 0, %s666
      %s686 = sphi 0, %s688
      %s689 = sphi 0, %s686
      %s690 = sphi 0, %s689
      %s706 = sphi 0, %s690
      %s712 = sphi 0, %s714
      %s715 = sphi 0, %s712
      %s716 = sphi 0, %s715
      %s732 = sphi 0, %s716
    $region4: #{forward.1} parent=1 // loop_header_branch
      %86 = sbr.rel (%p84) target = $region8
    $region5: #{forward.1} parent=1 // loop_body
      %s88 = ssub.s32 %s83, 1
      %s89 = ssub.s32 %s83, 2
      %s90 = sadd.s32 %s83, 1
      %s91 = ssub.s32 %s83, %s90
      %p92 = scmp.eq.s32.totalorder %s91, 0
      %s94 = sadd.s32 %s93, 1
      %s95 = scalar_select %p92, %s93, %s94
      %p98 = pneg %p92
      %p99 = scmp.eq.s32.totalorder %s83, 1
      %p100 = por %p98, %p99
      %p101 = scmp.ne.s32.totalorder %s93, %s96
      %p102 = scmp.eq.s32.totalorder %s83, 0
      %p103 = por %p101, %p102
      %p104 = scmp.ne.s32.totalorder %s93, %s96
      %p105 = scmp.eq.s32.totalorder %s88, 1
      %p106 = por %p104, %p105
      %p107 = scmp.ne.s32.totalorder %s96, %s97
      %p108 = scmp.eq.s32.totalorder %s88, 0
      %p109 = por %p107, %p108
      %p110 = scmp.ne.s32.totalorder %s96, %s97
      %p111 = scmp.eq.s32.totalorder %s89, 1
      %p112 = por %p110, %p111
      %p114 = scmp.ne.s32.totalorder %s97, %s113
      %p115 = scmp.eq.s32.totalorder %s89, 0
      %p116 = por %p114, %p115
      %s118 = sadd.s32 %s117, 1
      %p121 = scmp.eq.s32.totalorder %s83, 1
      %p122 = scmp.ne.s32.totalorder %s117, %s119
      %p123 = scmp.eq.s32.totalorder %s83, 0
      %p124 = por %p122, %p123
      %p125 = scmp.ne.s32.totalorder %s117, %s119
      %p126 = scmp.eq.s32.totalorder %s88, 1
      %p127 = por %p125, %p126
      %p128 = scmp.ne.s32.totalorder %s119, %s120
      %p129 = scmp.eq.s32.totalorder %s88, 0
      %p130 = por %p128, %p129
      %p131 = scmp.ne.s32.totalorder %s119, %s120
      %p132 = scmp.eq.s32.totalorder %s89, 1
      %p133 = por %p131, %p132
      %p135 = scmp.ne.s32.totalorder %s120, %s134
      %p136 = scmp.eq.s32.totalorder %s89, 0
      %p137 = por %p135, %p136
      %s139 = sadd.s32 %s138, 1
      %p142 = scmp.eq.s32.totalorder %s83, 1
      %p143 = scmp.ne.s32.totalorder %s138, %s140
      %p144 = scmp.eq.s32.totalorder %s83, 0
      %p145 = por %p143, %p144
      %p146 = scmp.ne.s32.totalorder %s138, %s140
      %p147 = scmp.eq.s32.totalorder %s88, 1
      %p148 = por %p146, %p147
      %p149 = scmp.ne.s32.totalorder %s140, %s141
      %p150 = scmp.eq.s32.totalorder %s88, 0
      %p151 = por %p149, %p150
      %p152 = scmp.ne.s32.totalorder %s140, %s141
      %p153 = scmp.eq.s32.totalorder %s89, 1
      %p154 = por %p152, %p153
      %p156 = scmp.ne.s32.totalorder %s141, %s155
      %p157 = scmp.eq.s32.totalorder %s89, 0
      %p158 = por %p156, %p157
      %s160 = sadd.s32 %s159, 1
      %p163 = scmp.eq.s32.totalorder %s83, 1
      %p164 = scmp.ne.s32.totalorder %s159, %s161
      %p165 = scmp.eq.s32.totalorder %s83, 0
      %p166 = por %p164, %p165
      %p167 = scmp.ne.s32.totalorder %s159, %s161
      %p168 = scmp.eq.s32.totalorder %s88, 1
      %p169 = por %p167, %p168
      %p170 = scmp.ne.s32.totalorder %s161, %s162
      %p171 = scmp.eq.s32.totalorder %s88, 0
      %p172 = por %p170, %p171
      %p173 = scmp.ne.s32.totalorder %s161, %s162
      %p174 = scmp.eq.s32.totalorder %s89, 1
      %p175 = por %p173, %p174
      %p177 = scmp.ne.s32.totalorder %s162, %s176
      %p178 = scmp.eq.s32.totalorder %s89, 0
      %p179 = por %p177, %p178
      %s181 = sadd.s32 %s180, 1
      %p184 = scmp.eq.s32.totalorder %s83, 1
      %p185 = scmp.ne.s32.totalorder %s180, %s182
      %p186 = scmp.eq.s32.totalorder %s83, 0
      %p187 = por %p185, %p186
      %p188 = scmp.ne.s32.totalorder %s180, %s182
      %p189 = scmp.eq.s32.totalorder %s88, 1
      %p190 = por %p188, %p189
      %p191 = scmp.ne.s32.totalorder %s182, %s183
      %p192 = scmp.eq.s32.totalorder %s88, 0
      %p193 = por %p191, %p192
      %p194 = scmp.ne.s32.totalorder %s182, %s183
      %p195 = scmp.eq.s32.totalorder %s89, 1
      %p196 = por %p194, %p195
      %p198 = scmp.ne.s32.totalorder %s183, %s197
      %p199 = scmp.eq.s32.totalorder %s89, 0
      %p200 = por %p198, %p199
      %s202 = sadd.s32 %s201, 1
      %p205 = scmp.eq.s32.totalorder %s83, 1
      %p206 = scmp.ne.s32.totalorder %s201, %s203
      %p207 = scmp.eq.s32.totalorder %s83, 0
      %p208 = por %p206, %p207
      %p209 = scmp.ne.s32.totalorder %s201, %s203
      %p210 = scmp.eq.s32.totalorder %s88, 1
      %p211 = por %p209, %p210
      %p212 = scmp.ne.s32.totalorder %s203, %s204
      %p213 = scmp.eq.s32.totalorder %s88, 0
      %p214 = por %p212, %p213
      %p215 = scmp.ne.s32.totalorder %s203, %s204
      %p216 = scmp.eq.s32.totalorder %s89, 1
      %p217 = por %p215, %p216
      %p219 = scmp.ne.s32.totalorder %s204, %s218
      %p220 = scmp.eq.s32.totalorder %s89, 0
      %p221 = por %p219, %p220
      %s223 = sadd.s32 %s222, 1
      %p226 = scmp.eq.s32.totalorder %s83, 1
      %p227 = scmp.ne.s32.totalorder %s222, %s224
      %p228 = scmp.eq.s32.totalorder %s83, 0
      %p229 = por %p227, %p228
      %p230 = scmp.ne.s32.totalorder %s222, %s224
      %p231 = scmp.eq.s32.totalorder %s88, 1
      %p232 = por %p230, %p231
      %p233 = scmp.ne.s32.totalorder %s224, %s225
      %p234 = scmp.eq.s32.totalorder %s88, 0
      %p235 = por %p233, %p234
      %p236 = scmp.ne.s32.totalorder %s224, %s225
      %p237 = scmp.eq.s32.totalorder %s89, 1
      %p238 = por %p236, %p237
      %p240 = scmp.ne.s32.totalorder %s225, %s239
      %p241 = scmp.eq.s32.totalorder %s89, 0
      %p242 = por %p240, %p241
      %s244 = sadd.s32 %s243, 1
      %p247 = scmp.eq.s32.totalorder %s83, 1
      %p248 = scmp.ne.s32.totalorder %s243, %s245
      %p249 = scmp.eq.s32.totalorder %s83, 0
      %p250 = por %p248, %p249
      %p251 = scmp.ne.s32.totalorder %s243, %s245
      %p252 = scmp.eq.s32.totalorder %s88, 1
      %p253 = por %p251, %p252
      %p254 = scmp.ne.s32.totalorder %s245, %s246
      %p255 = scmp.eq.s32.totalorder %s88, 0
      %p256 = por %p254, %p255
      %p257 = scmp.ne.s32.totalorder %s245, %s246
      %p258 = scmp.eq.s32.totalorder %s89, 1
      %p259 = por %p257, %p258
      %p261 = scmp.ne.s32.totalorder %s246, %s260
      %p262 = scmp.eq.s32.totalorder %s89, 0
      %p263 = por %p261, %p262
      %s265 = sadd.s32 %s264, 1
      %p268 = scmp.eq.s32.totalorder %s83, 1
      %p269 = scmp.ne.s32.totalorder %s264, %s266
      %p270 = scmp.eq.s32.totalorder %s83, 0
      %p271 = por %p269, %p270
      %p272 = scmp.ne.s32.totalorder %s264, %s266
      %p273 = scmp.eq.s32.totalorder %s88, 1
      %p274 = por %p272, %p273
      %p275 = scmp.ne.s32.totalorder %s266, %s267
      %p276 = scmp.eq.s32.totalorder %s88, 0
      %p277 = por %p275, %p276
      %p278 = scmp.ne.s32.totalorder %s266, %s267
      %p279 = scmp.eq.s32.totalorder %s89, 1
      %p280 = por %p278, %p279
      %p282 = scmp.ne.s32.totalorder %s267, %s281
      %p283 = scmp.eq.s32.totalorder %s89, 0
      %p284 = por %p282, %p283
      %s286 = sadd.s32 %s285, 1
      %p289 = scmp.eq.s32.totalorder %s83, 1
      %p290 = scmp.ne.s32.totalorder %s285, %s287
      %p291 = scmp.eq.s32.totalorder %s83, 0
      %p292 = por %p290, %p291
      %p293 = scmp.ne.s32.totalorder %s285, %s287
      %p294 = scmp.eq.s32.totalorder %s88, 1
      %p295 = por %p293, %p294
      %p296 = scmp.ne.s32.totalorder %s287, %s288
      %p297 = scmp.eq.s32.totalorder %s88, 0
      %p298 = por %p296, %p297
      %p299 = scmp.ne.s32.totalorder %s287, %s288
      %p300 = scmp.eq.s32.totalorder %s89, 1
      %p301 = por %p299, %p300
      %p303 = scmp.ne.s32.totalorder %s288, %s302
      %p304 = scmp.eq.s32.totalorder %s89, 0
      %p305 = por %p303, %p304
      %s307 = sadd.s32 %s306, 1
      %p310 = scmp.eq.s32.totalorder %s83, 1
      %p311 = scmp.ne.s32.totalorder %s306, %s308
      %p312 = scmp.eq.s32.totalorder %s83, 0
      %p313 = por %p311, %p312
      %p314 = scmp.ne.s32.totalorder %s306, %s308
      %p315 = scmp.eq.s32.totalorder %s88, 1
      %p316 = por %p314, %p315
      %p317 = scmp.ne.s32.totalorder %s308, %s309
      %p318 = scmp.eq.s32.totalorder %s88, 0
      %p319 = por %p317, %p318
      %p320 = scmp.ne.s32.totalorder %s308, %s309
      %p321 = scmp.eq.s32.totalorder %s89, 1
      %p322 = por %p320, %p321
      %p324 = scmp.ne.s32.totalorder %s309, %s323
      %p325 = scmp.eq.s32.totalorder %s89, 0
      %p326 = por %p324, %p325
      %s328 = sadd.s32 %s327, 1
      %p331 = scmp.eq.s32.totalorder %s83, 1
      %p332 = scmp.ne.s32.totalorder %s327, %s329
      %p333 = scmp.eq.s32.totalorder %s83, 0
      %p334 = por %p332, %p333
      %p335 = scmp.ne.s32.totalorder %s327, %s329
      %p336 = scmp.eq.s32.totalorder %s88, 1
      %p337 = por %p335, %p336
      %p338 = scmp.ne.s32.totalorder %s329, %s330
      %p339 = scmp.eq.s32.totalorder %s88, 0
      %p340 = por %p338, %p339
      %p341 = scmp.ne.s32.totalorder %s329, %s330
      %p342 = scmp.eq.s32.totalorder %s89, 1
      %p343 = por %p341, %p342
      %p345 = scmp.ne.s32.totalorder %s330, %s344
      %p346 = scmp.eq.s32.totalorder %s89, 0
      %p347 = por %p345, %p346
      %s349 = sadd.s32 %s348, 1
      %p352 = scmp.eq.s32.totalorder %s83, 1
      %p353 = scmp.ne.s32.totalorder %s348, %s350
      %p354 = scmp.eq.s32.totalorder %s83, 0
      %p355 = por %p353, %p354
      %p356 = scmp.ne.s32.totalorder %s348, %s350
      %p357 = scmp.eq.s32.totalorder %s88, 1
      %p358 = por %p356, %p357
      %p359 = scmp.ne.s32.totalorder %s350, %s351
      %p360 = scmp.eq.s32.totalorder %s88, 0
      %p361 = por %p359, %p360
      %p362 = scmp.ne.s32.totalorder %s350, %s351
      %p363 = scmp.eq.s32.totalorder %s89, 1
      %p364 = por %p362, %p363
      %p366 = scmp.ne.s32.totalorder %s351, %s365
      %p367 = scmp.eq.s32.totalorder %s89, 0
      %p368 = por %p366, %p367
      %s370 = sadd.s32 %s369, 1
      %p373 = scmp.eq.s32.totalorder %s83, 1
      %p374 = scmp.ne.s32.totalorder %s369, %s371
      %p375 = scmp.eq.s32.totalorder %s83, 0
      %p376 = por %p374, %p375
      %p377 = scmp.ne.s32.totalorder %s369, %s371
      %p378 = scmp.eq.s32.totalorder %s88, 1
      %p379 = por %p377, %p378
      %p380 = scmp.ne.s32.totalorder %s371, %s372
      %p381 = scmp.eq.s32.totalorder %s88, 0
      %p382 = por %p380, %p381
      %p383 = scmp.ne.s32.totalorder %s371, %s372
      %p384 = scmp.eq.s32.totalorder %s89, 1
      %p385 = por %p383, %p384
      %p387 = scmp.ne.s32.totalorder %s372, %s386
      %p388 = scmp.eq.s32.totalorder %s89, 0
      %p389 = por %p387, %p388
      %s391 = sadd.s32 %s390, 1
      %p394 = scmp.eq.s32.totalorder %s83, 1
      %p395 = scmp.ne.s32.totalorder %s390, %s392
      %p396 = scmp.eq.s32.totalorder %s83, 0
      %p397 = por %p395, %p396
      %p398 = scmp.ne.s32.totalorder %s390, %s392
      %p399 = scmp.eq.s32.totalorder %s88, 1
      %p400 = por %p398, %p399
      %p401 = scmp.ne.s32.totalorder %s392, %s393
      %p402 = scmp.eq.s32.totalorder %s88, 0
      %p403 = por %p401, %p402
      %p404 = scmp.ne.s32.totalorder %s392, %s393
      %p405 = scmp.eq.s32.totalorder %s89, 1
      %p406 = por %p404, %p405
      %p408 = scmp.ne.s32.totalorder %s393, %s407
      %p409 = scmp.eq.s32.totalorder %s89, 0
      %p410 = por %p408, %p409
      %s412 = sadd.s32 %s411, 1
      %p415 = scmp.eq.s32.totalorder %s83, 1
      %p416 = scmp.ne.s32.totalorder %s411, %s413
      %p417 = scmp.eq.s32.totalorder %s83, 0
      %p418 = por %p416, %p417
      %p419 = scmp.ne.s32.totalorder %s411, %s413
      %p420 = scmp.eq.s32.totalorder %s88, 1
      %p421 = por %p419, %p420
      %p422 = scmp.ne.s32.totalorder %s413, %s414
      %p423 = scmp.eq.s32.totalorder %s88, 0
      %p424 = por %p422, %p423
      %p425 = scmp.ne.s32.totalorder %s413, %s414
      %p426 = scmp.eq.s32.totalorder %s89, 1
      %p427 = por %p425, %p426
      %p429 = scmp.ne.s32.totalorder %s414, %s428
      %p430 = scmp.eq.s32.totalorder %s89, 0
      %p431 = por %p429, %p430
      %s433 = sadd.s32 %s432, 1
      %p436 = scmp.eq.s32.totalorder %s83, 1
      %p437 = scmp.ne.s32.totalorder %s432, %s434
      %p438 = scmp.eq.s32.totalorder %s83, 0
      %p439 = por %p437, %p438
      %p440 = scmp.ne.s32.totalorder %s432, %s434
      %p441 = scmp.eq.s32.totalorder %s88, 1
      %p442 = por %p440, %p441
      %p443 = scmp.ne.s32.totalorder %s434, %s435
      %p444 = scmp.eq.s32.totalorder %s88, 0
      %p445 = por %p443, %p444
      %p446 = scmp.ne.s32.totalorder %s434, %s435
      %p447 = scmp.eq.s32.totalorder %s89, 1
      %p448 = por %p446, %p447
      %p450 = scmp.ne.s32.totalorder %s435, %s449
      %p451 = scmp.eq.s32.totalorder %s89, 0
      %p452 = por %p450, %p451
      %s454 = sadd.s32 %s453, 1
      %p457 = scmp.eq.s32.totalorder %s83, 1
      %p458 = scmp.ne.s32.totalorder %s453, %s455
      %p459 = scmp.eq.s32.totalorder %s83, 0
      %p460 = por %p458, %p459
      %p461 = scmp.ne.s32.totalorder %s453, %s455
      %p462 = scmp.eq.s32.totalorder %s88, 1
      %p463 = por %p461, %p462
      %p464 = scmp.ne.s32.totalorder %s455, %s456
      %p465 = scmp.eq.s32.totalorder %s88, 0
      %p466 = por %p464, %p465
      %p467 = scmp.ne.s32.totalorder %s455, %s456
      %p468 = scmp.eq.s32.totalorder %s89, 1
      %p469 = por %p467, %p468
      %p471 = scmp.ne.s32.totalorder %s456, %s470
      %p472 = scmp.eq.s32.totalorder %s89, 0
      %p473 = por %p471, %p472
      %s475 = sadd.s32 %s474, 1
      %p478 = scmp.eq.s32.totalorder %s83, 1
      %p479 = scmp.ne.s32.totalorder %s474, %s476
      %p480 = scmp.eq.s32.totalorder %s83, 0
      %p481 = por %p479, %p480
      %p482 = scmp.ne.s32.totalorder %s474, %s476
      %p483 = scmp.eq.s32.totalorder %s88, 1
      %p484 = por %p482, %p483
      %p485 = scmp.ne.s32.totalorder %s476, %s477
      %p486 = scmp.eq.s32.totalorder %s88, 0
      %p487 = por %p485, %p486
      %p488 = scmp.ne.s32.totalorder %s476, %s477
      %p489 = scmp.eq.s32.totalorder %s89, 1
      %p490 = por %p488, %p489
      %p492 = scmp.ne.s32.totalorder %s477, %s491
      %p493 = scmp.eq.s32.totalorder %s89, 0
      %p494 = por %p492, %p493
      %s496 = sadd.s32 %s495, 1
      %p499 = scmp.eq.s32.totalorder %s83, 1
      %p500 = scmp.ne.s32.totalorder %s495, %s497
      %p501 = scmp.eq.s32.totalorder %s83, 0
      %p502 = por %p500, %p501
      %p503 = scmp.ne.s32.totalorder %s495, %s497
      %p504 = scmp.eq.s32.totalorder %s88, 1
      %p505 = por %p503, %p504
      %p506 = scmp.ne.s32.totalorder %s497, %s498
      %p507 = scmp.eq.s32.totalorder %s88, 0
      %p508 = por %p506, %p507
      %p509 = scmp.ne.s32.totalorder %s497, %s498
      %p510 = scmp.eq.s32.totalorder %s89, 1
      %p511 = por %p509, %p510
      %p513 = scmp.ne.s32.totalorder %s498, %s512
      %p514 = scmp.eq.s32.totalorder %s89, 0
      %p515 = por %p513, %p514
      %s517 = sadd.s32 %s516, 1
      %p520 = scmp.eq.s32.totalorder %s83, 1
      %p521 = scmp.ne.s32.totalorder %s516, %s518
      %p522 = scmp.eq.s32.totalorder %s83, 0
      %p523 = por %p521, %p522
      %p524 = scmp.ne.s32.totalorder %s516, %s518
      %p525 = scmp.eq.s32.totalorder %s88, 1
      %p526 = por %p524, %p525
      %p527 = scmp.ne.s32.totalorder %s518, %s519
      %p528 = scmp.eq.s32.totalorder %s88, 0
      %p529 = por %p527, %p528
      %p530 = scmp.ne.s32.totalorder %s518, %s519
      %p531 = scmp.eq.s32.totalorder %s89, 1
      %p532 = por %p530, %p531
      %p534 = scmp.ne.s32.totalorder %s519, %s533
      %p535 = scmp.eq.s32.totalorder %s89, 0
      %p536 = por %p534, %p535
      %s538 = sadd.s32 %s537, 1
      %p541 = scmp.eq.s32.totalorder %s83, 1
      %p542 = scmp.ne.s32.totalorder %s537, %s539
      %p543 = scmp.eq.s32.totalorder %s83, 0
      %p544 = por %p542, %p543
      %p545 = scmp.ne.s32.totalorder %s537, %s539
      %p546 = scmp.eq.s32.totalorder %s88, 1
      %p547 = por %p545, %p546
      %p548 = scmp.ne.s32.totalorder %s539, %s540
      %p549 = scmp.eq.s32.totalorder %s88, 0
      %p550 = por %p548, %p549
      %p551 = scmp.ne.s32.totalorder %s539, %s540
      %p552 = scmp.eq.s32.totalorder %s89, 1
      %p553 = por %p551, %p552
      %p555 = scmp.ne.s32.totalorder %s540, %s554
      %p556 = scmp.eq.s32.totalorder %s89, 0
      %p557 = por %p555, %p556
      %s559 = sadd.s32 %s558, 1
      %p562 = scmp.eq.s32.totalorder %s83, 1
      %p563 = scmp.ne.s32.totalorder %s558, %s560
      %p564 = scmp.eq.s32.totalorder %s83, 0
      %p565 = por %p563, %p564
      %p566 = scmp.ne.s32.totalorder %s558, %s560
      %p567 = scmp.eq.s32.totalorder %s88, 1
      %p568 = por %p566, %p567
      %p569 = scmp.ne.s32.totalorder %s560, %s561
      %p570 = scmp.eq.s32.totalorder %s88, 0
      %p571 = por %p569, %p570
      %p572 = scmp.ne.s32.totalorder %s560, %s561
      %p573 = scmp.eq.s32.totalorder %s89, 1
      %p574 = por %p572, %p573
      %p576 = scmp.ne.s32.totalorder %s561, %s575
      %p577 = scmp.eq.s32.totalorder %s89, 0
      %p578 = por %p576, %p577
      %s580 = sadd.s32 %s579, 1
      %p583 = scmp.eq.s32.totalorder %s83, 1
      %p584 = scmp.ne.s32.totalorder %s579, %s581
      %p585 = scmp.eq.s32.totalorder %s83, 0
      %p586 = por %p584, %p585
      %p587 = scmp.ne.s32.totalorder %s579, %s581
      %p588 = scmp.eq.s32.totalorder %s88, 1
      %p589 = por %p587, %p588
      %p590 = scmp.ne.s32.totalorder %s581, %s582
      %p591 = scmp.eq.s32.totalorder %s88, 0
      %p592 = por %p590, %p591
      %p593 = scmp.ne.s32.totalorder %s581, %s582
      %p594 = scmp.eq.s32.totalorder %s89, 1
      %p595 = por %p593, %p594
      %p597 = scmp.ne.s32.totalorder %s582, %s596
      %p598 = scmp.eq.s32.totalorder %s89, 0
      %p599 = por %p597, %p598
      %s601 = sadd.s32 %s600, 1
      %p604 = scmp.eq.s32.totalorder %s83, 1
      %p605 = scmp.ne.s32.totalorder %s600, %s602
      %p606 = scmp.eq.s32.totalorder %s83, 0
      %p607 = por %p605, %p606
      %p608 = scmp.ne.s32.totalorder %s600, %s602
      %p609 = scmp.eq.s32.totalorder %s88, 1
      %p610 = por %p608, %p609
      %p611 = scmp.ne.s32.totalorder %s602, %s603
      %p612 = scmp.eq.s32.totalorder %s88, 0
      %p613 = por %p611, %p612
      %p614 = scmp.ne.s32.totalorder %s602, %s603
      %p615 = scmp.eq.s32.totalorder %s89, 1
      %p616 = por %p614, %p615
      %p618 = scmp.ne.s32.totalorder %s603, %s617
      %p619 = scmp.eq.s32.totalorder %s89, 0
      %p620 = por %p618, %p619
      %s622 = sadd.s32 %s621, 1
      %p625 = scmp.eq.s32.totalorder %s83, 1
      %p626 = scmp.ne.s32.totalorder %s621, %s623
      %p627 = scmp.eq.s32.totalorder %s83, 0
      %p628 = por %p626, %p627
      %p629 = scmp.ne.s32.totalorder %s621, %s623
      %p630 = scmp.eq.s32.totalorder %s88, 1
      %p631 = por %p629, %p630
      %p632 = scmp.ne.s32.totalorder %s623, %s624
      %p633 = scmp.eq.s32.totalorder %s88, 0
      %p634 = por %p632, %p633
      %p635 = scmp.ne.s32.totalorder %s623, %s624
      %p636 = scmp.eq.s32.totalorder %s89, 1
      %p637 = por %p635, %p636
      %p639 = scmp.ne.s32.totalorder %s624, %s638
      %p640 = scmp.eq.s32.totalorder %s89, 0
      %p641 = por %p639, %p640
      %s643 = sadd.s32 %s642, 1
      %p646 = scmp.eq.s32.totalorder %s83, 1
      %p647 = scmp.ne.s32.totalorder %s642, %s644
      %p648 = scmp.eq.s32.totalorder %s83, 0
      %p649 = por %p647, %p648
      %p650 = scmp.ne.s32.totalorder %s642, %s644
      %p651 = scmp.eq.s32.totalorder %s88, 1
      %p652 = por %p650, %p651
      %p653 = scmp.ne.s32.totalorder %s644, %s645
      %p654 = scmp.eq.s32.totalorder %s88, 0
      %p655 = por %p653, %p654
      %p656 = scmp.ne.s32.totalorder %s644, %s645
      %p657 = scmp.eq.s32.totalorder %s89, 1
      %p658 = por %p656, %p657
      %p660 = scmp.ne.s32.totalorder %s645, %s659
      %p661 = scmp.eq.s32.totalorder %s89, 0
      %p662 = por %p660, %p661
      %s664 = sadd.s32 %s663, 1
      %p667 = scmp.eq.s32.totalorder %s83, 1
      %p668 = scmp.ne.s32.totalorder %s663, %s665
      %p669 = scmp.eq.s32.totalorder %s83, 0
      %p670 = por %p668, %p669
      %p671 = scmp.ne.s32.totalorder %s663, %s665
      %p672 = scmp.eq.s32.totalorder %s88, 1
      %p673 = por %p671, %p672
      %p674 = scmp.ne.s32.totalorder %s665, %s666
      %p675 = scmp.eq.s32.totalorder %s88, 0
      %p676 = por %p674, %p675
      %p677 = scmp.ne.s32.totalorder %s665, %s666
      %p678 = scmp.eq.s32.totalorder %s89, 1
      %p679 = por %p677, %p678
      %p681 = scmp.ne.s32.totalorder %s666, %s680
      %p682 = scmp.eq.s32.totalorder %s89, 0
      %p683 = por %p681, %p682
      %s684 = ssub.s32 %s83, %s90
      %p685 = scmp.eq.s32.totalorder %s684, 0
      %s687 = sadd.s32 %s686, 1
      %s688 = scalar_select %p685, %s686, %s687
      %p691 = pneg %p685
      %p692 = scmp.eq.s32.totalorder %s83, 1
      %p693 = por %p691, %p692
      %p694 = scmp.ne.s32.totalorder %s686, %s689
      %p695 = scmp.eq.s32.totalorder %s83, 0
      %p696 = por %p694, %p695
      %p697 = scmp.ne.s32.totalorder %s686, %s689
      %p698 = scmp.eq.s32.totalorder %s88, 1
      %p699 = por %p697, %p698
      %p700 = scmp.ne.s32.totalorder %s689, %s690
      %p701 = scmp.eq.s32.totalorder %s88, 0
      %p702 = por %p700, %p701
      %p703 = scmp.ne.s32.totalorder %s689, %s690
      %p704 = scmp.eq.s32.totalorder %s89, 1
      %p705 = por %p703, %p704
      %p707 = scmp.ne.s32.totalorder %s690, %s706
      %p708 = scmp.eq.s32.totalorder %s89, 0
      %p709 = por %p707, %p708
      %s710 = ssub.s32 %s83, %s90
      %p711 = scmp.eq.s32.totalorder %s710, 0
      %s713 = sadd.s32 %s712, 1
      %s714 = scalar_select %p711, %s712, %s713
      %p717 = pneg %p711
      %p718 = scmp.eq.s32.totalorder %s83, 1
      %p719 = por %p717, %p718
      %p720 = scmp.ne.s32.totalorder %s712, %s715
      %p721 = scmp.eq.s32.totalorder %s83, 0
      %p722 = por %p720, %p721
      %p723 = scmp.ne.s32.totalorder %s712, %s715
      %p724 = scmp.eq.s32.totalorder %s88, 1
      %p725 = por %p723, %p724
      %p726 = scmp.ne.s32.totalorder %s715, %s716
      %p727 = scmp.eq.s32.totalorder %s88, 0
      %p728 = por %p726, %p727
      %p729 = scmp.ne.s32.totalorder %s715, %s716
      %p730 = scmp.eq.s32.totalorder %s89, 1
      %p731 = por %p729, %p730
      %p733 = scmp.ne.s32.totalorder %s716, %s732
      %p734 = scmp.eq.s32.totalorder %s89, 0
      %p735 = por %p733, %p734
      %p736 = scmp.le.s32.totalorder 1, %s83
      %p737 = scmp.lt.s32.totalorder %s83, 3
      %p738 = pnand %p736, %p737
      %p739 = pneg %p738
      // Predicated region
      $region9: #{forward.1} parent=5 // pred_check
        _
      $region10: #{forward.1} parent=5 // pred_check_branch
        %741 = sbr.rel (%p738) target = $region12
      $region11: #{forward.1} parent=5 // pred_region
        %s742 = ssub.s32 %s83, 1
        // Predicated region
        $region13: #{forward.1} parent=11 // pred_check
          %p743 = pneg %p130
        $region14: #{forward.1} parent=11 // pred_check_branch
          %745 = sbr.rel (%p743) target = $region16
        $region15: #{forward.1} parent=11 // pred_region
          %s747 = ssub.s32 384, 384
          %748 = vsyncadd [#allocation5], %s747
          %s749 = sshll.u32 [#allocation4], 4
          %s750 = int_to_ptr.vmem [resolvable:$true] %s749
          %755 = dma.hbm_to_vmem [thread:$0]  %s5, 384, %s750, [#allocation5], 128, 128, 8
        $region16: #{forward.1} parent=11 // pred_fallthru
          _
        // Predicated region
        $region17: #{forward.1} parent=11 // pred_check
          %p756 = pneg %p151
        $region18: #{forward.1} parent=11 // pred_check_branch
          %758 = sbr.rel (%p756) target = $region20
        $region19: #{forward.1} parent=11 // pred_region
          %s760 = ssub.s32 16, 16
          %761 = vsyncadd [#allocation7], %s760
          %s763 = sshll.u32 [#allocation6], 4
          %s764 = int_to_ptr.vmem [resolvable:$true] %s763
          %766 = dma.hbm_to_vmem [thread:$0]  %s7, 16, %s764, [#allocation7]
        $region20: #{forward.1} parent=11 // pred_fallthru
          _
        // Predicated region
        $region21: #{forward.1} parent=11 // pred_check
          %p767 = pneg %p172
        $region22: #{forward.1} parent=11 // pred_check_branch
          %769 = sbr.rel (%p767) target = $region24
        $region23: #{forward.1} parent=11 // pred_region
          _
        $region24: #{forward.1} parent=11 // pred_fallthru
          _
        // Predicated region
        $region25: #{forward.1} parent=11 // pred_check
          %p770 = pneg %p193
        $region26: #{forward.1} parent=11 // pred_check_branch
          %772 = sbr.rel (%p770) target = $region28
        $region27: #{forward.1} parent=11 // pred_region
          %s774 = ssub.s32 48, 48
          %775 = vsyncadd [#allocation7], %s774
          %s776 = sshll.u32 [#allocation8], 4
          %s777 = int_to_ptr.vmem [resolvable:$true] %s776
          %782 = dma.hbm_to_vmem [thread:$0]  %s11, 48, %s777, [#allocation7], 16, 16, 1
        $region28: #{forward.1} parent=11 // pred_fallthru
          _
        // Predicated region
        $region29: #{forward.1} parent=11 // pred_check
          %p783 = pneg %p214
        $region30: #{forward.1} parent=11 // pred_check_branch
          %785 = sbr.rel (%p783) target = $region32
        $region31: #{forward.1} parent=11 // pred_region
          %s787 = ssub.s32 48, 48
          %788 = vsyncadd [#allocation10], %s787
          %s789 = sshll.u32 [#allocation9], 4
          %s790 = int_to_ptr.vmem [resolvable:$true] %s789
          %795 = dma.hbm_to_vmem [thread:$0]  %s13, 48, %s790, [#allocation10], 16, 16, 1
        $region32: #{forward.1} parent=11 // pred_fallthru
          _
        // Predicated region
        $region33: #{forward.1} parent=11 // pred_check
          %p796 = pneg %p235
        $region34: #{forward.1} parent=11 // pred_check_branch
          %798 = sbr.rel (%p796) target = $region36
        $region35: #{forward.1} parent=11 // pred_region
          _
        $region36: #{forward.1} parent=11 // pred_fallthru
          _
        // Predicated region
        $region37: #{forward.1} parent=11 // pred_check
          %p799 = pneg %p256
        $region38: #{forward.1} parent=11 // pred_check_branch
          %801 = sbr.rel (%p799) target = $region40
        $region39: #{forward.1} parent=11 // pred_region
          %s803 = ssub.s32 48, 48
          %804 = vsyncadd [#allocation10], %s803
          %s805 = sshll.u32 [#allocation11], 4
          %s806 = int_to_ptr.vmem [resolvable:$true] %s805
          %811 = dma.hbm_to_vmem [thread:$0]  %s17, 48, %s806, [#allocation10], 16, 16, 1
        $region40: #{forward.1} parent=11 // pred_fallthru
          _
        // Predicated region
        $region41: #{forward.1} parent=11 // pred_check
          %p812 = pneg %p277
        $region42: #{forward.1} parent=11 // pred_check_branch
          %814 = sbr.rel (%p812) target = $region44
        $region43: #{forward.1} parent=11 // pred_region
          _
        $region44: #{forward.1} parent=11 // pred_fallthru
          _
        // Predicated region
        $region45: #{forward.1} parent=11 // pred_check
          %p815 = pneg %p298
        $region46: #{forward.1} parent=11 // pred_check_branch
          %817 = sbr.rel (%p815) target = $region48
        $region47: #{forward.1} parent=11 // pred_region
          %s819 = ssub.s32 48, 48
          %820 = vsyncadd [#allocation13], %s819
          %s821 = sshll.u32 [#allocation12], 4
          %s822 = int_to_ptr.vmem [resolvable:$true] %s821
          %827 = dma.hbm_to_vmem [thread:$0]  %s21, 48, %s822, [#allocation13], 16, 16, 1
        $region48: #{forward.1} parent=11 // pred_fallthru
          _
        // Predicated region
        $region49: #{forward.1} parent=11 // pred_check
          %p828 = pneg %p319
        $region50: #{forward.1} parent=11 // pred_check_branch
          %830 = sbr.rel (%p828) target = $region52
        $region51: #{forward.1} parent=11 // pred_region
          _
        $region52: #{forward.1} parent=11 // pred_fallthru
          _
        // Predicated region
        $region53: #{forward.1} parent=11 // pred_check
          %p831 = pneg %p340
        $region54: #{forward.1} parent=11 // pred_check_branch
          %833 = sbr.rel (%p831) target = $region56
        $region55: #{forward.1} parent=11 // pred_region
          %s835 = ssub.s32 48, 48
          %836 = vsyncadd [#allocation13], %s835
          %s837 = sshll.u32 [#allocation14], 4
          %s838 = int_to_ptr.vmem [resolvable:$true] %s837
          %843 = dma.hbm_to_vmem [thread:$0]  %s25, 48, %s838, [#allocation13], 16, 16, 1
        $region56: #{forward.1} parent=11 // pred_fallthru
          _
        // Predicated region
        $region57: #{forward.1} parent=11 // pred_check
          %p844 = pneg %p361
        $region58: #{forward.1} parent=11 // pred_check_branch
          %846 = sbr.rel (%p844) target = $region60
        $region59: #{forward.1} parent=11 // pred_region
          _
        $region60: #{forward.1} parent=11 // pred_fallthru
          _
        // Predicated region
        $region61: #{forward.1} parent=11 // pred_check
          %p847 = pneg %p382
        $region62: #{forward.1} parent=11 // pred_check_branch
          %849 = sbr.rel (%p847) target = $region64
        $region63: #{forward.1} parent=11 // pred_region
          %s851 = ssub.s32 48, 48
          %852 = vsyncadd [#allocation16], %s851
          %s853 = sshll.u32 [#allocation15], 4
          %s854 = int_to_ptr.vmem [resolvable:$true] %s853
          %859 = dma.hbm_to_vmem [thread:$0]  %s29, 48, %s854, [#allocation16], 16, 16, 1
        $region64: #{forward.1} parent=11 // pred_fallthru
          _
        // Predicated region
        $region65: #{forward.1} parent=11 // pred_check
          %p860 = pneg %p403
        $region66: #{forward.1} parent=11 // pred_check_branch
          %862 = sbr.rel (%p860) target = $region68
        $region67: #{forward.1} parent=11 // pred_region
          %s864 = ssub.s32 48, 48
          %865 = vsyncadd [#allocation16], %s864
          %s866 = sshll.u32 [#allocation17], 4
          %s867 = int_to_ptr.vmem [resolvable:$true] %s866
          %872 = dma.hbm_to_vmem [thread:$0]  %s31, 48, %s867, [#allocation16], 16, 16, 1
        $region68: #{forward.1} parent=11 // pred_fallthru
          _
        // Predicated region
        $region69: #{forward.1} parent=11 // pred_check
          %p873 = pneg %p424
        $region70: #{forward.1} parent=11 // pred_check_branch
          %875 = sbr.rel (%p873) target = $region72
        $region71: #{forward.1} parent=11 // pred_region
          %s877 = ssub.s32 48, 48
          %878 = vsyncadd [#allocation19], %s877
          %s879 = sshll.u32 [#allocation18], 4
          %s880 = int_to_ptr.vmem [resolvable:$true] %s879
          %885 = dma.hbm_to_vmem [thread:$0]  %s33, 48, %s880, [#allocation19], 16, 16, 1
        $region72: #{forward.1} parent=11 // pred_fallthru
          _
        // Predicated region
        $region73: #{forward.1} parent=11 // pred_check
          %p886 = pneg %p445
        $region74: #{forward.1} parent=11 // pred_check_branch
          %888 = sbr.rel (%p886) target = $region76
        $region75: #{forward.1} parent=11 // pred_region
          %s890 = ssub.s32 1536, 1536
          %891 = vsyncadd [#allocation19], %s890
          %s892 = sshll.u32 [#allocation20], 4
          %s893 = int_to_ptr.vmem [resolvable:$true] %s892
          %898 = dma.hbm_to_vmem [thread:$0]  %s35, 1536, %s893, [#allocation19], 128, 128, 8
        $region76: #{forward.1} parent=11 // pred_fallthru
          _
        // Predicated region
        $region77: #{forward.1} parent=11 // pred_check
          %p899 = pneg %p466
        $region78: #{forward.1} parent=11 // pred_check_branch
          %901 = sbr.rel (%p899) target = $region80
        $region79: #{forward.1} parent=11 // pred_region
          %s903 = ssub.s32 48, 48
          %904 = vsyncadd [#allocation22], %s903
          %s905 = sshll.u32 [#allocation21], 4
          %s906 = int_to_ptr.vmem [resolvable:$true] %s905
          %911 = dma.hbm_to_vmem [thread:$0]  %s37, 48, %s906, [#allocation22], 16, 16, 1
        $region80: #{forward.1} parent=11 // pred_fallthru
          _
        // Predicated region
        $region81: #{forward.1} parent=11 // pred_check
          %p912 = pneg %p487
        $region82: #{forward.1} parent=11 // pred_check_branch
          %914 = sbr.rel (%p912) target = $region84
        $region83: #{forward.1} parent=11 // pred_region
          _
        $region84: #{forward.1} parent=11 // pred_fallthru
          _
        // Predicated region
        $region85: #{forward.1} parent=11 // pred_check
          %p915 = pneg %p508
        $region86: #{forward.1} parent=11 // pred_check_branch
          %917 = sbr.rel (%p915) target = $region88
        $region87: #{forward.1} parent=11 // pred_region
          %s919 = ssub.s32 48, 48
          %920 = vsyncadd [#allocation22], %s919
          %s921 = sshll.u32 [#allocation23], 4
          %s922 = int_to_ptr.vmem [resolvable:$true] %s921
          %927 = dma.hbm_to_vmem [thread:$0]  %s41, 48, %s922, [#allocation22], 16, 16, 1
        $region88: #{forward.1} parent=11 // pred_fallthru
          _
        // Predicated region
        $region89: #{forward.1} parent=11 // pred_check
          %p928 = pneg %p529
        $region90: #{forward.1} parent=11 // pred_check_branch
          %930 = sbr.rel (%p928) target = $region92
        $region91: #{forward.1} parent=11 // pred_region
          _
        $region92: #{forward.1} parent=11 // pred_fallthru
          _
        // Predicated region
        $region93: #{forward.1} parent=11 // pred_check
          %p931 = pneg %p550
        $region94: #{forward.1} parent=11 // pred_check_branch
          %933 = sbr.rel (%p931) target = $region96
        $region95: #{forward.1} parent=11 // pred_region
          %s935 = ssub.s32 16, 16
          %936 = vsyncadd [#allocation25], %s935
          %s938 = sshll.u32 [#allocation24], 4
          %s939 = int_to_ptr.vmem [resolvable:$true] %s938
          %941 = dma.hbm_to_vmem [thread:$0]  %s45, 16, %s939, [#allocation25]
        $region96: #{forward.1} parent=11 // pred_fallthru
          _
        // Predicated region
        $region97: #{forward.1} parent=11 // pred_check
          %p942 = pneg %p571
        $region98: #{forward.1} parent=11 // pred_check_branch
          %944 = sbr.rel (%p942) target = $region100
        $region99: #{forward.1} parent=11 // pred_region
          _
        $region100: #{forward.1} parent=11 // pred_fallthru
          _
        // Predicated region
        $region101: #{forward.1} parent=11 // pred_check
          %p945 = pneg %p592
        $region102: #{forward.1} parent=11 // pred_check_branch
          %947 = sbr.rel (%p945) target = $region104
        $region103: #{forward.1} parent=11 // pred_region
          %s949 = ssub.s32 16, 16
          %950 = vsyncadd [#allocation25], %s949
          %s952 = sshll.u32 [#allocation26], 4
          %s953 = int_to_ptr.vmem [resolvable:$true] %s952
          %955 = dma.hbm_to_vmem [thread:$0]  %s49, 16, %s953, [#allocation25]
        $region104: #{forward.1} parent=11 // pred_fallthru
          _
        // Predicated region
        $region105: #{forward.1} parent=11 // pred_check
          %p956 = pneg %p613
        $region106: #{forward.1} parent=11 // pred_check_branch
          %958 = sbr.rel (%p956) target = $region108
        $region107: #{forward.1} parent=11 // pred_region
          _
        $region108: #{forward.1} parent=11 // pred_fallthru
          _
        // Predicated region
        $region109: #{forward.1} parent=11 // pred_check
          %p959 = pneg %p634
        $region110: #{forward.1} parent=11 // pred_check_branch
          %961 = sbr.rel (%p959) target = $region112
        $region111: #{forward.1} parent=11 // pred_region
          %s963 = ssub.s32 16, 16
          %964 = vsyncadd [#allocation28], %s963
          %s966 = sshll.u32 [#allocation27], 4
          %s967 = int_to_ptr.vmem [resolvable:$true] %s966
          %969 = dma.hbm_to_vmem [thread:$0]  %s53, 16, %s967, [#allocation28]
        $region112: #{forward.1} parent=11 // pred_fallthru
          _
        // Predicated region
        $region113: #{forward.1} parent=11 // pred_check
          %p970 = pneg %p655
        $region114: #{forward.1} parent=11 // pred_check_branch
          %972 = sbr.rel (%p970) target = $region116
        $region115: #{forward.1} parent=11 // pred_region
          _
        $region116: #{forward.1} parent=11 // pred_fallthru
          _
        // Predicated region
        $region117: #{forward.1} parent=11 // pred_check
          %p973 = pneg %p676
        $region118: #{forward.1} parent=11 // pred_check_branch
          %975 = sbr.rel (%p973) target = $region120
        $region119: #{forward.1} parent=11 // pred_region
          %s977 = ssub.s32 16, 16
          %978 = vsyncadd [#allocation28], %s977
          %s980 = sshll.u32 [#allocation29], 4
          %s981 = int_to_ptr.vmem [resolvable:$true] %s980
          %983 = dma.hbm_to_vmem [thread:$0]  %s57, 16, %s981, [#allocation28]
        $region120: #{forward.1} parent=11 // pred_fallthru
          _
      $region12: #{forward.1} parent=5 // pred_fallthru
        _
      %p984 = scmp.lt.s32.totalorder %s83, 2
      // Predicated region
      $region121: #{forward.1} parent=5 // pred_check
        %p985 = pneg %p984
      $region122: #{forward.1} parent=5 // pred_check_branch
        %987 = sbr.rel (%p985) target = $region124
      $region123: #{forward.1} parent=5 // pred_region
        // Predicated region
        $region125: #{forward.1} parent=123 // pred_check
          %p988 = pneg %p103
        $region126: #{forward.1} parent=123 // pred_check_branch
          %990 = sbr.rel (%p988) target = $region128
        $region127: #{forward.1} parent=123 // pred_region
          %p991 = scmp.lt.s32.totalorder %s83, 1
          %s992 = scalar_select %p991, %s83, 1
          %s993 = smul.addr %s992, 8
          %s994 = scalar_lea.vmem %s3, %s993
        $region128: #{forward.1} parent=123 // pred_fallthru
          _
      $region124: #{forward.1} parent=5 // pred_fallthru
        _
      %p995 = scmp.le.s32.totalorder 1, %s83
      %p996 = scmp.lt.s32.totalorder %s83, 3
      %p997 = pnand %p995, %p996
      %p998 = pneg %p997
      // Predicated region
      $region129: #{forward.1} parent=5 // pred_check
        _
      $region130: #{forward.1} parent=5 // pred_check_branch
        %1000 = sbr.rel (%p997) target = $region132
      $region131: #{forward.1} parent=5 // pred_region
        %s1001 = ssub.s32 %s83, 1
        // Predicated region
        $region133: #{forward.1} parent=131 // pred_check
          %p1002 = pneg %p130
        $region134: #{forward.1} parent=131 // pred_check_branch
          %1004 = sbr.rel (%p1002) target = $region136
        $region135: #{forward.1} parent=131 // pred_region
          %1005 = dma.done [#allocation5], 384
        $region136: #{forward.1} parent=131 // pred_fallthru
          _
        // Predicated region
        $region137: #{forward.1} parent=131 // pred_check
          %p1006 = pneg %p151
        $region138: #{forward.1} parent=131 // pred_check_branch
          %1008 = sbr.rel (%p1006) target = $region140
        $region139: #{forward.1} parent=131 // pred_region
          %1009 = dma.done [#allocation7], 16
        $region140: #{forward.1} parent=131 // pred_fallthru
          _
        // Predicated region
        $region141: #{forward.1} parent=131 // pred_check
          %p1010 = pneg %p193
        $region142: #{forward.1} parent=131 // pred_check_branch
          %1012 = sbr.rel (%p1010) target = $region144
        $region143: #{forward.1} parent=131 // pred_region
          %1013 = dma.done [#allocation7], 48
        $region144: #{forward.1} parent=131 // pred_fallthru
          _
        // Predicated region
        $region145: #{forward.1} parent=131 // pred_check
          %p1014 = pneg %p214
        $region146: #{forward.1} parent=131 // pred_check_branch
          %1016 = sbr.rel (%p1014) target = $region148
        $region147: #{forward.1} parent=131 // pred_region
          %1017 = dma.done [#allocation10], 48
        $region148: #{forward.1} parent=131 // pred_fallthru
          _
        // Predicated region
        $region149: #{forward.1} parent=131 // pred_check
          %p1018 = pneg %p256
        $region150: #{forward.1} parent=131 // pred_check_branch
          %1020 = sbr.rel (%p1018) target = $region152
        $region151: #{forward.1} parent=131 // pred_region
          %1021 = dma.done [#allocation10], 48
        $region152: #{forward.1} parent=131 // pred_fallthru
          _
        // Predicated region
        $region153: #{forward.1} parent=131 // pred_check
          %p1022 = pneg %p298
        $region154: #{forward.1} parent=131 // pred_check_branch
          %1024 = sbr.rel (%p1022) target = $region156
        $region155: #{forward.1} parent=131 // pred_region
          %1025 = dma.done [#allocation13], 48
        $region156: #{forward.1} parent=131 // pred_fallthru
          _
        // Predicated region
        $region157: #{forward.1} parent=131 // pred_check
          %p1026 = pneg %p340
        $region158: #{forward.1} parent=131 // pred_check_branch
          %1028 = sbr.rel (%p1026) target = $region160
        $region159: #{forward.1} parent=131 // pred_region
          %1029 = dma.done [#allocation13], 48
        $region160: #{forward.1} parent=131 // pred_fallthru
          _
        // Predicated region
        $region161: #{forward.1} parent=131 // pred_check
          %p1030 = pneg %p382
        $region162: #{forward.1} parent=131 // pred_check_branch
          %1032 = sbr.rel (%p1030) target = $region164
        $region163: #{forward.1} parent=131 // pred_region
          %1033 = dma.done [#allocation16], 48
        $region164: #{forward.1} parent=131 // pred_fallthru
          _
        // Predicated region
        $region165: #{forward.1} parent=131 // pred_check
          %p1034 = pneg %p403
        $region166: #{forward.1} parent=131 // pred_check_branch
          %1036 = sbr.rel (%p1034) target = $region168
        $region167: #{forward.1} parent=131 // pred_region
          %1037 = dma.done [#allocation16], 48
        $region168: #{forward.1} parent=131 // pred_fallthru
          _
        // Predicated region
        $region169: #{forward.1} parent=131 // pred_check
          %p1038 = pneg %p424
        $region170: #{forward.1} parent=131 // pred_check_branch
          %1040 = sbr.rel (%p1038) target = $region172
        $region171: #{forward.1} parent=131 // pred_region
          %1041 = dma.done [#allocation19], 48
        $region172: #{forward.1} parent=131 // pred_fallthru
          _
        // Predicated region
        $region173: #{forward.1} parent=131 // pred_check
          %p1042 = pneg %p445
        $region174: #{forward.1} parent=131 // pred_check_branch
          %1044 = sbr.rel (%p1042) target = $region176
        $region175: #{forward.1} parent=131 // pred_region
          %1045 = dma.done [#allocation19], 1536
        $region176: #{forward.1} parent=131 // pred_fallthru
          _
        // Predicated region
        $region177: #{forward.1} parent=131 // pred_check
          %p1046 = pneg %p466
        $region178: #{forward.1} parent=131 // pred_check_branch
          %1048 = sbr.rel (%p1046) target = $region180
        $region179: #{forward.1} parent=131 // pred_region
          %1049 = dma.done [#allocation22], 48
        $region180: #{forward.1} parent=131 // pred_fallthru
          _
        // Predicated region
        $region181: #{forward.1} parent=131 // pred_check
          %p1050 = pneg %p508
        $region182: #{forward.1} parent=131 // pred_check_branch
          %1052 = sbr.rel (%p1050) target = $region184
        $region183: #{forward.1} parent=131 // pred_region
          %1053 = dma.done [#allocation22], 48
        $region184: #{forward.1} parent=131 // pred_fallthru
          _
        // Predicated region
        $region185: #{forward.1} parent=131 // pred_check
          %p1054 = pneg %p550
        $region186: #{forward.1} parent=131 // pred_check_branch
          %1056 = sbr.rel (%p1054) target = $region188
        $region187: #{forward.1} parent=131 // pred_region
          %1057 = dma.done [#allocation25], 16
        $region188: #{forward.1} parent=131 // pred_fallthru
          _
        // Predicated region
        $region189: #{forward.1} parent=131 // pred_check
          %p1058 = pneg %p592
        $region190: #{forward.1} parent=131 // pred_check_branch
          %1060 = sbr.rel (%p1058) target = $region192
        $region191: #{forward.1} parent=131 // pred_region
          %1061 = dma.done [#allocation25], 16
        $region192: #{forward.1} parent=131 // pred_fallthru
          _
        // Predicated region
        $region193: #{forward.1} parent=131 // pred_check
          %p1062 = pneg %p634
        $region194: #{forward.1} parent=131 // pred_check_branch
          %1064 = sbr.rel (%p1062) target = $region196
        $region195: #{forward.1} parent=131 // pred_region
          %1065 = dma.done [#allocation28], 16
        $region196: #{forward.1} parent=131 // pred_fallthru
          _
        // Predicated region
        $region197: #{forward.1} parent=131 // pred_check
          %p1066 = pneg %p676
        $region198: #{forward.1} parent=131 // pred_check_branch
          %1068 = sbr.rel (%p1066) target = $region200
        $region199: #{forward.1} parent=131 // pred_region
          %1069 = dma.done [#allocation28], 16
        $region200: #{forward.1} parent=131 // pred_fallthru
          _
        %p1070 = scmp.lt.s32.totalorder %s88, 1
        %s1071 = scalar_select %p1070, %s88, 1
        %s1072 = smul.addr %s1071, 8
        %s1073 = scalar_lea.vmem %s3, %s1072
        %p1074 = pneg %p109
        %p1075 = pneg %p106
        %p1076 = pneg %p130
        %p1077 = pneg %p127
        %p1078 = pneg %p151
        %p1079 = pneg %p148
        %p1080 = pneg %p172
        %p1081 = pneg %p169
        %p1082 = pneg %p193
        %p1083 = pneg %p190
        %p1084 = pneg %p214
        %p1085 = pneg %p211
        %p1086 = pneg %p235
        %p1087 = pneg %p232
        %p1088 = pneg %p256
        %p1089 = pneg %p253
        %p1090 = pneg %p277
        %p1091 = pneg %p274
        %p1092 = pneg %p298
        %p1093 = pneg %p295
        %p1094 = pneg %p319
        %p1095 = pneg %p316
        %p1096 = pneg %p340
        %p1097 = pneg %p337
        %p1098 = pneg %p361
        %p1099 = pneg %p358
        %p1100 = pneg %p382
        %p1101 = pneg %p379
        %p1102 = pneg %p403
        %p1103 = pneg %p400
        %p1104 = pneg %p424
        %p1105 = pneg %p421
        %p1106 = pneg %p445
        %p1107 = pneg %p442
        %p1108 = pneg %p466
        %p1109 = pneg %p463
        %p1110 = pneg %p487
        %p1111 = pneg %p484
        %p1112 = pneg %p508
        %p1113 = pneg %p505
        %p1114 = pneg %p529
        %p1115 = pneg %p526
        %p1116 = pneg %p550
        %p1117 = pneg %p547
        %p1118 = pneg %p571
        %p1119 = pneg %p568
        %p1120 = pneg %p592
        %p1121 = pneg %p589
        %p1122 = pneg %p613
        %p1123 = pneg %p610
        %p1124 = pneg %p634
        %p1125 = pneg %p631
        %p1126 = pneg %p655
        %p1127 = pneg %p652
        %p1128 = pneg %p676
        %p1129 = pneg %p673
        %p1130 = pneg %p702
        %p1131 = pneg %p699
        %p1132 = scmp.lt.s32.totalorder %s88, 1
        %s1133 = scalar_select %p1132, %s88, 1
        %s1134 = smul.addr %s1133, 8
        %s1135 = scalar_lea.vmem %s59, %s1134
        %p1136 = pneg %p728
        %p1137 = pneg %p725
        %p1138 = scmp.lt.s32.totalorder %s88, 1
        %s1139 = scalar_select %p1138, %s88, 1
        %s1140 = smul.addr %s1139, 8
        %s1141 = scalar_lea.vmem %s61, %s1140
        %p1142 = scmp.lt.s32.totalorder %s88, 1
        %s1143 = scalar_select %p1142, %s88, 1
        %s1144 = smul.addr %s1143, 8
        %s1145 = scalar_lea.vmem %s3, %s1144
        %p1146 = scmp.lt.s32.totalorder %s88, 1
        %s1147 = scalar_select %p1146, %s88, 1
        %s1148 = smul.addr %s1147, 8
        %s1149 = scalar_lea.vmem %s59, %s1148
        %p1150 = scmp.lt.s32.totalorder %s88, 1
        %s1151 = scalar_select %p1150, %s88, 1
        %s1152 = smul.addr %s1151, 8
        %s1153 = scalar_lea.vmem %s61, %s1152
        %s1154 = sld [smem:[#allocation3 + %s88]]
        %v1155 = vlaneseq
        %v1156 = vshrl.u32 %v1155, 7
        %v1157 = vlaneseq
        %v1158 = vand.u32 %v1157, 127
        %vm1159 = vcmp.le.s32.totalorder %v1158, %v1156
        %v1160 = vstv %s1154
        %vm1161 = vcmp.lt.s32.totalorder %v1158, %v1160
        %vm1162 = vmand %vm1159, %vm1161
        %v1163 = vld [vmem:[%s1145] sm:$0xff]
        %v1164 = vld [vmem:[#allocation4] sm:$0xff]
        %v1165 = vld [vmem:[#allocation4 + $0x8] sm:$0xff]
        %v1166 = vld [vmem:[#allocation4 + $0x10] sm:$0x3f]
        %v1167 = vld [vmem:[#allocation6] sm:$0x1]
        %v1169 = vlaneseq
        %v1170 = vshrl.u32 %v1169, 7
        %v1171 = vsub.s32 0, %v1170
        %v1172 = vrot.slane %v1167, %v1171
        %vm1174 = vcmask 179200
        %v1176 = vsel %vm1174, %v1163, 0
        %vm1178 = vcmask 1045504
        %v1180 = vsel %vm1178, %v1166, 0
        %1182 = vmatprep.subr.mxu0 0.0
        %1183 = vmatpush1.msra.mxu0 %v1164
        %1184 = vmatprep.subr.mxu0 0.0
        %1185 = vmatpush1.msra.mxu0 %v1165
        %1186 = vmatprep.subr.mxu0 0.0
        %1187 = vmatpush1.msra.mxu0 %v1180
        %1188 = vmatprep.subr.mxu0 0.0
        %1189 = vmatpush1.msra.mxu0 0.0
        %1190 = vmatprep.subr.mxu0 0.0
        %1191 = vmatpush1.msra.mxu0 0.0
        %1192 = vmatprep.subr.mxu0 0.0
        %1193 = vmatpush1.msra.mxu0 0.0
        %1194 = vmatprep.subr.mxu0 0.0
        %1195 = vmatpush1.msra.mxu0 0.0
        %1196 = vmatprep.subr.mxu0 0.0
        %1197 = vmatpush1.msra.mxu0 0.0
        %1198 = vmatprep.subr.mxu0 0.0
        %1199 = vmatpush1.msra.mxu0 0.0
        %1200 = vmatprep.subr.mxu0 0.0
        %1201 = vmatpush1.msra.mxu0 0.0
        %1202 = vmatprep.subr.mxu0 0.0
        %1203 = vmatpush1.msra.mxu0 0.0
        %1204 = vmatprep.subr.mxu0 0.0
        %1205 = vmatpush1.msra.mxu0 0.0
        %1206 = vmatprep.subr.mxu0 0.0
        %1207 = vmatpush1.msra.mxu0 0.0
        %1208 = vmatprep.subr.mxu0 0.0
        %1209 = vmatpush1.msra.mxu0 0.0
        %1210 = vmatprep.subr.mxu0 0.0
        %1211 = vmatpush1.msra.mxu0 0.0
        %1212 = vmatprep.subr.mxu0 0.0
        %1213 = vmatpush1.msra.mxu0 0.0
        %1214 = vmatprep.subr.mxu0 0.0
        %1215 = vmatpush1.msra.mxu0 0.0
        %1216 = vmatprep.subr.mxu0 0.0
        %1217 = vmatpush1.msra.mxu0 0.0
        %1218 = vmatprep.subr.mxu0 0.0
        %1219 = vmatpush1.msra.mxu0 0.0
        %1220 = vmatprep.subr.mxu0 0.0
        %1221 = vmatpush1.msra.mxu0 0.0
        %1222 = vmatprep.subr.mxu0 0.0
        %1223 = vmatpush1.msra.mxu0 0.0
        %1224 = vmatprep.subr.mxu0 0.0
        %1225 = vmatpush1.msra.mxu0 0.0
        %1226 = vmatprep.subr.mxu0 0.0
        %1227 = vmatpush1.msra.mxu0 0.0
        %1228 = vmatprep.subr.mxu0 0.0
        %1229 = vmatpush1.msra.mxu0 0.0
        %1230 = vmatprep.subr.mxu0 0.0
        %1231 = vmatpush1.msra.mxu0 0.0
        %1232 = vmatprep.subr.mxu0 0.0
        %1233 = vmatpush1.msra.mxu0 0.0
        %1234 = vmatprep.subr.mxu0 0.0
        %1235 = vmatpush1.msra.mxu0 0.0
        %1236 = vmatprep.subr.mxu0 0.0
        %1237 = vmatpush1.msra.mxu0 0.0
        %1238 = vmatprep.subr.mxu0 0.0
        %1239 = vmatpush1.msra.mxu0 0.0
        %1240 = vmatprep.subr.mxu0 0.0
        %1241 = vmatpush1.msra.mxu0 0.0
        %1242 = vmatprep.subr.mxu0 0.0
        %1243 = vmatpush1.msra.mxu0 0.0
        %1244 = vmatprep.subr.mxu0 0.0
        %1245 = vmatpush1.msra.mxu0 0.0
        %1246 = vmatprep.mubr.f32.mxu0 0.0
        %1247 = vmatmul.mubr.f32.gmra.mrb[0].mxu0 %v1176
        %v1248 = vpop.f32.mrb[0].mxu0
        %v1249 = vadd.f32 %v1172, %v1248
        %v1250 = vpop.f32.mrb[0].mxu0
        %1251 = vdwg.mxu0
        %v1252 = vmax.f32 %v1249, 0.0
        %v1253 = vmul.f32 %v1252, 5.656854
        %v1254 = vld [vmem:[%s9] sm:$0xff]
        %v1255 = vadd.f32 %v1253, %v1254
        %v1256 = vld [vmem:[#allocation8] sm:$0x1]
        %v1257 = vld [vmem:[#allocation9] sm:$0x1]
        %vm1258 = vcmask 261120
        %v1259 = vsel %vm1258, %v1255, 0.0
        %1260 = vadd.xlane.f32.xlu0 %v1259
        %v1261 = vpop.xlane.xlu0 %1260
        %v1262 = vrcp.pop 32.0
        %v1263 = vmul.f32 %v1261, %v1262
        %v1264 = vsub.f32 %v1255, %v1263
        %v1265 = vmul.f32 %v1264, %v1264
        %v1266 = vsel %vm1258, %v1265, 0.0
        %1267 = vadd.xlane.f32.xlu0 %v1266
        %v1268 = vpop.xlane.xlu0 %1267
        %v1269 = vrcp.pop 31.0
        %v1270 = vmul.f32 %v1268, %v1269
        %v1272 = vlaneseq
        %v1273 = vshrl.u32 %v1272, 7
        %v1274 = vsub.s32 0, %v1273
        %v1275 = vrot.slane %v1256, %v1274
        %v1277 = vmul.f32 %v1275, %v1264
        %v1278 = vrsqrt.pop %v1270
        %v1279 = vmul.f32 %v1270, %v1278
        %vm1280 = vcmp.eq.f32.partialorder %v1270, inf
        %v1281 = vsel %vm1280, %v1270, %v1279
        %vm1282 = vcmp.eq.f32.partialorder %v1270, 0.0
        %v1283 = vand.u32 %v1270, 2147483648
        %v1284 = vsel %vm1282, %v1283, %v1281
        %v1285 = vadd.f32 %v1284, 1e-06
        %v1286 = vrcp.pop %v1285
        %v1287 = vmul.f32 %v1277, %v1286
        %v1289 = vlaneseq
        %v1290 = vshrl.u32 %v1289, 7
        %v1291 = vsub.s32 0, %v1290
        %v1292 = vrot.slane %v1257, %v1291
        %v1294 = vadd.f32 %v1287, %v1292
        %v1295 = vld [vmem:[%s15] sm:$0xff]
        %v1296 = vld [vmem:[%s15 + $0x8] sm:$0xff]
        %v1297 = vld [vmem:[%s15 + $0x10] sm:$0xff]
        %v1298 = vld [vmem:[%s15 + $0x18] sm:$0xff]
        %v1299 = vld [vmem:[#allocation11] sm:$0x1]
        %v1301 = vlaneseq
        %v1302 = vshrl.u32 %v1301, 7
        %v1303 = vsub.s32 0, %v1302
        %v1304 = vrot.slane %v1299, %v1303
        %v1307 = vsel %vm1258, %v1294, 0
        %1309 = vmatprep.subr.mxu0 0.0
        %1310 = vmatpush1.msra.mxu0 %v1295
        %1311 = vmatprep.subr.mxu0 0.0
        %1312 = vmatpush1.msra.mxu0 %v1296
        %1313 = vmatprep.subr.mxu0 0.0
        %1314 = vmatpush1.msra.mxu0 %v1297
        %1315 = vmatprep.subr.mxu0 0.0
        %1316 = vmatpush1.msra.mxu0 %v1298
        %1317 = vmatprep.subr.mxu0 0.0
        %1318 = vmatpush1.msra.mxu0 0.0
        %1319 = vmatprep.subr.mxu0 0.0
        %1320 = vmatpush1.msra.mxu0 0.0
        %1321 = vmatprep.subr.mxu0 0.0
        %1322 = vmatpush1.msra.mxu0 0.0
        %1323 = vmatprep.subr.mxu0 0.0
        %1324 = vmatpush1.msra.mxu0 0.0
        %1325 = vmatprep.subr.mxu0 0.0
        %1326 = vmatpush1.msra.mxu0 0.0
        %1327 = vmatprep.subr.mxu0 0.0
        %1328 = vmatpush1.msra.mxu0 0.0
        %1329 = vmatprep.subr.mxu0 0.0
        %1330 = vmatpush1.msra.mxu0 0.0
        %1331 = vmatprep.subr.mxu0 0.0
        %1332 = vmatpush1.msra.mxu0 0.0
        %1333 = vmatprep.subr.mxu0 0.0
        %1334 = vmatpush1.msra.mxu0 0.0
        %1335 = vmatprep.subr.mxu0 0.0
        %1336 = vmatpush1.msra.mxu0 0.0
        %1337 = vmatprep.subr.mxu0 0.0
        %1338 = vmatpush1.msra.mxu0 0.0
        %1339 = vmatprep.subr.mxu0 0.0
        %1340 = vmatpush1.msra.mxu0 0.0
        %1341 = vmatprep.subr.mxu0 0.0
        %1342 = vmatpush1.msra.mxu0 0.0
        %1343 = vmatprep.subr.mxu0 0.0
        %1344 = vmatpush1.msra.mxu0 0.0
        %1345 = vmatprep.subr.mxu0 0.0
        %1346 = vmatpush1.msra.mxu0 0.0
        %1347 = vmatprep.subr.mxu0 0.0
        %1348 = vmatpush1.msra.mxu0 0.0
        %1349 = vmatprep.subr.mxu0 0.0
        %1350 = vmatpush1.msra.mxu0 0.0
        %1351 = vmatprep.subr.mxu0 0.0
        %1352 = vmatpush1.msra.mxu0 0.0
        %1353 = vmatprep.subr.mxu0 0.0
        %1354 = vmatpush1.msra.mxu0 0.0
        %1355 = vmatprep.subr.mxu0 0.0
        %1356 = vmatpush1.msra.mxu0 0.0
        %1357 = vmatprep.subr.mxu0 0.0
        %1358 = vmatpush1.msra.mxu0 0.0
        %1359 = vmatprep.subr.mxu0 0.0
        %1360 = vmatpush1.msra.mxu0 0.0
        %1361 = vmatprep.subr.mxu0 0.0
        %1362 = vmatpush1.msra.mxu0 0.0
        %1363 = vmatprep.subr.mxu0 0.0
        %1364 = vmatpush1.msra.mxu0 0.0
        %1365 = vmatprep.subr.mxu0 0.0
        %1366 = vmatpush1.msra.mxu0 0.0
        %1367 = vmatprep.subr.mxu0 0.0
        %1368 = vmatpush1.msra.mxu0 0.0
        %1369 = vmatprep.subr.mxu0 0.0
        %1370 = vmatpush1.msra.mxu0 0.0
        %1371 = vmatprep.subr.mxu0 0.0
        %1372 = vmatpush1.msra.mxu0 0.0
        %1373 = vmatprep.mubr.f32.mxu0 0.0
        %1374 = vmatmul.mubr.f32.gmra.mrb[0].mxu0 %v1307
        %v1375 = vpop.f32.mrb[0].mxu0
        %v1376 = vadd.f32 %v1304, %v1375
        %v1377 = vpop.f32.mrb[0].mxu0
        %1378 = vdwg.mxu0
        %v1379 = vld [vmem:[%s19] sm:$0xff]
        %v1380 = vld [vmem:[%s19 + $0x8] sm:$0xff]
        %v1381 = vld [vmem:[%s19 + $0x10] sm:$0xff]
        %v1382 = vld [vmem:[%s19 + $0x18] sm:$0xff]
        %v1383 = vld [vmem:[#allocation12] sm:$0x1]
        %v1385 = vlaneseq
        %v1386 = vshrl.u32 %v1385, 7
        %v1387 = vsub.s32 0, %v1386
        %v1388 = vrot.slane %v1383, %v1387
        %1390 = vmatprep.subr.mxu0 0.0
        %1391 = vmatpush1.msra.mxu0 %v1379
        %1392 = vmatprep.subr.mxu0 0.0
        %1393 = vmatpush1.msra.mxu0 %v1380
        %1394 = vmatprep.subr.mxu0 0.0
        %1395 = vmatpush1.msra.mxu0 %v1381
        %1396 = vmatprep.subr.mxu0 0.0
        %1397 = vmatpush1.msra.mxu0 %v1382
        %1398 = vmatprep.subr.mxu0 0.0
        %1399 = vmatpush1.msra.mxu0 0.0
        %1400 = vmatprep.subr.mxu0 0.0
        %1401 = vmatpush1.msra.mxu0 0.0
        %1402 = vmatprep.subr.mxu0 0.0
        %1403 = vmatpush1.msra.mxu0 0.0
        %1404 = vmatprep.subr.mxu0 0.0
        %1405 = vmatpush1.msra.mxu0 0.0
        %1406 = vmatprep.subr.mxu0 0.0
        %1407 = vmatpush1.msra.mxu0 0.0
        %1408 = vmatprep.subr.mxu0 0.0
        %1409 = vmatpush1.msra.mxu0 0.0
        %1410 = vmatprep.subr.mxu0 0.0
        %1411 = vmatpush1.msra.mxu0 0.0
        %1412 = vmatprep.subr.mxu0 0.0
        %1413 = vmatpush1.msra.mxu0 0.0
        %1414 = vmatprep.subr.mxu0 0.0
        %1415 = vmatpush1.msra.mxu0 0.0
        %1416 = vmatprep.subr.mxu0 0.0
        %1417 = vmatpush1.msra.mxu0 0.0
        %1418 = vmatprep.subr.mxu0 0.0
        %1419 = vmatpush1.msra.mxu0 0.0
        %1420 = vmatprep.subr.mxu0 0.0
        %1421 = vmatpush1.msra.mxu0 0.0
        %1422 = vmatprep.subr.mxu0 0.0
        %1423 = vmatpush1.msra.mxu0 0.0
        %1424 = vmatprep.subr.mxu0 0.0
        %1425 = vmatpush1.msra.mxu0 0.0
        %1426 = vmatprep.subr.mxu0 0.0
        %1427 = vmatpush1.msra.mxu0 0.0
        %1428 = vmatprep.subr.mxu0 0.0
        %1429 = vmatpush1.msra.mxu0 0.0
        %1430 = vmatprep.subr.mxu0 0.0
        %1431 = vmatpush1.msra.mxu0 0.0
        %1432 = vmatprep.subr.mxu0 0.0
        %1433 = vmatpush1.msra.mxu0 0.0
        %1434 = vmatprep.subr.mxu0 0.0
        %1435 = vmatpush1.msra.mxu0 0.0
        %1436 = vmatprep.subr.mxu0 0.0
        %1437 = vmatpush1.msra.mxu0 0.0
        %1438 = vmatprep.subr.mxu0 0.0
        %1439 = vmatpush1.msra.mxu0 0.0
        %1440 = vmatprep.subr.mxu0 0.0
        %1441 = vmatpush1.msra.mxu0 0.0
        %1442 = vmatprep.subr.mxu0 0.0
        %1443 = vmatpush1.msra.mxu0 0.0
        %1444 = vmatprep.subr.mxu0 0.0
        %1445 = vmatpush1.msra.mxu0 0.0
        %1446 = vmatprep.subr.mxu0 0.0
        %1447 = vmatpush1.msra.mxu0 0.0
        %1448 = vmatprep.subr.mxu0 0.0
        %1449 = vmatpush1.msra.mxu0 0.0
        %1450 = vmatprep.subr.mxu0 0.0
        %1451 = vmatpush1.msra.mxu0 0.0
        %1452 = vmatprep.subr.mxu0 0.0
        %1453 = vmatpush1.msra.mxu0 0.0
        %1454 = vmatprep.mubr.f32.mxu0 0.0
        %1455 = vmatmul.mubr.f32.gmra.mrb[0].mxu0 %v1307
        %v1456 = vpop.f32.mrb[0].mxu0
        %v1457 = vadd.f32 %v1388, %v1456
        %v1458 = vpop.f32.mrb[0].mxu0
        %1459 = vdwg.mxu0
        %v1460 = vld [vmem:[%s23] sm:$0xff]
        %v1461 = vld [vmem:[%s23 + $0x8] sm:$0xff]
        %v1462 = vld [vmem:[%s23 + $0x10] sm:$0xff]
        %v1463 = vld [vmem:[%s23 + $0x18] sm:$0xff]
        %v1464 = vld [vmem:[#allocation14] sm:$0x1]
        %v1466 = vlaneseq
        %v1467 = vshrl.u32 %v1466, 7
        %v1468 = vsub.s32 0, %v1467
        %v1469 = vrot.slane %v1464, %v1468
        %1471 = vmatprep.subr.mxu0 0.0
        %1472 = vmatpush1.msra.mxu0 %v1460
        %1473 = vmatprep.subr.mxu0 0.0
        %1474 = vmatpush1.msra.mxu0 %v1461
        %1475 = vmatprep.subr.mxu0 0.0
        %1476 = vmatpush1.msra.mxu0 %v1462
        %1477 = vmatprep.subr.mxu0 0.0
        %1478 = vmatpush1.msra.mxu0 %v1463
        %1479 = vmatprep.subr.mxu0 0.0
        %1480 = vmatpush1.msra.mxu0 0.0
        %1481 = vmatprep.subr.mxu0 0.0
        %1482 = vmatpush1.msra.mxu0 0.0
        %1483 = vmatprep.subr.mxu0 0.0
        %1484 = vmatpush1.msra.mxu0 0.0
        %1485 = vmatprep.subr.mxu0 0.0
        %1486 = vmatpush1.msra.mxu0 0.0
        %1487 = vmatprep.subr.mxu0 0.0
        %1488 = vmatpush1.msra.mxu0 0.0
        %1489 = vmatprep.subr.mxu0 0.0
        %1490 = vmatpush1.msra.mxu0 0.0
        %1491 = vmatprep.subr.mxu0 0.0
        %1492 = vmatpush1.msra.mxu0 0.0
        %1493 = vmatprep.subr.mxu0 0.0
        %1494 = vmatpush1.msra.mxu0 0.0
        %1495 = vmatprep.subr.mxu0 0.0
        %1496 = vmatpush1.msra.mxu0 0.0
        %1497 = vmatprep.subr.mxu0 0.0
        %1498 = vmatpush1.msra.mxu0 0.0
        %1499 = vmatprep.subr.mxu0 0.0
        %1500 = vmatpush1.msra.mxu0 0.0
        %1501 = vmatprep.subr.mxu0 0.0
        %1502 = vmatpush1.msra.mxu0 0.0
        %1503 = vmatprep.subr.mxu0 0.0
        %1504 = vmatpush1.msra.mxu0 0.0
        %1505 = vmatprep.subr.mxu0 0.0
        %1506 = vmatpush1.msra.mxu0 0.0
        %1507 = vmatprep.subr.mxu0 0.0
        %1508 = vmatpush1.msra.mxu0 0.0
        %1509 = vmatprep.subr.mxu0 0.0
        %1510 = vmatpush1.msra.mxu0 0.0
        %1511 = vmatprep.subr.mxu0 0.0
        %1512 = vmatpush1.msra.mxu0 0.0
        %1513 = vmatprep.subr.mxu0 0.0
        %1514 = vmatpush1.msra.mxu0 0.0
        %1515 = vmatprep.subr.mxu0 0.0
        %1516 = vmatpush1.msra.mxu0 0.0
        %1517 = vmatprep.subr.mxu0 0.0
        %1518 = vmatpush1.msra.mxu0 0.0
        %1519 = vmatprep.subr.mxu0 0.0
        %1520 = vmatpush1.msra.mxu0 0.0
        %1521 = vmatprep.subr.mxu0 0.0
        %1522 = vmatpush1.msra.mxu0 0.0
        %1523 = vmatprep.subr.mxu0 0.0
        %1524 = vmatpush1.msra.mxu0 0.0
        %1525 = vmatprep.subr.mxu0 0.0
        %1526 = vmatpush1.msra.mxu0 0.0
        %1527 = vmatprep.subr.mxu0 0.0
        %1528 = vmatpush1.msra.mxu0 0.0
        %1529 = vmatprep.subr.mxu0 0.0
        %1530 = vmatpush1.msra.mxu0 0.0
        %1531 = vmatprep.subr.mxu0 0.0
        %1532 = vmatpush1.msra.mxu0 0.0
        %1533 = vmatprep.subr.mxu0 0.0
        %1534 = vmatpush1.msra.mxu0 0.0
        %1535 = vmatprep.mubr.f32.mxu0 0.0
        %1536 = vmatmul.mubr.f32.gmra.mrb[0].mxu0 %v1307
        %v1537 = vpop.f32.mrb[0].mxu0
        %v1538 = vadd.f32 %v1469, %v1537
        %v1539 = vpop.f32.mrb[0].mxu0
        %1540 = vdwg.mxu0
        %vm1541 = vcmask 130048
        %v1543 = vsel %vm1541, %v1376, 0
        %v1546 = vsel %vm1541, %v1457, 0
        %1548 = vmatprep.subr.mxu0 0.0
        %1549 = vmatpush1.xpose.msra.mxu0 %v1546
        %1550 = vmatprep.subr.mxu0 0.0
        %1551 = vmatpush1.xpose.msra.mxu0 0.0
        %1552 = vmatprep.subr.mxu0 0.0
        %1553 = vmatpush1.xpose.msra.mxu0 0.0
        %1554 = vmatprep.subr.mxu0 0.0
        %1555 = vmatpush1.xpose.msra.mxu0 0.0
        %1556 = vmatprep.subr.mxu0 0.0
        %1557 = vmatpush1.xpose.msra.mxu0 0.0
        %1558 = vmatprep.subr.mxu0 0.0
        %1559 = vmatpush1.xpose.msra.mxu0 0.0
        %1560 = vmatprep.subr.mxu0 0.0
        %1561 = vmatpush1.xpose.msra.mxu0 0.0
        %1562 = vmatprep.subr.mxu0 0.0
        %1563 = vmatpush1.xpose.msra.mxu0 0.0
        %1564 = vmatprep.subr.mxu0 0.0
        %1565 = vmatpush1.xpose.msra.mxu0 0.0
        %1566 = vmatprep.subr.mxu0 0.0
        %1567 = vmatpush1.xpose.msra.mxu0 0.0
        %1568 = vmatprep.subr.mxu0 0.0
        %1569 = vmatpush1.xpose.msra.mxu0 0.0
        %1570 = vmatprep.subr.mxu0 0.0
        %1571 = vmatpush1.xpose.msra.mxu0 0.0
        %1572 = vmatprep.subr.mxu0 0.0
        %1573 = vmatpush1.xpose.msra.mxu0 0.0
        %1574 = vmatprep.subr.mxu0 0.0
        %1575 = vmatpush1.xpose.msra.mxu0 0.0
        %1576 = vmatprep.subr.mxu0 0.0
        %1577 = vmatpush1.xpose.msra.mxu0 0.0
        %1578 = vmatprep.subr.mxu0 0.0
        %1579 = vmatpush1.xpose.msra.mxu0 0.0
        %1580 = vmatprep.subr.mxu0 0.0
        %1581 = vmatpush1.xpose.msra.mxu0 0.0
        %1582 = vmatprep.subr.mxu0 0.0
        %1583 = vmatpush1.xpose.msra.mxu0 0.0
        %1584 = vmatprep.subr.mxu0 0.0
        %1585 = vmatpush1.xpose.msra.mxu0 0.0
        %1586 = vmatprep.subr.mxu0 0.0
        %1587 = vmatpush1.xpose.msra.mxu0 0.0
        %1588 = vmatprep.subr.mxu0 0.0
        %1589 = vmatpush1.xpose.msra.mxu0 0.0
        %1590 = vmatprep.subr.mxu0 0.0
        %1591 = vmatpush1.xpose.msra.mxu0 0.0
        %1592 = vmatprep.subr.mxu0 0.0
        %1593 = vmatpush1.xpose.msra.mxu0 0.0
        %1594 = vmatprep.subr.mxu0 0.0
        %1595 = vmatpush1.xpose.msra.mxu0 0.0
        %1596 = vmatprep.subr.mxu0 0.0
        %1597 = vmatpush1.xpose.msra.mxu0 0.0
        %1598 = vmatprep.subr.mxu0 0.0
        %1599 = vmatpush1.xpose.msra.mxu0 0.0
        %1600 = vmatprep.subr.mxu0 0.0
        %1601 = vmatpush1.xpose.msra.mxu0 0.0
        %1602 = vmatprep.subr.mxu0 0.0
        %1603 = vmatpush1.xpose.msra.mxu0 0.0
        %1604 = vmatprep.subr.mxu0 0.0
        %1605 = vmatpush1.xpose.msra.mxu0 0.0
        %1606 = vmatprep.subr.mxu0 0.0
        %1607 = vmatpush1.xpose.msra.mxu0 0.0
        %1608 = vmatprep.subr.mxu0 0.0
        %1609 = vmatpush1.xpose.msra.mxu0 0.0
        %1610 = vmatprep.subr.mxu0 0.0
        %1611 = vmatpush1.xpose.msra.mxu0 0.0
        %1612 = vmatprep.mubr.f32.mxu0 0.0
        %1613 = vmatmul.mubr.f32.gmra.mrb[0].mxu0 %v1543
        %v1614 = vpop.f32.mrb[0].mxu0
        %v1615 = vadd.f32 0.0, %v1614
        %v1616 = vpop.f32.mrb[0].mxu0
        %1617 = vdwg.mxu0
        %v1618 = vmul.f32 %v1615, 0.25
        %v1619 = vsel %vm1162, %v1618, -1e+09
        %vm1620 = vcmask 64512
        %v1621 = vsel %vm1620, %v1619, -inf
        %1622 = vmax.xlane.f32.xlu0 %v1621
        %v1623 = vpop.xlane.xlu0 %1622
        %v1624 = vsub.f32 %v1619, %v1623
        %v1625 = vmul.f32 %v1624, 1.442695
        %v1626 = vpow.pop %v1625
        %v1627 = vsel %vm1620, %v1626, 0.0
        %1628 = vadd.xlane.f32.xlu0 %v1627
        %v1629 = vpop.xlane.xlu0 %1628
        %v1630 = vrcp.pop %v1629
        %v1631 = vmul.f32 %v1626, %v1630
        %v1633 = vsel %vm1620, %v1631, 0
        %1635 = vmatprep.subr.mxu0 0.0
        %1636 = vmatpush1.msra.mxu0 %v1538
        %1637 = vmatprep.subr.mxu0 0.0
        %1638 = vmatpush1.msra.mxu0 0.0
        %1639 = vmatprep.subr.mxu0 0.0
        %1640 = vmatpush1.msra.mxu0 0.0
        %1641 = vmatprep.subr.mxu0 0.0
        %1642 = vmatpush1.msra.mxu0 0.0
        %1643 = vmatprep.subr.mxu0 0.0
        %1644 = vmatpush1.msra.mxu0 0.0
        %1645 = vmatprep.subr.mxu0 0.0
        %1646 = vmatpush1.msra.mxu0 0.0
        %1647 = vmatprep.subr.mxu0 0.0
        %1648 = vmatpush1.msra.mxu0 0.0
        %1649 = vmatprep.subr.mxu0 0.0
        %1650 = vmatpush1.msra.mxu0 0.0
        %1651 = vmatprep.subr.mxu0 0.0
        %1652 = vmatpush1.msra.mxu0 0.0
        %1653 = vmatprep.subr.mxu0 0.0
        %1654 = vmatpush1.msra.mxu0 0.0
        %1655 = vmatprep.subr.mxu0 0.0
        %1656 = vmatpush1.msra.mxu0 0.0
        %1657 = vmatprep.subr.mxu0 0.0
        %1658 = vmatpush1.msra.mxu0 0.0
        %1659 = vmatprep.subr.mxu0 0.0
        %1660 = vmatpush1.msra.mxu0 0.0
        %1661 = vmatprep.subr.mxu0 0.0
        %1662 = vmatpush1.msra.mxu0 0.0
        %1663 = vmatprep.subr.mxu0 0.0
        %1664 = vmatpush1.msra.mxu0 0.0
        %1665 = vmatprep.subr.mxu0 0.0
        %1666 = vmatpush1.msra.mxu0 0.0
        %1667 = vmatprep.subr.mxu0 0.0
        %1668 = vmatpush1.msra.mxu0 0.0
        %1669 = vmatprep.subr.mxu0 0.0
        %1670 = vmatpush1.msra.mxu0 0.0
        %1671 = vmatprep.subr.mxu0 0.0
        %1672 = vmatpush1.msra.mxu0 0.0
        %1673 = vmatprep.subr.mxu0 0.0
        %1674 = vmatpush1.msra.mxu0 0.0
        %1675 = vmatprep.subr.mxu0 0.0
        %1676 = vmatpush1.msra.mxu0 0.0
        %1677 = vmatprep.subr.mxu0 0.0
        %1678 = vmatpush1.msra.mxu0 0.0
        %1679 = vmatprep.subr.mxu0 0.0
        %1680 = vmatpush1.msra.mxu0 0.0
        %1681 = vmatprep.subr.mxu0 0.0
        %1682 = vmatpush1.msra.mxu0 0.0
        %1683 = vmatprep.subr.mxu0 0.0
        %1684 = vmatpush1.msra.mxu0 0.0
        %1685 = vmatprep.subr.mxu0 0.0
        %1686 = vmatpush1.msra.mxu0 0.0
        %1687 = vmatprep.subr.mxu0 0.0
        %1688 = vmatpush1.msra.mxu0 0.0
        %1689 = vmatprep.subr.mxu0 0.0
        %1690 = vmatpush1.msra.mxu0 0.0
        %1691 = vmatprep.subr.mxu0 0.0
        %1692 = vmatpush1.msra.mxu0 0.0
        %1693 = vmatprep.subr.mxu0 0.0
        %1694 = vmatpush1.msra.mxu0 0.0
        %1695 = vmatprep.subr.mxu0 0.0
        %1696 = vmatpush1.msra.mxu0 0.0
        %1697 = vmatprep.subr.mxu0 0.0
        %1698 = vmatpush1.msra.mxu0 0.0
        %1699 = vmatprep.mubr.f32.mxu0 0.0
        %1700 = vmatmul.mubr.f32.gmra.mrb[0].mxu0 %v1633
        %v1701 = vpop.f32.mrb[0].mxu0
        %v1702 = vadd.f32 0.0, %v1701
        %v1703 = vpop.f32.mrb[0].mxu0
        %1704 = vdwg.mxu0
        %1705 = vrot.lane.b32.xlu0 %v1376, 112
        %v1706 = vpop.permute.xlu0 %1705
        %1707 = vrot.lane.b32.xlu0 %v1457, 112
        %v1708 = vpop.permute.xlu0 %1707
        %v1709 = vsel %vm1541, %v1706, 0
        %v1711 = vsel %vm1541, %v1708, 0
        %1713 = vmatprep.subr.mxu0 0.0
        %1714 = vmatpush1.xpose.msra.mxu0 %v1711
        %1715 = vmatprep.subr.mxu0 0.0
        %1716 = vmatpush1.xpose.msra.mxu0 0.0
        %1717 = vmatprep.subr.mxu0 0.0
        %1718 = vmatpush1.xpose.msra.mxu0 0.0
        %1719 = vmatprep.subr.mxu0 0.0
        %1720 = vmatpush1.xpose.msra.mxu0 0.0
        %1721 = vmatprep.subr.mxu0 0.0
        %1722 = vmatpush1.xpose.msra.mxu0 0.0
        %1723 = vmatprep.subr.mxu0 0.0
        %1724 = vmatpush1.xpose.msra.mxu0 0.0
        %1725 = vmatprep.subr.mxu0 0.0
        %1726 = vmatpush1.xpose.msra.mxu0 0.0
        %1727 = vmatprep.subr.mxu0 0.0
        %1728 = vmatpush1.xpose.msra.mxu0 0.0
        %1729 = vmatprep.subr.mxu0 0.0
        %1730 = vmatpush1.xpose.msra.mxu0 0.0
        %1731 = vmatprep.subr.mxu0 0.0
        %1732 = vmatpush1.xpose.msra.mxu0 0.0
        %1733 = vmatprep.subr.mxu0 0.0
        %1734 = vmatpush1.xpose.msra.mxu0 0.0
        %1735 = vmatprep.subr.mxu0 0.0
        %1736 = vmatpush1.xpose.msra.mxu0 0.0
        %1737 = vmatprep.subr.mxu0 0.0
        %1738 = vmatpush1.xpose.msra.mxu0 0.0
        %1739 = vmatprep.subr.mxu0 0.0
        %1740 = vmatpush1.xpose.msra.mxu0 0.0
        %1741 = vmatprep.subr.mxu0 0.0
        %1742 = vmatpush1.xpose.msra.mxu0 0.0
        %1743 = vmatprep.subr.mxu0 0.0
        %1744 = vmatpush1.xpose.msra.mxu0 0.0
        %1745 = vmatprep.subr.mxu0 0.0
        %1746 = vmatpush1.xpose.msra.mxu0 0.0
        %1747 = vmatprep.subr.mxu0 0.0
        %1748 = vmatpush1.xpose.msra.mxu0 0.0
        %1749 = vmatprep.subr.mxu0 0.0
        %1750 = vmatpush1.xpose.msra.mxu0 0.0
        %1751 = vmatprep.subr.mxu0 0.0
        %1752 = vmatpush1.xpose.msra.mxu0 0.0
        %1753 = vmatprep.subr.mxu0 0.0
        %1754 = vmatpush1.xpose.msra.mxu0 0.0
        %1755 = vmatprep.subr.mxu0 0.0
        %1756 = vmatpush1.xpose.msra.mxu0 0.0
        %1757 = vmatprep.subr.mxu0 0.0
        %1758 = vmatpush1.xpose.msra.mxu0 0.0
        %1759 = vmatprep.subr.mxu0 0.0
        %1760 = vmatpush1.xpose.msra.mxu0 0.0
        %1761 = vmatprep.subr.mxu0 0.0
        %1762 = vmatpush1.xpose.msra.mxu0 0.0
        %1763 = vmatprep.subr.mxu0 0.0
        %1764 = vmatpush1.xpose.msra.mxu0 0.0
        %1765 = vmatprep.subr.mxu0 0.0
        %1766 = vmatpush1.xpose.msra.mxu0 0.0
        %1767 = vmatprep.subr.mxu0 0.0
        %1768 = vmatpush1.xpose.msra.mxu0 0.0
        %1769 = vmatprep.subr.mxu0 0.0
        %1770 = vmatpush1.xpose.msra.mxu0 0.0
        %1771 = vmatprep.subr.mxu0 0.0
        %1772 = vmatpush1.xpose.msra.mxu0 0.0
        %1773 = vmatprep.subr.mxu0 0.0
        %1774 = vmatpush1.xpose.msra.mxu0 0.0
        %1775 = vmatprep.subr.mxu0 0.0
        %1776 = vmatpush1.xpose.msra.mxu0 0.0
        %1777 = vmatprep.mubr.f32.mxu0 0.0
        %1778 = vmatmul.mubr.f32.gmra.mrb[0].mxu0 %v1709
        %v1779 = vpop.f32.mrb[0].mxu0
        %v1780 = vadd.f32 0.0, %v1779
        %v1781 = vpop.f32.mrb[0].mxu0
        %1782 = vdwg.mxu0
        %v1783 = vmul.f32 %v1780, 0.25
        %v1784 = vsel %vm1162, %v1783, -1e+09
        %v1785 = vsel %vm1620, %v1784, -inf
        %1786 = vmax.xlane.f32.xlu0 %v1785
        %v1787 = vpop.xlane.xlu0 %1786
        %v1788 = vsub.f32 %v1784, %v1787
        %v1789 = vmul.f32 %v1788, 1.442695
        %v1790 = vpow.pop %v1789
        %v1791 = vsel %vm1620, %v1790, 0.0
        %1792 = vadd.xlane.f32.xlu0 %v1791
        %v1793 = vpop.xlane.xlu0 %1792
        %v1794 = vrcp.pop %v1793
        %v1795 = vmul.f32 %v1790, %v1794
        %1797 = vrot.lane.b32.xlu0 %v1538, 112
        %v1798 = vpop.permute.xlu0 %1797
        %v1801 = vsel %vm1620, %v1795, 0
        %1803 = vmatprep.subr.mxu0 0.0
        %1804 = vmatpush1.msra.mxu0 %v1798
        %1805 = vmatprep.subr.mxu0 0.0
        %1806 = vmatpush1.msra.mxu0 0.0
        %1807 = vmatprep.subr.mxu0 0.0
        %1808 = vmatpush1.msra.mxu0 0.0
        %1809 = vmatprep.subr.mxu0 0.0
        %1810 = vmatpush1.msra.mxu0 0.0
        %1811 = vmatprep.subr.mxu0 0.0
        %1812 = vmatpush1.msra.mxu0 0.0
        %1813 = vmatprep.subr.mxu0 0.0
        %1814 = vmatpush1.msra.mxu0 0.0
        %1815 = vmatprep.subr.mxu0 0.0
        %1816 = vmatpush1.msra.mxu0 0.0
        %1817 = vmatprep.subr.mxu0 0.0
        %1818 = vmatpush1.msra.mxu0 0.0
        %1819 = vmatprep.subr.mxu0 0.0
        %1820 = vmatpush1.msra.mxu0 0.0
        %1821 = vmatprep.subr.mxu0 0.0
        %1822 = vmatpush1.msra.mxu0 0.0
        %1823 = vmatprep.subr.mxu0 0.0
        %1824 = vmatpush1.msra.mxu0 0.0
        %1825 = vmatprep.subr.mxu0 0.0
        %1826 = vmatpush1.msra.mxu0 0.0
        %1827 = vmatprep.subr.mxu0 0.0
        %1828 = vmatpush1.msra.mxu0 0.0
        %1829 = vmatprep.subr.mxu0 0.0
        %1830 = vmatpush1.msra.mxu0 0.0
        %1831 = vmatprep.subr.mxu0 0.0
        %1832 = vmatpush1.msra.mxu0 0.0
        %1833 = vmatprep.subr.mxu0 0.0
        %1834 = vmatpush1.msra.mxu0 0.0
        %1835 = vmatprep.subr.mxu0 0.0
        %1836 = vmatpush1.msra.mxu0 0.0
        %1837 = vmatprep.subr.mxu0 0.0
        %1838 = vmatpush1.msra.mxu0 0.0
        %1839 = vmatprep.subr.mxu0 0.0
        %1840 = vmatpush1.msra.mxu0 0.0
        %1841 = vmatprep.subr.mxu0 0.0
        %1842 = vmatpush1.msra.mxu0 0.0
        %1843 = vmatprep.subr.mxu0 0.0
        %1844 = vmatpush1.msra.mxu0 0.0
        %1845 = vmatprep.subr.mxu0 0.0
        %1846 = vmatpush1.msra.mxu0 0.0
        %1847 = vmatprep.subr.mxu0 0.0
        %1848 = vmatpush1.msra.mxu0 0.0
        %1849 = vmatprep.subr.mxu0 0.0
        %1850 = vmatpush1.msra.mxu0 0.0
        %1851 = vmatprep.subr.mxu0 0.0
        %1852 = vmatpush1.msra.mxu0 0.0
        %1853 = vmatprep.subr.mxu0 0.0
        %1854 = vmatpush1.msra.mxu0 0.0
        %1855 = vmatprep.subr.mxu0 0.0
        %1856 = vmatpush1.msra.mxu0 0.0
        %1857 = vmatprep.subr.mxu0 0.0
        %1858 = vmatpush1.msra.mxu0 0.0
        %1859 = vmatprep.subr.mxu0 0.0
        %1860 = vmatpush1.msra.mxu0 0.0
        %1861 = vmatprep.subr.mxu0 0.0
        %1862 = vmatpush1.msra.mxu0 0.0
        %1863 = vmatprep.subr.mxu0 0.0
        %1864 = vmatpush1.msra.mxu0 0.0
        %1865 = vmatprep.subr.mxu0 0.0
        %1866 = vmatpush1.msra.mxu0 0.0
        %1867 = vmatprep.mubr.f32.mxu0 0.0
        %1868 = vmatmul.mubr.f32.gmra.mrb[0].mxu0 %v1801
        %v1869 = vpop.f32.mrb[0].mxu0
        %v1870 = vadd.f32 0.0, %v1869
        %v1871 = vpop.f32.mrb[0].mxu0
        %1872 = vdwg.mxu0
        %1874 = vrot.lane.b32.xlu0 %v1870, 16
        %v1875 = vpop.permute.xlu0 %1874
        %v1877 = vsel %vm1541, %v1702, %v1875
        %v1878 = vld [vmem:[%s27] sm:$0xff]
        %v1879 = vld [vmem:[%s27 + $0x8] sm:$0xff]
        %v1880 = vld [vmem:[%s27 + $0x10] sm:$0xff]
        %v1881 = vld [vmem:[%s27 + $0x18] sm:$0xff]
        %v1882 = vld [vmem:[#allocation15] sm:$0x1]
        %v1884 = vlaneseq
        %v1885 = vshrl.u32 %v1884, 7
        %v1886 = vsub.s32 0, %v1885
        %v1887 = vrot.slane %v1882, %v1886
        %v1890 = vsel %vm1258, %v1877, 0
        %1892 = vmatprep.subr.mxu0 0.0
        %1893 = vmatpush1.msra.mxu0 %v1878
        %1894 = vmatprep.subr.mxu0 0.0
        %1895 = vmatpush1.msra.mxu0 %v1879
        %1896 = vmatprep.subr.mxu0 0.0
        %1897 = vmatpush1.msra.mxu0 %v1880
        %1898 = vmatprep.subr.mxu0 0.0
        %1899 = vmatpush1.msra.mxu0 %v1881
        %1900 = vmatprep.subr.mxu0 0.0
        %1901 = vmatpush1.msra.mxu0 0.0
        %1902 = vmatprep.subr.mxu0 0.0
        %1903 = vmatpush1.msra.mxu0 0.0
        %1904 = vmatprep.subr.mxu0 0.0
        %1905 = vmatpush1.msra.mxu0 0.0
        %1906 = vmatprep.subr.mxu0 0.0
        %1907 = vmatpush1.msra.mxu0 0.0
        %1908 = vmatprep.subr.mxu0 0.0
        %1909 = vmatpush1.msra.mxu0 0.0
        %1910 = vmatprep.subr.mxu0 0.0
        %1911 = vmatpush1.msra.mxu0 0.0
        %1912 = vmatprep.subr.mxu0 0.0
        %1913 = vmatpush1.msra.mxu0 0.0
        %1914 = vmatprep.subr.mxu0 0.0
        %1915 = vmatpush1.msra.mxu0 0.0
        %1916 = vmatprep.subr.mxu0 0.0
        %1917 = vmatpush1.msra.mxu0 0.0
        %1918 = vmatprep.subr.mxu0 0.0
        %1919 = vmatpush1.msra.mxu0 0.0
        %1920 = vmatprep.subr.mxu0 0.0
        %1921 = vmatpush1.msra.mxu0 0.0
        %1922 = vmatprep.subr.mxu0 0.0
        %1923 = vmatpush1.msra.mxu0 0.0
        %1924 = vmatprep.subr.mxu0 0.0
        %1925 = vmatpush1.msra.mxu0 0.0
        %1926 = vmatprep.subr.mxu0 0.0
        %1927 = vmatpush1.msra.mxu0 0.0
        %1928 = vmatprep.subr.mxu0 0.0
        %1929 = vmatpush1.msra.mxu0 0.0
        %1930 = vmatprep.subr.mxu0 0.0
        %1931 = vmatpush1.msra.mxu0 0.0
        %1932 = vmatprep.subr.mxu0 0.0
        %1933 = vmatpush1.msra.mxu0 0.0
        %1934 = vmatprep.subr.mxu0 0.0
        %1935 = vmatpush1.msra.mxu0 0.0
        %1936 = vmatprep.subr.mxu0 0.0
        %1937 = vmatpush1.msra.mxu0 0.0
        %1938 = vmatprep.subr.mxu0 0.0
        %1939 = vmatpush1.msra.mxu0 0.0
        %1940 = vmatprep.subr.mxu0 0.0
        %1941 = vmatpush1.msra.mxu0 0.0
        %1942 = vmatprep.subr.mxu0 0.0
        %1943 = vmatpush1.msra.mxu0 0.0
        %1944 = vmatprep.subr.mxu0 0.0
        %1945 = vmatpush1.msra.mxu0 0.0
        %1946 = vmatprep.subr.mxu0 0.0
        %1947 = vmatpush1.msra.mxu0 0.0
        %1948 = vmatprep.subr.mxu0 0.0
        %1949 = vmatpush1.msra.mxu0 0.0
        %1950 = vmatprep.subr.mxu0 0.0
        %1951 = vmatpush1.msra.mxu0 0.0
        %1952 = vmatprep.subr.mxu0 0.0
        %1953 = vmatpush1.msra.mxu0 0.0
        %1954 = vmatprep.subr.mxu0 0.0
        %1955 = vmatpush1.msra.mxu0 0.0
        %1956 = vmatprep.mubr.f32.mxu0 0.0
        %1957 = vmatmul.mubr.f32.gmra.mrb[0].mxu0 %v1890
        %v1958 = vpop.f32.mrb[0].mxu0
        %v1959 = vadd.f32 %v1887, %v1958
        %v1960 = vpop.f32.mrb[0].mxu0
        %1961 = vdwg.mxu0
        %v1962 = vadd.f32 %v1255, %v1959
        %v1963 = vld [vmem:[#allocation17] sm:$0x1]
        %v1964 = vld [vmem:[#allocation18] sm:$0x1]
        %v1965 = vsel %vm1258, %v1962, 0.0
        %1966 = vadd.xlane.f32.xlu0 %v1965
        %v1967 = vpop.xlane.xlu0 %1966
        %v1968 = vmul.f32 %v1967, %v1262
        %v1969 = vsub.f32 %v1962, %v1968
        %v1970 = vmul.f32 %v1969, %v1969
        %v1971 = vsel %vm1258, %v1970, 0.0
        %1972 = vadd.xlane.f32.xlu0 %v1971
        %v1973 = vpop.xlane.xlu0 %1972
        %v1974 = vmul.f32 %v1973, %v1269
        %v1976 = vlaneseq
        %v1977 = vshrl.u32 %v1976, 7
        %v1978 = vsub.s32 0, %v1977
        %v1979 = vrot.slane %v1963, %v1978
        %v1981 = vmul.f32 %v1979, %v1969
        %v1982 = vrsqrt.pop %v1974
        %v1983 = vmul.f32 %v1974, %v1982
        %vm1984 = vcmp.eq.f32.partialorder %v1974, inf
        %v1985 = vsel %vm1984, %v1974, %v1983
        %vm1986 = vcmp.eq.f32.partialorder %v1974, 0.0
        %v1987 = vand.u32 %v1974, 2147483648
        %v1988 = vsel %vm1986, %v1987, %v1985
        %v1989 = vadd.f32 %v1988, 1e-06
        %v1990 = vrcp.pop %v1989
        %v1991 = vmul.f32 %v1981, %v1990
        %v1993 = vlaneseq
        %v1994 = vshrl.u32 %v1993, 7
        %v1995 = vsub.s32 0, %v1994
        %v1996 = vrot.slane %v1964, %v1995
        %v1998 = vadd.f32 %v1991, %v1996
        %v1999 = vld [vmem:[#allocation20] sm:$0xff]
        %v2000 = vld [vmem:[#allocation20 + $0x8] sm:$0xff]
        %v2001 = vld [vmem:[#allocation20 + $0x10] sm:$0xff]
        %v2002 = vld [vmem:[#allocation20 + $0x18] sm:$0xff]
        %v2003 = vld [vmem:[#allocation21] sm:$0x1]
        %v2005 = vlaneseq
        %v2006 = vshrl.u32 %v2005, 7
        %v2007 = vsub.s32 0, %v2006
        %v2008 = vrot.slane %v2003, %v2007
        %v2011 = vsel %vm1258, %v1998, 0
        %2013 = vmatprep.subr.mxu0 0.0
        %2014 = vmatpush1.msra.mxu0 %v1999
        %2015 = vmatprep.subr.mxu0 0.0
        %2016 = vmatpush1.msra.mxu0 %v2000
        %2017 = vmatprep.subr.mxu0 0.0
        %2018 = vmatpush1.msra.mxu0 %v2001
        %2019 = vmatprep.subr.mxu0 0.0
        %2020 = vmatpush1.msra.mxu0 %v2002
        %2021 = vmatprep.subr.mxu0 0.0
        %2022 = vmatpush1.msra.mxu0 0.0
        %2023 = vmatprep.subr.mxu0 0.0
        %2024 = vmatpush1.msra.mxu0 0.0
        %2025 = vmatprep.subr.mxu0 0.0
        %2026 = vmatpush1.msra.mxu0 0.0
        %2027 = vmatprep.subr.mxu0 0.0
        %2028 = vmatpush1.msra.mxu0 0.0
        %2029 = vmatprep.subr.mxu0 0.0
        %2030 = vmatpush1.msra.mxu0 0.0
        %2031 = vmatprep.subr.mxu0 0.0
        %2032 = vmatpush1.msra.mxu0 0.0
        %2033 = vmatprep.subr.mxu0 0.0
        %2034 = vmatpush1.msra.mxu0 0.0
        %2035 = vmatprep.subr.mxu0 0.0
        %2036 = vmatpush1.msra.mxu0 0.0
        %2037 = vmatprep.subr.mxu0 0.0
        %2038 = vmatpush1.msra.mxu0 0.0
        %2039 = vmatprep.subr.mxu0 0.0
        %2040 = vmatpush1.msra.mxu0 0.0
        %2041 = vmatprep.subr.mxu0 0.0
        %2042 = vmatpush1.msra.mxu0 0.0
        %2043 = vmatprep.subr.mxu0 0.0
        %2044 = vmatpush1.msra.mxu0 0.0
        %2045 = vmatprep.subr.mxu0 0.0
        %2046 = vmatpush1.msra.mxu0 0.0
        %2047 = vmatprep.subr.mxu0 0.0
        %2048 = vmatpush1.msra.mxu0 0.0
        %2049 = vmatprep.subr.mxu0 0.0
        %2050 = vmatpush1.msra.mxu0 0.0
        %2051 = vmatprep.subr.mxu0 0.0
        %2052 = vmatpush1.msra.mxu0 0.0
        %2053 = vmatprep.subr.mxu0 0.0
        %2054 = vmatpush1.msra.mxu0 0.0
        %2055 = vmatprep.subr.mxu0 0.0
        %2056 = vmatpush1.msra.mxu0 0.0
        %2057 = vmatprep.subr.mxu0 0.0
        %2058 = vmatpush1.msra.mxu0 0.0
        %2059 = vmatprep.subr.mxu0 0.0
        %2060 = vmatpush1.msra.mxu0 0.0
        %2061 = vmatprep.subr.mxu0 0.0
        %2062 = vmatpush1.msra.mxu0 0.0
        %2063 = vmatprep.subr.mxu0 0.0
        %2064 = vmatpush1.msra.mxu0 0.0
        %2065 = vmatprep.subr.mxu0 0.0
        %2066 = vmatpush1.msra.mxu0 0.0
        %2067 = vmatprep.subr.mxu0 0.0
        %2068 = vmatpush1.msra.mxu0 0.0
        %2069 = vmatprep.subr.mxu0 0.0
        %2070 = vmatpush1.msra.mxu0 0.0
        %2071 = vmatprep.subr.mxu0 0.0
        %2072 = vmatpush1.msra.mxu0 0.0
        %2073 = vmatprep.subr.mxu0 0.0
        %2074 = vmatpush1.msra.mxu0 0.0
        %2075 = vmatprep.subr.mxu0 0.0
        %2076 = vmatpush1.msra.mxu0 0.0
        %2077 = vmatprep.mubr.f32.mxu0 0.0
        %2078 = vmatmul.mubr.f32.gmra.mrb[0].mxu0 %v2011
        %v2079 = vpop.f32.mrb[0].mxu0
        %v2080 = vadd.f32 %v2008, %v2079
        %v2081 = vpop.f32.mrb[0].mxu0
        %2082 = vdwg.mxu0
        %v2083 = vmax.f32 %v2080, 0.0
        %v2084 = vld [vmem:[%s39] sm:$0xff]
        %v2085 = vld [vmem:[%s39 + $0x8] sm:$0xff]
        %v2086 = vld [vmem:[%s39 + $0x10] sm:$0xff]
        %v2087 = vld [vmem:[%s39 + $0x18] sm:$0xff]
        %v2088 = vld [vmem:[%s39 + $0x20] sm:$0xff]
        %v2089 = vld [vmem:[%s39 + $0x28] sm:$0xff]
        %v2090 = vld [vmem:[%s39 + $0x30] sm:$0xff]
        %v2091 = vld [vmem:[%s39 + $0x38] sm:$0xff]
        %v2092 = vld [vmem:[#allocation23] sm:$0x1]
        %v2094 = vlaneseq
        %v2095 = vshrl.u32 %v2094, 7
        %v2096 = vsub.s32 0, %v2095
        %v2097 = vrot.slane %v2092, %v2096
        %vm2099 = vcmask 523264
        %v2101 = vsel %vm2099, %v2083, 0
        %2103 = vmatprep.subr.mxu0 0.0
        %2104 = vmatpush1.msra.mxu0 %v2084
        %2105 = vmatprep.subr.mxu0 0.0
        %2106 = vmatpush1.msra.mxu0 %v2085
        %2107 = vmatprep.subr.mxu0 0.0
        %2108 = vmatpush1.msra.mxu0 %v2086
        %2109 = vmatprep.subr.mxu0 0.0
        %2110 = vmatpush1.msra.mxu0 %v2087
        %2111 = vmatprep.subr.mxu0 0.0
        %2112 = vmatpush1.msra.mxu0 %v2088
        %2113 = vmatprep.subr.mxu0 0.0
        %2114 = vmatpush1.msra.mxu0 %v2089
        %2115 = vmatprep.subr.mxu0 0.0
        %2116 = vmatpush1.msra.mxu0 %v2090
        %2117 = vmatprep.subr.mxu0 0.0
        %2118 = vmatpush1.msra.mxu0 %v2091
        %2119 = vmatprep.subr.mxu0 0.0
        %2120 = vmatpush1.msra.mxu0 0.0
        %2121 = vmatprep.subr.mxu0 0.0
        %2122 = vmatpush1.msra.mxu0 0.0
        %2123 = vmatprep.subr.mxu0 0.0
        %2124 = vmatpush1.msra.mxu0 0.0
        %2125 = vmatprep.subr.mxu0 0.0
        %2126 = vmatpush1.msra.mxu0 0.0
        %2127 = vmatprep.subr.mxu0 0.0
        %2128 = vmatpush1.msra.mxu0 0.0
        %2129 = vmatprep.subr.mxu0 0.0
        %2130 = vmatpush1.msra.mxu0 0.0
        %2131 = vmatprep.subr.mxu0 0.0
        %2132 = vmatpush1.msra.mxu0 0.0
        %2133 = vmatprep.subr.mxu0 0.0
        %2134 = vmatpush1.msra.mxu0 0.0
        %2135 = vmatprep.subr.mxu0 0.0
        %2136 = vmatpush1.msra.mxu0 0.0
        %2137 = vmatprep.subr.mxu0 0.0
        %2138 = vmatpush1.msra.mxu0 0.0
        %2139 = vmatprep.subr.mxu0 0.0
        %2140 = vmatpush1.msra.mxu0 0.0
        %2141 = vmatprep.subr.mxu0 0.0
        %2142 = vmatpush1.msra.mxu0 0.0
        %2143 = vmatprep.subr.mxu0 0.0
        %2144 = vmatpush1.msra.mxu0 0.0
        %2145 = vmatprep.subr.mxu0 0.0
        %2146 = vmatpush1.msra.mxu0 0.0
        %2147 = vmatprep.subr.mxu0 0.0
        %2148 = vmatpush1.msra.mxu0 0.0
        %2149 = vmatprep.subr.mxu0 0.0
        %2150 = vmatpush1.msra.mxu0 0.0
        %2151 = vmatprep.subr.mxu0 0.0
        %2152 = vmatpush1.msra.mxu0 0.0
        %2153 = vmatprep.subr.mxu0 0.0
        %2154 = vmatpush1.msra.mxu0 0.0
        %2155 = vmatprep.subr.mxu0 0.0
        %2156 = vmatpush1.msra.mxu0 0.0
        %2157 = vmatprep.subr.mxu0 0.0
        %2158 = vmatpush1.msra.mxu0 0.0
        %2159 = vmatprep.subr.mxu0 0.0
        %2160 = vmatpush1.msra.mxu0 0.0
        %2161 = vmatprep.subr.mxu0 0.0
        %2162 = vmatpush1.msra.mxu0 0.0
        %2163 = vmatprep.subr.mxu0 0.0
        %2164 = vmatpush1.msra.mxu0 0.0
        %2165 = vmatprep.subr.mxu0 0.0
        %2166 = vmatpush1.msra.mxu0 0.0
        %2167 = vmatprep.mubr.f32.mxu0 0.0
        %2168 = vmatmul.mubr.f32.gmra.mrb[0].mxu0 %v2101
        %v2169 = vpop.f32.mrb[0].mxu0
        %v2170 = vadd.f32 %v2097, %v2169
        %v2171 = vpop.f32.mrb[0].mxu0
        %2172 = vdwg.mxu0
        %v2173 = vadd.f32 %v1962, %v2170
        %s2174 = scalar_lea.vmem [#allocation8], 1
        %v2175 = vld [vmem:[%s2174] sm:$0x1]
        %s2176 = scalar_lea.vmem [#allocation9], 1
        %v2177 = vld [vmem:[%s2176] sm:$0x1]
        %v2178 = vsel %vm1258, %v2173, 0.0
        %2179 = vadd.xlane.f32.xlu0 %v2178
        %v2180 = vpop.xlane.xlu0 %2179
        %v2181 = vmul.f32 %v2180, %v1262
        %v2182 = vsub.f32 %v2173, %v2181
        %v2183 = vmul.f32 %v2182, %v2182
        %v2184 = vsel %vm1258, %v2183, 0.0
        %2185 = vadd.xlane.f32.xlu0 %v2184
        %v2186 = vpop.xlane.xlu0 %2185
        %v2187 = vmul.f32 %v2186, %v1269
        %v2189 = vlaneseq
        %v2190 = vshrl.u32 %v2189, 7
        %v2191 = vsub.s32 0, %v2190
        %v2192 = vrot.slane %v2175, %v2191
        %v2194 = vmul.f32 %v2192, %v2182
        %v2195 = vrsqrt.pop %v2187
        %v2196 = vmul.f32 %v2187, %v2195
        %vm2197 = vcmp.eq.f32.partialorder %v2187, inf
        %v2198 = vsel %vm2197, %v2187, %v2196
        %vm2199 = vcmp.eq.f32.partialorder %v2187, 0.0
        %v2200 = vand.u32 %v2187, 2147483648
        %v2201 = vsel %vm2199, %v2200, %v2198
        %v2202 = vadd.f32 %v2201, 1e-06
        %v2203 = vrcp.pop %v2202
        %v2204 = vmul.f32 %v2194, %v2203
        %v2206 = vlaneseq
        %v2207 = vshrl.u32 %v2206, 7
        %v2208 = vsub.s32 0, %v2207
        %v2209 = vrot.slane %v2177, %v2208
        %v2211 = vadd.f32 %v2204, %v2209
        %s2212 = scalar_lea.vmem %s15, 32
        %v2213 = vld [vmem:[%s2212] sm:$0xff]
        %v2214 = vld [vmem:[%s2212 + $0x8] sm:$0xff]
        %v2215 = vld [vmem:[%s2212 + $0x10] sm:$0xff]
        %v2216 = vld [vmem:[%s2212 + $0x18] sm:$0xff]
        %s2217 = scalar_lea.vmem [#allocation11], 1
        %v2218 = vld [vmem:[%s2217] sm:$0x1]
        %v2220 = vlaneseq
        %v2221 = vshrl.u32 %v2220, 7
        %v2222 = vsub.s32 0, %v2221
        %v2223 = vrot.slane %v2218, %v2222
        %v2226 = vsel %vm1258, %v2211, 0
        %2228 = vmatprep.subr.mxu0 0.0
        %2229 = vmatpush1.msra.mxu0 %v2213
        %2230 = vmatprep.subr.mxu0 0.0
        %2231 = vmatpush1.msra.mxu0 %v2214
        %2232 = vmatprep.subr.mxu0 0.0
        %2233 = vmatpush1.msra.mxu0 %v2215
        %2234 = vmatprep.subr.mxu0 0.0
        %2235 = vmatpush1.msra.mxu0 %v2216
        %2236 = vmatprep.subr.mxu0 0.0
        %2237 = vmatpush1.msra.mxu0 0.0
        %2238 = vmatprep.subr.mxu0 0.0
        %2239 = vmatpush1.msra.mxu0 0.0
        %2240 = vmatprep.subr.mxu0 0.0
        %2241 = vmatpush1.msra.mxu0 0.0
        %2242 = vmatprep.subr.mxu0 0.0
        %2243 = vmatpush1.msra.mxu0 0.0
        %2244 = vmatprep.subr.mxu0 0.0
        %2245 = vmatpush1.msra.mxu0 0.0
        %2246 = vmatprep.subr.mxu0 0.0
        %2247 = vmatpush1.msra.mxu0 0.0
        %2248 = vmatprep.subr.mxu0 0.0
        %2249 = vmatpush1.msra.mxu0 0.0
        %2250 = vmatprep.subr.mxu0 0.0
        %2251 = vmatpush1.msra.mxu0 0.0
        %2252 = vmatprep.subr.mxu0 0.0
        %2253 = vmatpush1.msra.mxu0 0.0
        %2254 = vmatprep.subr.mxu0 0.0
        %2255 = vmatpush1.msra.mxu0 0.0
        %2256 = vmatprep.subr.mxu0 0.0
        %2257 = vmatpush1.msra.mxu0 0.0
        %2258 = vmatprep.subr.mxu0 0.0
        %2259 = vmatpush1.msra.mxu0 0.0
        %2260 = vmatprep.subr.mxu0 0.0
        %2261 = vmatpush1.msra.mxu0 0.0
        %2262 = vmatprep.subr.mxu0 0.0
        %2263 = vmatpush1.msra.mxu0 0.0
        %2264 = vmatprep.subr.mxu0 0.0
        %2265 = vmatpush1.msra.mxu0 0.0
        %2266 = vmatprep.subr.mxu0 0.0
        %2267 = vmatpush1.msra.mxu0 0.0
        %2268 = vmatprep.subr.mxu0 0.0
        %2269 = vmatpush1.msra.mxu0 0.0
        %2270 = vmatprep.subr.mxu0 0.0
        %2271 = vmatpush1.msra.mxu0 0.0
        %2272 = vmatprep.subr.mxu0 0.0
        %2273 = vmatpush1.msra.mxu0 0.0
        %2274 = vmatprep.subr.mxu0 0.0
        %2275 = vmatpush1.msra.mxu0 0.0
        %2276 = vmatprep.subr.mxu0 0.0
        %2277 = vmatpush1.msra.mxu0 0.0
        %2278 = vmatprep.subr.mxu0 0.0
        %2279 = vmatpush1.msra.mxu0 0.0
        %2280 = vmatprep.subr.mxu0 0.0
        %2281 = vmatpush1.msra.mxu0 0.0
        %2282 = vmatprep.subr.mxu0 0.0
        %2283 = vmatpush1.msra.mxu0 0.0
        %2284 = vmatprep.subr.mxu0 0.0
        %2285 = vmatpush1.msra.mxu0 0.0
        %2286 = vmatprep.subr.mxu0 0.0
        %2287 = vmatpush1.msra.mxu0 0.0
        %2288 = vmatprep.subr.mxu0 0.0
        %2289 = vmatpush1.msra.mxu0 0.0
        %2290 = vmatprep.subr.mxu0 0.0
        %2291 = vmatpush1.msra.mxu0 0.0
        %2292 = vmatprep.mubr.f32.mxu0 0.0
        %2293 = vmatmul.mubr.f32.gmra.mrb[0].mxu0 %v2226
        %v2294 = vpop.f32.mrb[0].mxu0
        %v2295 = vadd.f32 %v2223, %v2294
        %v2296 = vpop.f32.mrb[0].mxu0
        %2297 = vdwg.mxu0
        %s2298 = scalar_lea.vmem %s19, 32
        %v2299 = vld [vmem:[%s2298] sm:$0xff]
        %v2300 = vld [vmem:[%s2298 + $0x8] sm:$0xff]
        %v2301 = vld [vmem:[%s2298 + $0x10] sm:$0xff]
        %v2302 = vld [vmem:[%s2298 + $0x18] sm:$0xff]
        %s2303 = scalar_lea.vmem [#allocation12], 1
        %v2304 = vld [vmem:[%s2303] sm:$0x1]
        %v2306 = vlaneseq
        %v2307 = vshrl.u32 %v2306, 7
        %v2308 = vsub.s32 0, %v2307
        %v2309 = vrot.slane %v2304, %v2308
        %2311 = vmatprep.subr.mxu0 0.0
        %2312 = vmatpush1.msra.mxu0 %v2299
        %2313 = vmatprep.subr.mxu0 0.0
        %2314 = vmatpush1.msra.mxu0 %v2300
        %2315 = vmatprep.subr.mxu0 0.0
        %2316 = vmatpush1.msra.mxu0 %v2301
        %2317 = vmatprep.subr.mxu0 0.0
        %2318 = vmatpush1.msra.mxu0 %v2302
        %2319 = vmatprep.subr.mxu0 0.0
        %2320 = vmatpush1.msra.mxu0 0.0
        %2321 = vmatprep.subr.mxu0 0.0
        %2322 = vmatpush1.msra.mxu0 0.0
        %2323 = vmatprep.subr.mxu0 0.0
        %2324 = vmatpush1.msra.mxu0 0.0
        %2325 = vmatprep.subr.mxu0 0.0
        %2326 = vmatpush1.msra.mxu0 0.0
        %2327 = vmatprep.subr.mxu0 0.0
        %2328 = vmatpush1.msra.mxu0 0.0
        %2329 = vmatprep.subr.mxu0 0.0
        %2330 = vmatpush1.msra.mxu0 0.0
        %2331 = vmatprep.subr.mxu0 0.0
        %2332 = vmatpush1.msra.mxu0 0.0
        %2333 = vmatprep.subr.mxu0 0.0
        %2334 = vmatpush1.msra.mxu0 0.0
        %2335 = vmatprep.subr.mxu0 0.0
        %2336 = vmatpush1.msra.mxu0 0.0
        %2337 = vmatprep.subr.mxu0 0.0
        %2338 = vmatpush1.msra.mxu0 0.0
        %2339 = vmatprep.subr.mxu0 0.0
        %2340 = vmatpush1.msra.mxu0 0.0
        %2341 = vmatprep.subr.mxu0 0.0
        %2342 = vmatpush1.msra.mxu0 0.0
        %2343 = vmatprep.subr.mxu0 0.0
        %2344 = vmatpush1.msra.mxu0 0.0
        %2345 = vmatprep.subr.mxu0 0.0
        %2346 = vmatpush1.msra.mxu0 0.0
        %2347 = vmatprep.subr.mxu0 0.0
        %2348 = vmatpush1.msra.mxu0 0.0
        %2349 = vmatprep.subr.mxu0 0.0
        %2350 = vmatpush1.msra.mxu0 0.0
        %2351 = vmatprep.subr.mxu0 0.0
        %2352 = vmatpush1.msra.mxu0 0.0
        %2353 = vmatprep.subr.mxu0 0.0
        %2354 = vmatpush1.msra.mxu0 0.0
        %2355 = vmatprep.subr.mxu0 0.0
        %2356 = vmatpush1.msra.mxu0 0.0
        %2357 = vmatprep.subr.mxu0 0.0
        %2358 = vmatpush1.msra.mxu0 0.0
        %2359 = vmatprep.subr.mxu0 0.0
        %2360 = vmatpush1.msra.mxu0 0.0
        %2361 = vmatprep.subr.mxu0 0.0
        %2362 = vmatpush1.msra.mxu0 0.0
        %2363 = vmatprep.subr.mxu0 0.0
        %2364 = vmatpush1.msra.mxu0 0.0
        %2365 = vmatprep.subr.mxu0 0.0
        %2366 = vmatpush1.msra.mxu0 0.0
        %2367 = vmatprep.subr.mxu0 0.0
        %2368 = vmatpush1.msra.mxu0 0.0
        %2369 = vmatprep.subr.mxu0 0.0
        %2370 = vmatpush1.msra.mxu0 0.0
        %2371 = vmatprep.subr.mxu0 0.0
        %2372 = vmatpush1.msra.mxu0 0.0
        %2373 = vmatprep.subr.mxu0 0.0
        %2374 = vmatpush1.msra.mxu0 0.0
        %2375 = vmatprep.mubr.f32.mxu0 0.0
        %2376 = vmatmul.mubr.f32.gmra.mrb[0].mxu0 %v2226
        %v2377 = vpop.f32.mrb[0].mxu0
        %v2378 = vadd.f32 %v2309, %v2377
        %v2379 = vpop.f32.mrb[0].mxu0
        %2380 = vdwg.mxu0
        %s2381 = scalar_lea.vmem %s23, 32
        %v2382 = vld [vmem:[%s2381] sm:$0xff]
        %v2383 = vld [vmem:[%s2381 + $0x8] sm:$0xff]
        %v2384 = vld [vmem:[%s2381 + $0x10] sm:$0xff]
        %v2385 = vld [vmem:[%s2381 + $0x18] sm:$0xff]
        %s2386 = scalar_lea.vmem [#allocation14], 1
        %v2387 = vld [vmem:[%s2386] sm:$0x1]
        %v2389 = vlaneseq
        %v2390 = vshrl.u32 %v2389, 7
        %v2391 = vsub.s32 0, %v2390
        %v2392 = vrot.slane %v2387, %v2391
        %2394 = vmatprep.subr.mxu0 0.0
        %2395 = vmatpush1.msra.mxu0 %v2382
        %2396 = vmatprep.subr.mxu0 0.0
        %2397 = vmatpush1.msra.mxu0 %v2383
        %2398 = vmatprep.subr.mxu0 0.0
        %2399 = vmatpush1.msra.mxu0 %v2384
        %2400 = vmatprep.subr.mxu0 0.0
        %2401 = vmatpush1.msra.mxu0 %v2385
        %2402 = vmatprep.subr.mxu0 0.0
        %2403 = vmatpush1.msra.mxu0 0.0
        %2404 = vmatprep.subr.mxu0 0.0
        %2405 = vmatpush1.msra.mxu0 0.0
        %2406 = vmatprep.subr.mxu0 0.0
        %2407 = vmatpush1.msra.mxu0 0.0
        %2408 = vmatprep.subr.mxu0 0.0
        %2409 = vmatpush1.msra.mxu0 0.0
        %2410 = vmatprep.subr.mxu0 0.0
        %2411 = vmatpush1.msra.mxu0 0.0
        %2412 = vmatprep.subr.mxu0 0.0
        %2413 = vmatpush1.msra.mxu0 0.0
        %2414 = vmatprep.subr.mxu0 0.0
        %2415 = vmatpush1.msra.mxu0 0.0
        %2416 = vmatprep.subr.mxu0 0.0
        %2417 = vmatpush1.msra.mxu0 0.0
        %2418 = vmatprep.subr.mxu0 0.0
        %2419 = vmatpush1.msra.mxu0 0.0
        %2420 = vmatprep.subr.mxu0 0.0
        %2421 = vmatpush1.msra.mxu0 0.0
        %2422 = vmatprep.subr.mxu0 0.0
        %2423 = vmatpush1.msra.mxu0 0.0
        %2424 = vmatprep.subr.mxu0 0.0
        %2425 = vmatpush1.msra.mxu0 0.0
        %2426 = vmatprep.subr.mxu0 0.0
        %2427 = vmatpush1.msra.mxu0 0.0
        %2428 = vmatprep.subr.mxu0 0.0
        %2429 = vmatpush1.msra.mxu0 0.0
        %2430 = vmatprep.subr.mxu0 0.0
        %2431 = vmatpush1.msra.mxu0 0.0
        %2432 = vmatprep.subr.mxu0 0.0
        %2433 = vmatpush1.msra.mxu0 0.0
        %2434 = vmatprep.subr.mxu0 0.0
        %2435 = vmatpush1.msra.mxu0 0.0
        %2436 = vmatprep.subr.mxu0 0.0
        %2437 = vmatpush1.msra.mxu0 0.0
        %2438 = vmatprep.subr.mxu0 0.0
        %2439 = vmatpush1.msra.mxu0 0.0
        %2440 = vmatprep.subr.mxu0 0.0
        %2441 = vmatpush1.msra.mxu0 0.0
        %2442 = vmatprep.subr.mxu0 0.0
        %2443 = vmatpush1.msra.mxu0 0.0
        %2444 = vmatprep.subr.mxu0 0.0
        %2445 = vmatpush1.msra.mxu0 0.0
        %2446 = vmatprep.subr.mxu0 0.0
        %2447 = vmatpush1.msra.mxu0 0.0
        %2448 = vmatprep.subr.mxu0 0.0
        %2449 = vmatpush1.msra.mxu0 0.0
        %2450 = vmatprep.subr.mxu0 0.0
        %2451 = vmatpush1.msra.mxu0 0.0
        %2452 = vmatprep.subr.mxu0 0.0
        %2453 = vmatpush1.msra.mxu0 0.0
        %2454 = vmatprep.subr.mxu0 0.0
        %2455 = vmatpush1.msra.mxu0 0.0
        %2456 = vmatprep.subr.mxu0 0.0
        %2457 = vmatpush1.msra.mxu0 0.0
        %2458 = vmatprep.mubr.f32.mxu0 0.0
        %2459 = vmatmul.mubr.f32.gmra.mrb[0].mxu0 %v2226
        %v2460 = vpop.f32.mrb[0].mxu0
        %v2461 = vadd.f32 %v2392, %v2460
        %v2462 = vpop.f32.mrb[0].mxu0
        %2463 = vdwg.mxu0
        %v2465 = vsel %vm1541, %v2295, 0
        %v2468 = vsel %vm1541, %v2378, 0
        %2470 = vmatprep.subr.mxu0 0.0
        %2471 = vmatpush1.xpose.msra.mxu0 %v2468
        %2472 = vmatprep.subr.mxu0 0.0
        %2473 = vmatpush1.xpose.msra.mxu0 0.0
        %2474 = vmatprep.subr.mxu0 0.0
        %2475 = vmatpush1.xpose.msra.mxu0 0.0
        %2476 = vmatprep.subr.mxu0 0.0
        %2477 = vmatpush1.xpose.msra.mxu0 0.0
        %2478 = vmatprep.subr.mxu0 0.0
        %2479 = vmatpush1.xpose.msra.mxu0 0.0
        %2480 = vmatprep.subr.mxu0 0.0
        %2481 = vmatpush1.xpose.msra.mxu0 0.0
        %2482 = vmatprep.subr.mxu0 0.0
        %2483 = vmatpush1.xpose.msra.mxu0 0.0
        %2484 = vmatprep.subr.mxu0 0.0
        %2485 = vmatpush1.xpose.msra.mxu0 0.0
        %2486 = vmatprep.subr.mxu0 0.0
        %2487 = vmatpush1.xpose.msra.mxu0 0.0
        %2488 = vmatprep.subr.mxu0 0.0
        %2489 = vmatpush1.xpose.msra.mxu0 0.0
        %2490 = vmatprep.subr.mxu0 0.0
        %2491 = vmatpush1.xpose.msra.mxu0 0.0
        %2492 = vmatprep.subr.mxu0 0.0
        %2493 = vmatpush1.xpose.msra.mxu0 0.0
        %2494 = vmatprep.subr.mxu0 0.0
        %2495 = vmatpush1.xpose.msra.mxu0 0.0
        %2496 = vmatprep.subr.mxu0 0.0
        %2497 = vmatpush1.xpose.msra.mxu0 0.0
        %2498 = vmatprep.subr.mxu0 0.0
        %2499 = vmatpush1.xpose.msra.mxu0 0.0
        %2500 = vmatprep.subr.mxu0 0.0
        %2501 = vmatpush1.xpose.msra.mxu0 0.0
        %2502 = vmatprep.subr.mxu0 0.0
        %2503 = vmatpush1.xpose.msra.mxu0 0.0
        %2504 = vmatprep.subr.mxu0 0.0
        %2505 = vmatpush1.xpose.msra.mxu0 0.0
        %2506 = vmatprep.subr.mxu0 0.0
        %2507 = vmatpush1.xpose.msra.mxu0 0.0
        %2508 = vmatprep.subr.mxu0 0.0
        %2509 = vmatpush1.xpose.msra.mxu0 0.0
        %2510 = vmatprep.subr.mxu0 0.0
        %2511 = vmatpush1.xpose.msra.mxu0 0.0
        %2512 = vmatprep.subr.mxu0 0.0
        %2513 = vmatpush1.xpose.msra.mxu0 0.0
        %2514 = vmatprep.subr.mxu0 0.0
        %2515 = vmatpush1.xpose.msra.mxu0 0.0
        %2516 = vmatprep.subr.mxu0 0.0
        %2517 = vmatpush1.xpose.msra.mxu0 0.0
        %2518 = vmatprep.subr.mxu0 0.0
        %2519 = vmatpush1.xpose.msra.mxu0 0.0
        %2520 = vmatprep.subr.mxu0 0.0
        %2521 = vmatpush1.xpose.msra.mxu0 0.0
        %2522 = vmatprep.subr.mxu0 0.0
        %2523 = vmatpush1.xpose.msra.mxu0 0.0
        %2524 = vmatprep.subr.mxu0 0.0
        %2525 = vmatpush1.xpose.msra.mxu0 0.0
        %2526 = vmatprep.subr.mxu0 0.0
        %2527 = vmatpush1.xpose.msra.mxu0 0.0
        %2528 = vmatprep.subr.mxu0 0.0
        %2529 = vmatpush1.xpose.msra.mxu0 0.0
        %2530 = vmatprep.subr.mxu0 0.0
        %2531 = vmatpush1.xpose.msra.mxu0 0.0
        %2532 = vmatprep.subr.mxu0 0.0
        %2533 = vmatpush1.xpose.msra.mxu0 0.0
        %2534 = vmatprep.mubr.f32.mxu0 0.0
        %2535 = vmatmul.mubr.f32.gmra.mrb[0].mxu0 %v2465
        %v2536 = vpop.f32.mrb[0].mxu0
        %v2537 = vadd.f32 0.0, %v2536
        %v2538 = vpop.f32.mrb[0].mxu0
        %2539 = vdwg.mxu0
        %v2540 = vmul.f32 %v2537, 0.25
        %v2541 = vsel %vm1162, %v2540, -1e+09
        %v2542 = vsel %vm1620, %v2541, -inf
        %2543 = vmax.xlane.f32.xlu0 %v2542
        %v2544 = vpop.xlane.xlu0 %2543
        %v2545 = vsub.f32 %v2541, %v2544
        %v2546 = vmul.f32 %v2545, 1.442695
        %v2547 = vpow.pop %v2546
        %v2548 = vsel %vm1620, %v2547, 0.0
        %2549 = vadd.xlane.f32.xlu0 %v2548
        %v2550 = vpop.xlane.xlu0 %2549
        %v2551 = vrcp.pop %v2550
        %v2552 = vmul.f32 %v2547, %v2551
        %v2554 = vsel %vm1620, %v2552, 0
        %2556 = vmatprep.subr.mxu0 0.0
        %2557 = vmatpush1.msra.mxu0 %v2461
        %2558 = vmatprep.subr.mxu0 0.0
        %2559 = vmatpush1.msra.mxu0 0.0
        %2560 = vmatprep.subr.mxu0 0.0
        %2561 = vmatpush1.msra.mxu0 0.0
        %2562 = vmatprep.subr.mxu0 0.0
        %2563 = vmatpush1.msra.mxu0 0.0
        %2564 = vmatprep.subr.mxu0 0.0
        %2565 = vmatpush1.msra.mxu0 0.0
        %2566 = vmatprep.subr.mxu0 0.0
        %2567 = vmatpush1.msra.mxu0 0.0
        %2568 = vmatprep.subr.mxu0 0.0
        %2569 = vmatpush1.msra.mxu0 0.0
        %2570 = vmatprep.subr.mxu0 0.0
        %2571 = vmatpush1.msra.mxu0 0.0
        %2572 = vmatprep.subr.mxu0 0.0
        %2573 = vmatpush1.msra.mxu0 0.0
        %2574 = vmatprep.subr.mxu0 0.0
        %2575 = vmatpush1.msra.mxu0 0.0
        %2576 = vmatprep.subr.mxu0 0.0
        %2577 = vmatpush1.msra.mxu0 0.0
        %2578 = vmatprep.subr.mxu0 0.0
        %2579 = vmatpush1.msra.mxu0 0.0
        %2580 = vmatprep.subr.mxu0 0.0
        %2581 = vmatpush1.msra.mxu0 0.0
        %2582 = vmatprep.subr.mxu0 0.0
        %2583 = vmatpush1.msra.mxu0 0.0
        %2584 = vmatprep.subr.mxu0 0.0
        %2585 = vmatpush1.msra.mxu0 0.0
        %2586 = vmatprep.subr.mxu0 0.0
        %2587 = vmatpush1.msra.mxu0 0.0
        %2588 = vmatprep.subr.mxu0 0.0
        %2589 = vmatpush1.msra.mxu0 0.0
        %2590 = vmatprep.subr.mxu0 0.0
        %2591 = vmatpush1.msra.mxu0 0.0
        %2592 = vmatprep.subr.mxu0 0.0
        %2593 = vmatpush1.msra.mxu0 0.0
        %2594 = vmatprep.subr.mxu0 0.0
        %2595 = vmatpush1.msra.mxu0 0.0
        %2596 = vmatprep.subr.mxu0 0.0
        %2597 = vmatpush1.msra.mxu0 0.0
        %2598 = vmatprep.subr.mxu0 0.0
        %2599 = vmatpush1.msra.mxu0 0.0
        %2600 = vmatprep.subr.mxu0 0.0
        %2601 = vmatpush1.msra.mxu0 0.0
        %2602 = vmatprep.subr.mxu0 0.0
        %2603 = vmatpush1.msra.mxu0 0.0
        %2604 = vmatprep.subr.mxu0 0.0
        %2605 = vmatpush1.msra.mxu0 0.0
        %2606 = vmatprep.subr.mxu0 0.0
        %2607 = vmatpush1.msra.mxu0 0.0
        %2608 = vmatprep.subr.mxu0 0.0
        %2609 = vmatpush1.msra.mxu0 0.0
        %2610 = vmatprep.subr.mxu0 0.0
        %2611 = vmatpush1.msra.mxu0 0.0
        %2612 = vmatprep.subr.mxu0 0.0
        %2613 = vmatpush1.msra.mxu0 0.0
        %2614 = vmatprep.subr.mxu0 0.0
        %2615 = vmatpush1.msra.mxu0 0.0
        %2616 = vmatprep.subr.mxu0 0.0
        %2617 = vmatpush1.msra.mxu0 0.0
        %2618 = vmatprep.subr.mxu0 0.0
        %2619 = vmatpush1.msra.mxu0 0.0
        %2620 = vmatprep.mubr.f32.mxu0 0.0
        %2621 = vmatmul.mubr.f32.gmra.mrb[0].mxu0 %v2554
        %v2622 = vpop.f32.mrb[0].mxu0
        %v2623 = vadd.f32 0.0, %v2622
        %v2624 = vpop.f32.mrb[0].mxu0
        %2625 = vdwg.mxu0
        %2626 = vrot.lane.b32.xlu0 %v2295, 112
        %v2627 = vpop.permute.xlu0 %2626
        %2628 = vrot.lane.b32.xlu0 %v2378, 112
        %v2629 = vpop.permute.xlu0 %2628
        %v2630 = vsel %vm1541, %v2627, 0
        %v2632 = vsel %vm1541, %v2629, 0
        %2634 = vmatprep.subr.mxu0 0.0
        %2635 = vmatpush1.xpose.msra.mxu0 %v2632
        %2636 = vmatprep.subr.mxu0 0.0
        %2637 = vmatpush1.xpose.msra.mxu0 0.0
        %2638 = vmatprep.subr.mxu0 0.0
        %2639 = vmatpush1.xpose.msra.mxu0 0.0
        %2640 = vmatprep.subr.mxu0 0.0
        %2641 = vmatpush1.xpose.msra.mxu0 0.0
        %2642 = vmatprep.subr.mxu0 0.0
        %2643 = vmatpush1.xpose.msra.mxu0 0.0
        %2644 = vmatprep.subr.mxu0 0.0
        %2645 = vmatpush1.xpose.msra.mxu0 0.0
        %2646 = vmatprep.subr.mxu0 0.0
        %2647 = vmatpush1.xpose.msra.mxu0 0.0
        %2648 = vmatprep.subr.mxu0 0.0
        %2649 = vmatpush1.xpose.msra.mxu0 0.0
        %2650 = vmatprep.subr.mxu0 0.0
        %2651 = vmatpush1.xpose.msra.mxu0 0.0
        %2652 = vmatprep.subr.mxu0 0.0
        %2653 = vmatpush1.xpose.msra.mxu0 0.0
        %2654 = vmatprep.subr.mxu0 0.0
        %2655 = vmatpush1.xpose.msra.mxu0 0.0
        %2656 = vmatprep.subr.mxu0 0.0
        %2657 = vmatpush1.xpose.msra.mxu0 0.0
        %2658 = vmatprep.subr.mxu0 0.0
        %2659 = vmatpush1.xpose.msra.mxu0 0.0
        %2660 = vmatprep.subr.mxu0 0.0
        %2661 = vmatpush1.xpose.msra.mxu0 0.0
        %2662 = vmatprep.subr.mxu0 0.0
        %2663 = vmatpush1.xpose.msra.mxu0 0.0
        %2664 = vmatprep.subr.mxu0 0.0
        %2665 = vmatpush1.xpose.msra.mxu0 0.0
        %2666 = vmatprep.subr.mxu0 0.0
        %2667 = vmatpush1.xpose.msra.mxu0 0.0
        %2668 = vmatprep.subr.mxu0 0.0
        %2669 = vmatpush1.xpose.msra.mxu0 0.0
        %2670 = vmatprep.subr.mxu0 0.0
        %2671 = vmatpush1.xpose.msra.mxu0 0.0
        %2672 = vmatprep.subr.mxu0 0.0
        %2673 = vmatpush1.xpose.msra.mxu0 0.0
        %2674 = vmatprep.subr.mxu0 0.0
        %2675 = vmatpush1.xpose.msra.mxu0 0.0
        %2676 = vmatprep.subr.mxu0 0.0
        %2677 = vmatpush1.xpose.msra.mxu0 0.0
        %2678 = vmatprep.subr.mxu0 0.0
        %2679 = vmatpush1.xpose.msra.mxu0 0.0
        %2680 = vmatprep.subr.mxu0 0.0
        %2681 = vmatpush1.xpose.msra.mxu0 0.0
        %2682 = vmatprep.subr.mxu0 0.0
        %2683 = vmatpush1.xpose.msra.mxu0 0.0
        %2684 = vmatprep.subr.mxu0 0.0
        %2685 = vmatpush1.xpose.msra.mxu0 0.0
        %2686 = vmatprep.subr.mxu0 0.0
        %2687 = vmatpush1.xpose.msra.mxu0 0.0
        %2688 = vmatprep.subr.mxu0 0.0
        %2689 = vmatpush1.xpose.msra.mxu0 0.0
        %2690 = vmatprep.subr.mxu0 0.0
        %2691 = vmatpush1.xpose.msra.mxu0 0.0
        %2692 = vmatprep.subr.mxu0 0.0
        %2693 = vmatpush1.xpose.msra.mxu0 0.0
        %2694 = vmatprep.subr.mxu0 0.0
        %2695 = vmatpush1.xpose.msra.mxu0 0.0
        %2696 = vmatprep.subr.mxu0 0.0
        %2697 = vmatpush1.xpose.msra.mxu0 0.0
        %2698 = vmatprep.mubr.f32.mxu0 0.0
        %2699 = vmatmul.mubr.f32.gmra.mrb[0].mxu0 %v2630
        %v2700 = vpop.f32.mrb[0].mxu0
        %v2701 = vadd.f32 0.0, %v2700
        %v2702 = vpop.f32.mrb[0].mxu0
        %2703 = vdwg.mxu0
        %v2704 = vmul.f32 %v2701, 0.25
        %v2705 = vsel %vm1162, %v2704, -1e+09
        %v2706 = vsel %vm1620, %v2705, -inf
        %2707 = vmax.xlane.f32.xlu0 %v2706
        %v2708 = vpop.xlane.xlu0 %2707
        %v2709 = vsub.f32 %v2705, %v2708
        %v2710 = vmul.f32 %v2709, 1.442695
        %v2711 = vpow.pop %v2710
        %v2712 = vsel %vm1620, %v2711, 0.0
        %2713 = vadd.xlane.f32.xlu0 %v2712
        %v2714 = vpop.xlane.xlu0 %2713
        %v2715 = vrcp.pop %v2714
        %v2716 = vmul.f32 %v2711, %v2715
        %2718 = vrot.lane.b32.xlu0 %v2461, 112
        %v2719 = vpop.permute.xlu0 %2718
        %v2722 = vsel %vm1620, %v2716, 0
        %2724 = vmatprep.subr.mxu0 0.0
        %2725 = vmatpush1.msra.mxu0 %v2719
        %2726 = vmatprep.subr.mxu0 0.0
        %2727 = vmatpush1.msra.mxu0 0.0
        %2728 = vmatprep.subr.mxu0 0.0
        %2729 = vmatpush1.msra.mxu0 0.0
        %2730 = vmatprep.subr.mxu0 0.0
        %2731 = vmatpush1.msra.mxu0 0.0
        %2732 = vmatprep.subr.mxu0 0.0
        %2733 = vmatpush1.msra.mxu0 0.0
        %2734 = vmatprep.subr.mxu0 0.0
        %2735 = vmatpush1.msra.mxu0 0.0
        %2736 = vmatprep.subr.mxu0 0.0
        %2737 = vmatpush1.msra.mxu0 0.0
        %2738 = vmatprep.subr.mxu0 0.0
        %2739 = vmatpush1.msra.mxu0 0.0
        %2740 = vmatprep.subr.mxu0 0.0
        %2741 = vmatpush1.msra.mxu0 0.0
        %2742 = vmatprep.subr.mxu0 0.0
        %2743 = vmatpush1.msra.mxu0 0.0
        %2744 = vmatprep.subr.mxu0 0.0
        %2745 = vmatpush1.msra.mxu0 0.0
        %2746 = vmatprep.subr.mxu0 0.0
        %2747 = vmatpush1.msra.mxu0 0.0
        %2748 = vmatprep.subr.mxu0 0.0
        %2749 = vmatpush1.msra.mxu0 0.0
        %2750 = vmatprep.subr.mxu0 0.0
        %2751 = vmatpush1.msra.mxu0 0.0
        %2752 = vmatprep.subr.mxu0 0.0
        %2753 = vmatpush1.msra.mxu0 0.0
        %2754 = vmatprep.subr.mxu0 0.0
        %2755 = vmatpush1.msra.mxu0 0.0
        %2756 = vmatprep.subr.mxu0 0.0
        %2757 = vmatpush1.msra.mxu0 0.0
        %2758 = vmatprep.subr.mxu0 0.0
        %2759 = vmatpush1.msra.mxu0 0.0
        %2760 = vmatprep.subr.mxu0 0.0
        %2761 = vmatpush1.msra.mxu0 0.0
        %2762 = vmatprep.subr.mxu0 0.0
        %2763 = vmatpush1.msra.mxu0 0.0
        %2764 = vmatprep.subr.mxu0 0.0
        %2765 = vmatpush1.msra.mxu0 0.0
        %2766 = vmatprep.subr.mxu0 0.0
        %2767 = vmatpush1.msra.mxu0 0.0
        %2768 = vmatprep.subr.mxu0 0.0
        %2769 = vmatpush1.msra.mxu0 0.0
        %2770 = vmatprep.subr.mxu0 0.0
        %2771 = vmatpush1.msra.mxu0 0.0
        %2772 = vmatprep.subr.mxu0 0.0
        %2773 = vmatpush1.msra.mxu0 0.0
        %2774 = vmatprep.subr.mxu0 0.0
        %2775 = vmatpush1.msra.mxu0 0.0
        %2776 = vmatprep.subr.mxu0 0.0
        %2777 = vmatpush1.msra.mxu0 0.0
        %2778 = vmatprep.subr.mxu0 0.0
        %2779 = vmatpush1.msra.mxu0 0.0
        %2780 = vmatprep.subr.mxu0 0.0
        %2781 = vmatpush1.msra.mxu0 0.0
        %2782 = vmatprep.subr.mxu0 0.0
        %2783 = vmatpush1.msra.mxu0 0.0
        %2784 = vmatprep.subr.mxu0 0.0
        %2785 = vmatpush1.msra.mxu0 0.0
        %2786 = vmatprep.subr.mxu0 0.0
        %2787 = vmatpush1.msra.mxu0 0.0
        %2788 = vmatprep.mubr.f32.mxu0 0.0
        %2789 = vmatmul.mubr.f32.gmra.mrb[0].mxu0 %v2722
        %v2790 = vpop.f32.mrb[0].mxu0
        %v2791 = vadd.f32 0.0, %v2790
        %v2792 = vpop.f32.mrb[0].mxu0
        %2793 = vdwg.mxu0
        %2795 = vrot.lane.b32.xlu0 %v2791, 16
        %v2796 = vpop.permute.xlu0 %2795
        %v2798 = vsel %vm1541, %v2623, %v2796
        %s2799 = scalar_lea.vmem %s27, 32
        %v2800 = vld [vmem:[%s2799] sm:$0xff]
        %v2801 = vld [vmem:[%s2799 + $0x8] sm:$0xff]
        %v2802 = vld [vmem:[%s2799 + $0x10] sm:$0xff]
        %v2803 = vld [vmem:[%s2799 + $0x18] sm:$0xff]
        %s2804 = scalar_lea.vmem [#allocation15], 1
        %v2805 = vld [vmem:[%s2804] sm:$0x1]
        %v2807 = vlaneseq
        %v2808 = vshrl.u32 %v2807, 7
        %v2809 = vsub.s32 0, %v2808
        %v2810 = vrot.slane %v2805, %v2809
        %v2813 = vsel %vm1258, %v2798, 0
        %2815 = vmatprep.subr.mxu0 0.0
        %2816 = vmatpush1.msra.mxu0 %v2800
        %2817 = vmatprep.subr.mxu0 0.0
        %2818 = vmatpush1.msra.mxu0 %v2801
        %2819 = vmatprep.subr.mxu0 0.0
        %2820 = vmatpush1.msra.mxu0 %v2802
        %2821 = vmatprep.subr.mxu0 0.0
        %2822 = vmatpush1.msra.mxu0 %v2803
        %2823 = vmatprep.subr.mxu0 0.0
        %2824 = vmatpush1.msra.mxu0 0.0
        %2825 = vmatprep.subr.mxu0 0.0
        %2826 = vmatpush1.msra.mxu0 0.0
        %2827 = vmatprep.subr.mxu0 0.0
        %2828 = vmatpush1.msra.mxu0 0.0
        %2829 = vmatprep.subr.mxu0 0.0
        %2830 = vmatpush1.msra.mxu0 0.0
        %2831 = vmatprep.subr.mxu0 0.0
        %2832 = vmatpush1.msra.mxu0 0.0
        %2833 = vmatprep.subr.mxu0 0.0
        %2834 = vmatpush1.msra.mxu0 0.0
        %2835 = vmatprep.subr.mxu0 0.0
        %2836 = vmatpush1.msra.mxu0 0.0
        %2837 = vmatprep.subr.mxu0 0.0
        %2838 = vmatpush1.msra.mxu0 0.0
        %2839 = vmatprep.subr.mxu0 0.0
        %2840 = vmatpush1.msra.mxu0 0.0
        %2841 = vmatprep.subr.mxu0 0.0
        %2842 = vmatpush1.msra.mxu0 0.0
        %2843 = vmatprep.subr.mxu0 0.0
        %2844 = vmatpush1.msra.mxu0 0.0
        %2845 = vmatprep.subr.mxu0 0.0
        %2846 = vmatpush1.msra.mxu0 0.0
        %2847 = vmatprep.subr.mxu0 0.0
        %2848 = vmatpush1.msra.mxu0 0.0
        %2849 = vmatprep.subr.mxu0 0.0
        %2850 = vmatpush1.msra.mxu0 0.0
        %2851 = vmatprep.subr.mxu0 0.0
        %2852 = vmatpush1.msra.mxu0 0.0
        %2853 = vmatprep.subr.mxu0 0.0
        %2854 = vmatpush1.msra.mxu0 0.0
        %2855 = vmatprep.subr.mxu0 0.0
        %2856 = vmatpush1.msra.mxu0 0.0
        %2857 = vmatprep.subr.mxu0 0.0
        %2858 = vmatpush1.msra.mxu0 0.0
        %2859 = vmatprep.subr.mxu0 0.0
        %2860 = vmatpush1.msra.mxu0 0.0
        %2861 = vmatprep.subr.mxu0 0.0
        %2862 = vmatpush1.msra.mxu0 0.0
        %2863 = vmatprep.subr.mxu0 0.0
        %2864 = vmatpush1.msra.mxu0 0.0
        %2865 = vmatprep.subr.mxu0 0.0
        %2866 = vmatpush1.msra.mxu0 0.0
        %2867 = vmatprep.subr.mxu0 0.0
        %2868 = vmatpush1.msra.mxu0 0.0
        %2869 = vmatprep.subr.mxu0 0.0
        %2870 = vmatpush1.msra.mxu0 0.0
        %2871 = vmatprep.subr.mxu0 0.0
        %2872 = vmatpush1.msra.mxu0 0.0
        %2873 = vmatprep.subr.mxu0 0.0
        %2874 = vmatpush1.msra.mxu0 0.0
        %2875 = vmatprep.subr.mxu0 0.0
        %2876 = vmatpush1.msra.mxu0 0.0
        %2877 = vmatprep.subr.mxu0 0.0
        %2878 = vmatpush1.msra.mxu0 0.0
        %2879 = vmatprep.mubr.f32.mxu0 0.0
        %2880 = vmatmul.mubr.f32.gmra.mrb[0].mxu0 %v2813
        %v2881 = vpop.f32.mrb[0].mxu0
        %v2882 = vadd.f32 %v2810, %v2881
        %v2883 = vpop.f32.mrb[0].mxu0
        %2884 = vdwg.mxu0
        %v2885 = vadd.f32 %v2173, %v2882
        %s2886 = scalar_lea.vmem [#allocation17], 1
        %v2887 = vld [vmem:[%s2886] sm:$0x1]
        %s2888 = scalar_lea.vmem [#allocation18], 1
        %v2889 = vld [vmem:[%s2888] sm:$0x1]
        %v2890 = vsel %vm1258, %v2885, 0.0
        %2891 = vadd.xlane.f32.xlu0 %v2890
        %v2892 = vpop.xlane.xlu0 %2891
        %v2893 = vmul.f32 %v2892, %v1262
        %v2894 = vsub.f32 %v2885, %v2893
        %v2895 = vmul.f32 %v2894, %v2894
        %v2896 = vsel %vm1258, %v2895, 0.0
        %2897 = vadd.xlane.f32.xlu0 %v2896
        %v2898 = vpop.xlane.xlu0 %2897
        %v2899 = vmul.f32 %v2898, %v1269
        %v2901 = vlaneseq
        %v2902 = vshrl.u32 %v2901, 7
        %v2903 = vsub.s32 0, %v2902
        %v2904 = vrot.slane %v2887, %v2903
        %v2906 = vmul.f32 %v2904, %v2894
        %v2907 = vrsqrt.pop %v2899
        %v2908 = vmul.f32 %v2899, %v2907
        %vm2909 = vcmp.eq.f32.partialorder %v2899, inf
        %v2910 = vsel %vm2909, %v2899, %v2908
        %vm2911 = vcmp.eq.f32.partialorder %v2899, 0.0
        %v2912 = vand.u32 %v2899, 2147483648
        %v2913 = vsel %vm2911, %v2912, %v2910
        %v2914 = vadd.f32 %v2913, 1e-06
        %v2915 = vrcp.pop %v2914
        %v2916 = vmul.f32 %v2906, %v2915
        %v2918 = vlaneseq
        %v2919 = vshrl.u32 %v2918, 7
        %v2920 = vsub.s32 0, %v2919
        %v2921 = vrot.slane %v2889, %v2920
        %v2923 = vadd.f32 %v2916, %v2921
        %s2924 = scalar_lea.vmem [#allocation20], 32
        %v2925 = vld [vmem:[%s2924] sm:$0xff]
        %v2926 = vld [vmem:[%s2924 + $0x8] sm:$0xff]
        %v2927 = vld [vmem:[%s2924 + $0x10] sm:$0xff]
        %v2928 = vld [vmem:[%s2924 + $0x18] sm:$0xff]
        %s2929 = scalar_lea.vmem [#allocation21], 1
        %v2930 = vld [vmem:[%s2929] sm:$0x1]
        %v2932 = vlaneseq
        %v2933 = vshrl.u32 %v2932, 7
        %v2934 = vsub.s32 0, %v2933
        %v2935 = vrot.slane %v2930, %v2934
        %v2938 = vsel %vm1258, %v2923, 0
        %2940 = vmatprep.subr.mxu0 0.0
        %2941 = vmatpush1.msra.mxu0 %v2925
        %2942 = vmatprep.subr.mxu0 0.0
        %2943 = vmatpush1.msra.mxu0 %v2926
        %2944 = vmatprep.subr.mxu0 0.0
        %2945 = vmatpush1.msra.mxu0 %v2927
        %2946 = vmatprep.subr.mxu0 0.0
        %2947 = vmatpush1.msra.mxu0 %v2928
        %2948 = vmatprep.subr.mxu0 0.0
        %2949 = vmatpush1.msra.mxu0 0.0
        %2950 = vmatprep.subr.mxu0 0.0
        %2951 = vmatpush1.msra.mxu0 0.0
        %2952 = vmatprep.subr.mxu0 0.0
        %2953 = vmatpush1.msra.mxu0 0.0
        %2954 = vmatprep.subr.mxu0 0.0
        %2955 = vmatpush1.msra.mxu0 0.0
        %2956 = vmatprep.subr.mxu0 0.0
        %2957 = vmatpush1.msra.mxu0 0.0
        %2958 = vmatprep.subr.mxu0 0.0
        %2959 = vmatpush1.msra.mxu0 0.0
        %2960 = vmatprep.subr.mxu0 0.0
        %2961 = vmatpush1.msra.mxu0 0.0
        %2962 = vmatprep.subr.mxu0 0.0
        %2963 = vmatpush1.msra.mxu0 0.0
        %2964 = vmatprep.subr.mxu0 0.0
        %2965 = vmatpush1.msra.mxu0 0.0
        %2966 = vmatprep.subr.mxu0 0.0
        %2967 = vmatpush1.msra.mxu0 0.0
        %2968 = vmatprep.subr.mxu0 0.0
        %2969 = vmatpush1.msra.mxu0 0.0
        %2970 = vmatprep.subr.mxu0 0.0
        %2971 = vmatpush1.msra.mxu0 0.0
        %2972 = vmatprep.subr.mxu0 0.0
        %2973 = vmatpush1.msra.mxu0 0.0
        %2974 = vmatprep.subr.mxu0 0.0
        %2975 = vmatpush1.msra.mxu0 0.0
        %2976 = vmatprep.subr.mxu0 0.0
        %2977 = vmatpush1.msra.mxu0 0.0
        %2978 = vmatprep.subr.mxu0 0.0
        %2979 = vmatpush1.msra.mxu0 0.0
        %2980 = vmatprep.subr.mxu0 0.0
        %2981 = vmatpush1.msra.mxu0 0.0
        %2982 = vmatprep.subr.mxu0 0.0
        %2983 = vmatpush1.msra.mxu0 0.0
        %2984 = vmatprep.subr.mxu0 0.0
        %2985 = vmatpush1.msra.mxu0 0.0
        %2986 = vmatprep.subr.mxu0 0.0
        %2987 = vmatpush1.msra.mxu0 0.0
        %2988 = vmatprep.subr.mxu0 0.0
        %2989 = vmatpush1.msra.mxu0 0.0
        %2990 = vmatprep.subr.mxu0 0.0
        %2991 = vmatpush1.msra.mxu0 0.0
        %2992 = vmatprep.subr.mxu0 0.0
        %2993 = vmatpush1.msra.mxu0 0.0
        %2994 = vmatprep.subr.mxu0 0.0
        %2995 = vmatpush1.msra.mxu0 0.0
        %2996 = vmatprep.subr.mxu0 0.0
        %2997 = vmatpush1.msra.mxu0 0.0
        %2998 = vmatprep.subr.mxu0 0.0
        %2999 = vmatpush1.msra.mxu0 0.0
        %3000 = vmatprep.subr.mxu0 0.0
        %3001 = vmatpush1.msra.mxu0 0.0
        %3002 = vmatprep.subr.mxu0 0.0
        %3003 = vmatpush1.msra.mxu0 0.0
        %3004 = vmatprep.mubr.f32.mxu0 0.0
        %3005 = vmatmul.mubr.f32.gmra.mrb[0].mxu0 %v2938
        %v3006 = vpop.f32.mrb[0].mxu0
        %v3007 = vadd.f32 %v2935, %v3006
        %v3008 = vpop.f32.mrb[0].mxu0
        %3009 = vdwg.mxu0
        %v3010 = vmax.f32 %v3007, 0.0
        %s3011 = scalar_lea.vmem %s39, 64
        %v3012 = vld [vmem:[%s3011] sm:$0xff]
        %v3013 = vld [vmem:[%s3011 + $0x8] sm:$0xff]
        %v3014 = vld [vmem:[%s3011 + $0x10] sm:$0xff]
        %v3015 = vld [vmem:[%s3011 + $0x18] sm:$0xff]
        %v3016 = vld [vmem:[%s3011 + $0x20] sm:$0xff]
        %v3017 = vld [vmem:[%s3011 + $0x28] sm:$0xff]
        %v3018 = vld [vmem:[%s3011 + $0x30] sm:$0xff]
        %v3019 = vld [vmem:[%s3011 + $0x38] sm:$0xff]
        %s3020 = scalar_lea.vmem [#allocation23], 1
        %v3021 = vld [vmem:[%s3020] sm:$0x1]
        %v3023 = vlaneseq
        %v3024 = vshrl.u32 %v3023, 7
        %v3025 = vsub.s32 0, %v3024
        %v3026 = vrot.slane %v3021, %v3025
        %v3029 = vsel %vm2099, %v3010, 0
        %3031 = vmatprep.subr.mxu0 0.0
        %3032 = vmatpush1.msra.mxu0 %v3012
        %3033 = vmatprep.subr.mxu0 0.0
        %3034 = vmatpush1.msra.mxu0 %v3013
        %3035 = vmatprep.subr.mxu0 0.0
        %3036 = vmatpush1.msra.mxu0 %v3014
        %3037 = vmatprep.subr.mxu0 0.0
        %3038 = vmatpush1.msra.mxu0 %v3015
        %3039 = vmatprep.subr.mxu0 0.0
        %3040 = vmatpush1.msra.mxu0 %v3016
        %3041 = vmatprep.subr.mxu0 0.0
        %3042 = vmatpush1.msra.mxu0 %v3017
        %3043 = vmatprep.subr.mxu0 0.0
        %3044 = vmatpush1.msra.mxu0 %v3018
        %3045 = vmatprep.subr.mxu0 0.0
        %3046 = vmatpush1.msra.mxu0 %v3019
        %3047 = vmatprep.subr.mxu0 0.0
        %3048 = vmatpush1.msra.mxu0 0.0
        %3049 = vmatprep.subr.mxu0 0.0
        %3050 = vmatpush1.msra.mxu0 0.0
        %3051 = vmatprep.subr.mxu0 0.0
        %3052 = vmatpush1.msra.mxu0 0.0
        %3053 = vmatprep.subr.mxu0 0.0
        %3054 = vmatpush1.msra.mxu0 0.0
        %3055 = vmatprep.subr.mxu0 0.0
        %3056 = vmatpush1.msra.mxu0 0.0
        %3057 = vmatprep.subr.mxu0 0.0
        %3058 = vmatpush1.msra.mxu0 0.0
        %3059 = vmatprep.subr.mxu0 0.0
        %3060 = vmatpush1.msra.mxu0 0.0
        %3061 = vmatprep.subr.mxu0 0.0
        %3062 = vmatpush1.msra.mxu0 0.0
        %3063 = vmatprep.subr.mxu0 0.0
        %3064 = vmatpush1.msra.mxu0 0.0
        %3065 = vmatprep.subr.mxu0 0.0
        %3066 = vmatpush1.msra.mxu0 0.0
        %3067 = vmatprep.subr.mxu0 0.0
        %3068 = vmatpush1.msra.mxu0 0.0
        %3069 = vmatprep.subr.mxu0 0.0
        %3070 = vmatpush1.msra.mxu0 0.0
        %3071 = vmatprep.subr.mxu0 0.0
        %3072 = vmatpush1.msra.mxu0 0.0
        %3073 = vmatprep.subr.mxu0 0.0
        %3074 = vmatpush1.msra.mxu0 0.0
        %3075 = vmatprep.subr.mxu0 0.0
        %3076 = vmatpush1.msra.mxu0 0.0
        %3077 = vmatprep.subr.mxu0 0.0
        %3078 = vmatpush1.msra.mxu0 0.0
        %3079 = vmatprep.subr.mxu0 0.0
        %3080 = vmatpush1.msra.mxu0 0.0
        %3081 = vmatprep.subr.mxu0 0.0
        %3082 = vmatpush1.msra.mxu0 0.0
        %3083 = vmatprep.subr.mxu0 0.0
        %3084 = vmatpush1.msra.mxu0 0.0
        %3085 = vmatprep.subr.mxu0 0.0
        %3086 = vmatpush1.msra.mxu0 0.0
        %3087 = vmatprep.subr.mxu0 0.0
        %3088 = vmatpush1.msra.mxu0 0.0
        %3089 = vmatprep.subr.mxu0 0.0
        %3090 = vmatpush1.msra.mxu0 0.0
        %3091 = vmatprep.subr.mxu0 0.0
        %3092 = vmatpush1.msra.mxu0 0.0
        %3093 = vmatprep.subr.mxu0 0.0
        %3094 = vmatpush1.msra.mxu0 0.0
        %3095 = vmatprep.mubr.f32.mxu0 0.0
        %3096 = vmatmul.mubr.f32.gmra.mrb[0].mxu0 %v3029
        %v3097 = vpop.f32.mrb[0].mxu0
        %v3098 = vadd.f32 %v3026, %v3097
        %v3099 = vpop.f32.mrb[0].mxu0
        %3100 = vdwg.mxu0
        %v3101 = vadd.f32 %v2885, %v3098
        %s3102 = scalar_lea.vmem [#allocation8], 2
        %v3103 = vld [vmem:[%s3102] sm:$0x1]
        %s3104 = scalar_lea.vmem [#allocation9], 2
        %v3105 = vld [vmem:[%s3104] sm:$0x1]
        %v3106 = vsel %vm1258, %v3101, 0.0
        %3107 = vadd.xlane.f32.xlu0 %v3106
        %v3108 = vpop.xlane.xlu0 %3107
        %v3109 = vmul.f32 %v3108, %v1262
        %v3110 = vsub.f32 %v3101, %v3109
        %v3111 = vmul.f32 %v3110, %v3110
        %v3112 = vsel %vm1258, %v3111, 0.0
        %3113 = vadd.xlane.f32.xlu0 %v3112
        %v3114 = vpop.xlane.xlu0 %3113
        %v3115 = vmul.f32 %v3114, %v1269
        %v3117 = vlaneseq
        %v3118 = vshrl.u32 %v3117, 7
        %v3119 = vsub.s32 0, %v3118
        %v3120 = vrot.slane %v3103, %v3119
        %v3122 = vmul.f32 %v3120, %v3110
        %v3123 = vrsqrt.pop %v3115
        %v3124 = vmul.f32 %v3115, %v3123
        %vm3125 = vcmp.eq.f32.partialorder %v3115, inf
        %v3126 = vsel %vm3125, %v3115, %v3124
        %vm3127 = vcmp.eq.f32.partialorder %v3115, 0.0
        %v3128 = vand.u32 %v3115, 2147483648
        %v3129 = vsel %vm3127, %v3128, %v3126
        %v3130 = vadd.f32 %v3129, 1e-06
        %v3131 = vrcp.pop %v3130
        %v3132 = vmul.f32 %v3122, %v3131
        %v3134 = vlaneseq
        %v3135 = vshrl.u32 %v3134, 7
        %v3136 = vsub.s32 0, %v3135
        %v3137 = vrot.slane %v3105, %v3136
        %v3139 = vadd.f32 %v3132, %v3137
        %s3140 = scalar_lea.vmem %s15, 64
        %v3141 = vld [vmem:[%s3140] sm:$0xff]
        %v3142 = vld [vmem:[%s3140 + $0x8] sm:$0xff]
        %v3143 = vld [vmem:[%s3140 + $0x10] sm:$0xff]
        %v3144 = vld [vmem:[%s3140 + $0x18] sm:$0xff]
        %s3145 = scalar_lea.vmem [#allocation11], 2
        %v3146 = vld [vmem:[%s3145] sm:$0x1]
        %v3148 = vlaneseq
        %v3149 = vshrl.u32 %v3148, 7
        %v3150 = vsub.s32 0, %v3149
        %v3151 = vrot.slane %v3146, %v3150
        %v3154 = vsel %vm1258, %v3139, 0
        %3156 = vmatprep.subr.mxu0 0.0
        %3157 = vmatpush1.msra.mxu0 %v3141
        %3158 = vmatprep.subr.mxu0 0.0
        %3159 = vmatpush1.msra.mxu0 %v3142
        %3160 = vmatprep.subr.mxu0 0.0
        %3161 = vmatpush1.msra.mxu0 %v3143
        %3162 = vmatprep.subr.mxu0 0.0
        %3163 = vmatpush1.msra.mxu0 %v3144
        %3164 = vmatprep.subr.mxu0 0.0
        %3165 = vmatpush1.msra.mxu0 0.0
        %3166 = vmatprep.subr.mxu0 0.0
        %3167 = vmatpush1.msra.mxu0 0.0
        %3168 = vmatprep.subr.mxu0 0.0
        %3169 = vmatpush1.msra.mxu0 0.0
        %3170 = vmatprep.subr.mxu0 0.0
        %3171 = vmatpush1.msra.mxu0 0.0
        %3172 = vmatprep.subr.mxu0 0.0
        %3173 = vmatpush1.msra.mxu0 0.0
        %3174 = vmatprep.subr.mxu0 0.0
        %3175 = vmatpush1.msra.mxu0 0.0
        %3176 = vmatprep.subr.mxu0 0.0
        %3177 = vmatpush1.msra.mxu0 0.0
        %3178 = vmatprep.subr.mxu0 0.0
        %3179 = vmatpush1.msra.mxu0 0.0
        %3180 = vmatprep.subr.mxu0 0.0
        %3181 = vmatpush1.msra.mxu0 0.0
        %3182 = vmatprep.subr.mxu0 0.0
        %3183 = vmatpush1.msra.mxu0 0.0
        %3184 = vmatprep.subr.mxu0 0.0
        %3185 = vmatpush1.msra.mxu0 0.0
        %3186 = vmatprep.subr.mxu0 0.0
        %3187 = vmatpush1.msra.mxu0 0.0
        %3188 = vmatprep.subr.mxu0 0.0
        %3189 = vmatpush1.msra.mxu0 0.0
        %3190 = vmatprep.subr.mxu0 0.0
        %3191 = vmatpush1.msra.mxu0 0.0
        %3192 = vmatprep.subr.mxu0 0.0
        %3193 = vmatpush1.msra.mxu0 0.0
        %3194 = vmatprep.subr.mxu0 0.0
        %3195 = vmatpush1.msra.mxu0 0.0
        %3196 = vmatprep.subr.mxu0 0.0
        %3197 = vmatpush1.msra.mxu0 0.0
        %3198 = vmatprep.subr.mxu0 0.0
        %3199 = vmatpush1.msra.mxu0 0.0
        %3200 = vmatprep.subr.mxu0 0.0
        %3201 = vmatpush1.msra.mxu0 0.0
        %3202 = vmatprep.subr.mxu0 0.0
        %3203 = vmatpush1.msra.mxu0 0.0
        %3204 = vmatprep.subr.mxu0 0.0
        %3205 = vmatpush1.msra.mxu0 0.0
        %3206 = vmatprep.subr.mxu0 0.0
        %3207 = vmatpush1.msra.mxu0 0.0
        %3208 = vmatprep.subr.mxu0 0.0
        %3209 = vmatpush1.msra.mxu0 0.0
        %3210 = vmatprep.subr.mxu0 0.0
        %3211 = vmatpush1.msra.mxu0 0.0
        %3212 = vmatprep.subr.mxu0 0.0
        %3213 = vmatpush1.msra.mxu0 0.0
        %3214 = vmatprep.subr.mxu0 0.0
        %3215 = vmatpush1.msra.mxu0 0.0
        %3216 = vmatprep.subr.mxu0 0.0
        %3217 = vmatpush1.msra.mxu0 0.0
        %3218 = vmatprep.subr.mxu0 0.0
        %3219 = vmatpush1.msra.mxu0 0.0
        %3220 = vmatprep.mubr.f32.mxu0 0.0
        %3221 = vmatmul.mubr.f32.gmra.mrb[0].mxu0 %v3154
        %v3222 = vpop.f32.mrb[0].mxu0
        %v3223 = vadd.f32 %v3151, %v3222
        %v3224 = vpop.f32.mrb[0].mxu0
        %3225 = vdwg.mxu0
        %s3226 = scalar_lea.vmem %s19, 64
        %v3227 = vld [vmem:[%s3226] sm:$0xff]
        %v3228 = vld [vmem:[%s3226 + $0x8] sm:$0xff]
        %v3229 = vld [vmem:[%s3226 + $0x10] sm:$0xff]
        %v3230 = vld [vmem:[%s3226 + $0x18] sm:$0xff]
        %s3231 = scalar_lea.vmem [#allocation12], 2
        %v3232 = vld [vmem:[%s3231] sm:$0x1]
        %v3234 = vlaneseq
        %v3235 = vshrl.u32 %v3234, 7
        %v3236 = vsub.s32 0, %v3235
        %v3237 = vrot.slane %v3232, %v3236
        %3239 = vmatprep.subr.mxu0 0.0
        %3240 = vmatpush1.msra.mxu0 %v3227
        %3241 = vmatprep.subr.mxu0 0.0
        %3242 = vmatpush1.msra.mxu0 %v3228
        %3243 = vmatprep.subr.mxu0 0.0
        %3244 = vmatpush1.msra.mxu0 %v3229
        %3245 = vmatprep.subr.mxu0 0.0
        %3246 = vmatpush1.msra.mxu0 %v3230
        %3247 = vmatprep.subr.mxu0 0.0
        %3248 = vmatpush1.msra.mxu0 0.0
        %3249 = vmatprep.subr.mxu0 0.0
        %3250 = vmatpush1.msra.mxu0 0.0
        %3251 = vmatprep.subr.mxu0 0.0
        %3252 = vmatpush1.msra.mxu0 0.0
        %3253 = vmatprep.subr.mxu0 0.0
        %3254 = vmatpush1.msra.mxu0 0.0
        %3255 = vmatprep.subr.mxu0 0.0
        %3256 = vmatpush1.msra.mxu0 0.0
        %3257 = vmatprep.subr.mxu0 0.0
        %3258 = vmatpush1.msra.mxu0 0.0
        %3259 = vmatprep.subr.mxu0 0.0
        %3260 = vmatpush1.msra.mxu0 0.0
        %3261 = vmatprep.subr.mxu0 0.0
        %3262 = vmatpush1.msra.mxu0 0.0
        %3263 = vmatprep.subr.mxu0 0.0
        %3264 = vmatpush1.msra.mxu0 0.0
        %3265 = vmatprep.subr.mxu0 0.0
        %3266 = vmatpush1.msra.mxu0 0.0
        %3267 = vmatprep.subr.mxu0 0.0
        %3268 = vmatpush1.msra.mxu0 0.0
        %3269 = vmatprep.subr.mxu0 0.0
        %3270 = vmatpush1.msra.mxu0 0.0
        %3271 = vmatprep.subr.mxu0 0.0
        %3272 = vmatpush1.msra.mxu0 0.0
        %3273 = vmatprep.subr.mxu0 0.0
        %3274 = vmatpush1.msra.mxu0 0.0
        %3275 = vmatprep.subr.mxu0 0.0
        %3276 = vmatpush1.msra.mxu0 0.0
        %3277 = vmatprep.subr.mxu0 0.0
        %3278 = vmatpush1.msra.mxu0 0.0
        %3279 = vmatprep.subr.mxu0 0.0
        %3280 = vmatpush1.msra.mxu0 0.0
        %3281 = vmatprep.subr.mxu0 0.0
        %3282 = vmatpush1.msra.mxu0 0.0
        %3283 = vmatprep.subr.mxu0 0.0
        %3284 = vmatpush1.msra.mxu0 0.0
        %3285 = vmatprep.subr.mxu0 0.0
        %3286 = vmatpush1.msra.mxu0 0.0
        %3287 = vmatprep.subr.mxu0 0.0
        %3288 = vmatpush1.msra.mxu0 0.0
        %3289 = vmatprep.subr.mxu0 0.0
        %3290 = vmatpush1.msra.mxu0 0.0
        %3291 = vmatprep.subr.mxu0 0.0
        %3292 = vmatpush1.msra.mxu0 0.0
        %3293 = vmatprep.subr.mxu0 0.0
        %3294 = vmatpush1.msra.mxu0 0.0
        %3295 = vmatprep.subr.mxu0 0.0
        %3296 = vmatpush1.msra.mxu0 0.0
        %3297 = vmatprep.subr.mxu0 0.0
        %3298 = vmatpush1.msra.mxu0 0.0
        %3299 = vmatprep.subr.mxu0 0.0
        %3300 = vmatpush1.msra.mxu0 0.0
        %3301 = vmatprep.subr.mxu0 0.0
        %3302 = vmatpush1.msra.mxu0 0.0
        %3303 = vmatprep.mubr.f32.mxu0 0.0
        %3304 = vmatmul.mubr.f32.gmra.mrb[0].mxu0 %v3154
        %v3305 = vpop.f32.mrb[0].mxu0
        %v3306 = vadd.f32 %v3237, %v3305
        %v3307 = vpop.f32.mrb[0].mxu0
        %3308 = vdwg.mxu0
        %s3309 = scalar_lea.vmem %s23, 64
        %v3310 = vld [vmem:[%s3309] sm:$0xff]
        %v3311 = vld [vmem:[%s3309 + $0x8] sm:$0xff]
        %v3312 = vld [vmem:[%s3309 + $0x10] sm:$0xff]
        %v3313 = vld [vmem:[%s3309 + $0x18] sm:$0xff]
        %s3314 = scalar_lea.vmem [#allocation14], 2
        %v3315 = vld [vmem:[%s3314] sm:$0x1]
        %v3317 = vlaneseq
        %v3318 = vshrl.u32 %v3317, 7
        %v3319 = vsub.s32 0, %v3318
        %v3320 = vrot.slane %v3315, %v3319
        %3322 = vmatprep.subr.mxu0 0.0
        %3323 = vmatpush1.msra.mxu0 %v3310
        %3324 = vmatprep.subr.mxu0 0.0
        %3325 = vmatpush1.msra.mxu0 %v3311
        %3326 = vmatprep.subr.mxu0 0.0
        %3327 = vmatpush1.msra.mxu0 %v3312
        %3328 = vmatprep.subr.mxu0 0.0
        %3329 = vmatpush1.msra.mxu0 %v3313
        %3330 = vmatprep.subr.mxu0 0.0
        %3331 = vmatpush1.msra.mxu0 0.0
        %3332 = vmatprep.subr.mxu0 0.0
        %3333 = vmatpush1.msra.mxu0 0.0
        %3334 = vmatprep.subr.mxu0 0.0
        %3335 = vmatpush1.msra.mxu0 0.0
        %3336 = vmatprep.subr.mxu0 0.0
        %3337 = vmatpush1.msra.mxu0 0.0
        %3338 = vmatprep.subr.mxu0 0.0
        %3339 = vmatpush1.msra.mxu0 0.0
        %3340 = vmatprep.subr.mxu0 0.0
        %3341 = vmatpush1.msra.mxu0 0.0
        %3342 = vmatprep.subr.mxu0 0.0
        %3343 = vmatpush1.msra.mxu0 0.0
        %3344 = vmatprep.subr.mxu0 0.0
        %3345 = vmatpush1.msra.mxu0 0.0
        %3346 = vmatprep.subr.mxu0 0.0
        %3347 = vmatpush1.msra.mxu0 0.0
        %3348 = vmatprep.subr.mxu0 0.0
        %3349 = vmatpush1.msra.mxu0 0.0
        %3350 = vmatprep.subr.mxu0 0.0
        %3351 = vmatpush1.msra.mxu0 0.0
        %3352 = vmatprep.subr.mxu0 0.0
        %3353 = vmatpush1.msra.mxu0 0.0
        %3354 = vmatprep.subr.mxu0 0.0
        %3355 = vmatpush1.msra.mxu0 0.0
        %3356 = vmatprep.subr.mxu0 0.0
        %3357 = vmatpush1.msra.mxu0 0.0
        %3358 = vmatprep.subr.mxu0 0.0
        %3359 = vmatpush1.msra.mxu0 0.0
        %3360 = vmatprep.subr.mxu0 0.0
        %3361 = vmatpush1.msra.mxu0 0.0
        %3362 = vmatprep.subr.mxu0 0.0
        %3363 = vmatpush1.msra.mxu0 0.0
        %3364 = vmatprep.subr.mxu0 0.0
        %3365 = vmatpush1.msra.mxu0 0.0
        %3366 = vmatprep.subr.mxu0 0.0
        %3367 = vmatpush1.msra.mxu0 0.0
        %3368 = vmatprep.subr.mxu0 0.0
        %3369 = vmatpush1.msra.mxu0 0.0
        %3370 = vmatprep.subr.mxu0 0.0
        %3371 = vmatpush1.msra.mxu0 0.0
        %3372 = vmatprep.subr.mxu0 0.0
        %3373 = vmatpush1.msra.mxu0 0.0
        %3374 = vmatprep.subr.mxu0 0.0
        %3375 = vmatpush1.msra.mxu0 0.0
        %3376 = vmatprep.subr.mxu0 0.0
        %3377 = vmatpush1.msra.mxu0 0.0
        %3378 = vmatprep.subr.mxu0 0.0
        %3379 = vmatpush1.msra.mxu0 0.0
        %3380 = vmatprep.subr.mxu0 0.0
        %3381 = vmatpush1.msra.mxu0 0.0
        %3382 = vmatprep.subr.mxu0 0.0
        %3383 = vmatpush1.msra.mxu0 0.0
        %3384 = vmatprep.subr.mxu0 0.0
        %3385 = vmatpush1.msra.mxu0 0.0
        %3386 = vmatprep.mubr.f32.mxu0 0.0
        %3387 = vmatmul.mubr.f32.gmra.mrb[0].mxu0 %v3154
        %v3388 = vpop.f32.mrb[0].mxu0
        %v3389 = vadd.f32 %v3320, %v3388
        %v3390 = vpop.f32.mrb[0].mxu0
        %3391 = vdwg.mxu0
        %v3393 = vsel %vm1541, %v3223, 0
        %v3396 = vsel %vm1541, %v3306, 0
        %3398 = vmatprep.subr.mxu0 0.0
        %3399 = vmatpush1.xpose.msra.mxu0 %v3396
        %3400 = vmatprep.subr.mxu0 0.0
        %3401 = vmatpush1.xpose.msra.mxu0 0.0
        %3402 = vmatprep.subr.mxu0 0.0
        %3403 = vmatpush1.xpose.msra.mxu0 0.0
        %3404 = vmatprep.subr.mxu0 0.0
        %3405 = vmatpush1.xpose.msra.mxu0 0.0
        %3406 = vmatprep.subr.mxu0 0.0
        %3407 = vmatpush1.xpose.msra.mxu0 0.0
        %3408 = vmatprep.subr.mxu0 0.0
        %3409 = vmatpush1.xpose.msra.mxu0 0.0
        %3410 = vmatprep.subr.mxu0 0.0
        %3411 = vmatpush1.xpose.msra.mxu0 0.0
        %3412 = vmatprep.subr.mxu0 0.0
        %3413 = vmatpush1.xpose.msra.mxu0 0.0
        %3414 = vmatprep.subr.mxu0 0.0
        %3415 = vmatpush1.xpose.msra.mxu0 0.0
        %3416 = vmatprep.subr.mxu0 0.0
        %3417 = vmatpush1.xpose.msra.mxu0 0.0
        %3418 = vmatprep.subr.mxu0 0.0
        %3419 = vmatpush1.xpose.msra.mxu0 0.0
        %3420 = vmatprep.subr.mxu0 0.0
        %3421 = vmatpush1.xpose.msra.mxu0 0.0
        %3422 = vmatprep.subr.mxu0 0.0
        %3423 = vmatpush1.xpose.msra.mxu0 0.0
        %3424 = vmatprep.subr.mxu0 0.0
        %3425 = vmatpush1.xpose.msra.mxu0 0.0
        %3426 = vmatprep.subr.mxu0 0.0
        %3427 = vmatpush1.xpose.msra.mxu0 0.0
        %3428 = vmatprep.subr.mxu0 0.0
        %3429 = vmatpush1.xpose.msra.mxu0 0.0
        %3430 = vmatprep.subr.mxu0 0.0
        %3431 = vmatpush1.xpose.msra.mxu0 0.0
        %3432 = vmatprep.subr.mxu0 0.0
        %3433 = vmatpush1.xpose.msra.mxu0 0.0
        %3434 = vmatprep.subr.mxu0 0.0
        %3435 = vmatpush1.xpose.msra.mxu0 0.0
        %3436 = vmatprep.subr.mxu0 0.0
        %3437 = vmatpush1.xpose.msra.mxu0 0.0
        %3438 = vmatprep.subr.mxu0 0.0
        %3439 = vmatpush1.xpose.msra.mxu0 0.0
        %3440 = vmatprep.subr.mxu0 0.0
        %3441 = vmatpush1.xpose.msra.mxu0 0.0
        %3442 = vmatprep.subr.mxu0 0.0
        %3443 = vmatpush1.xpose.msra.mxu0 0.0
        %3444 = vmatprep.subr.mxu0 0.0
        %3445 = vmatpush1.xpose.msra.mxu0 0.0
        %3446 = vmatprep.subr.mxu0 0.0
        %3447 = vmatpush1.xpose.msra.mxu0 0.0
        %3448 = vmatprep.subr.mxu0 0.0
        %3449 = vmatpush1.xpose.msra.mxu0 0.0
        %3450 = vmatprep.subr.mxu0 0.0
        %3451 = vmatpush1.xpose.msra.mxu0 0.0
        %3452 = vmatprep.subr.mxu0 0.0
        %3453 = vmatpush1.xpose.msra.mxu0 0.0
        %3454 = vmatprep.subr.mxu0 0.0
        %3455 = vmatpush1.xpose.msra.mxu0 0.0
        %3456 = vmatprep.subr.mxu0 0.0
        %3457 = vmatpush1.xpose.msra.mxu0 0.0
        %3458 = vmatprep.subr.mxu0 0.0
        %3459 = vmatpush1.xpose.msra.mxu0 0.0
        %3460 = vmatprep.subr.mxu0 0.0
        %3461 = vmatpush1.xpose.msra.mxu0 0.0
        %3462 = vmatprep.mubr.f32.mxu0 0.0
        %3463 = vmatmul.mubr.f32.gmra.mrb[0].mxu0 %v3393
        %v3464 = vpop.f32.mrb[0].mxu0
        %v3465 = vadd.f32 0.0, %v3464
        %v3466 = vpop.f32.mrb[0].mxu0
        %3467 = vdwg.mxu0
        %v3468 = vmul.f32 %v3465, 0.25
        %v3469 = vsel %vm1162, %v3468, -1e+09
        %v3470 = vsel %vm1620, %v3469, -inf
        %3471 = vmax.xlane.f32.xlu0 %v3470
        %v3472 = vpop.xlane.xlu0 %3471
        %v3473 = vsub.f32 %v3469, %v3472
        %v3474 = vmul.f32 %v3473, 1.442695
        %v3475 = vpow.pop %v3474
        %v3476 = vsel %vm1620, %v3475, 0.0
        %3477 = vadd.xlane.f32.xlu0 %v3476
        %v3478 = vpop.xlane.xlu0 %3477
        %v3479 = vrcp.pop %v3478
        %v3480 = vmul.f32 %v3475, %v3479
        %v3482 = vsel %vm1620, %v3480, 0
        %3484 = vmatprep.subr.mxu0 0.0
        %3485 = vmatpush1.msra.mxu0 %v3389
        %3486 = vmatprep.subr.mxu0 0.0
        %3487 = vmatpush1.msra.mxu0 0.0
        %3488 = vmatprep.subr.mxu0 0.0
        %3489 = vmatpush1.msra.mxu0 0.0
        %3490 = vmatprep.subr.mxu0 0.0
        %3491 = vmatpush1.msra.mxu0 0.0
        %3492 = vmatprep.subr.mxu0 0.0
        %3493 = vmatpush1.msra.mxu0 0.0
        %3494 = vmatprep.subr.mxu0 0.0
        %3495 = vmatpush1.msra.mxu0 0.0
        %3496 = vmatprep.subr.mxu0 0.0
        %3497 = vmatpush1.msra.mxu0 0.0
        %3498 = vmatprep.subr.mxu0 0.0
        %3499 = vmatpush1.msra.mxu0 0.0
        %3500 = vmatprep.subr.mxu0 0.0
        %3501 = vmatpush1.msra.mxu0 0.0
        %3502 = vmatprep.subr.mxu0 0.0
        %3503 = vmatpush1.msra.mxu0 0.0
        %3504 = vmatprep.subr.mxu0 0.0
        %3505 = vmatpush1.msra.mxu0 0.0
        %3506 = vmatprep.subr.mxu0 0.0
        %3507 = vmatpush1.msra.mxu0 0.0
        %3508 = vmatprep.subr.mxu0 0.0
        %3509 = vmatpush1.msra.mxu0 0.0
        %3510 = vmatprep.subr.mxu0 0.0
        %3511 = vmatpush1.msra.mxu0 0.0
        %3512 = vmatprep.subr.mxu0 0.0
        %3513 = vmatpush1.msra.mxu0 0.0
        %3514 = vmatprep.subr.mxu0 0.0
        %3515 = vmatpush1.msra.mxu0 0.0
        %3516 = vmatprep.subr.mxu0 0.0
        %3517 = vmatpush1.msra.mxu0 0.0
        %3518 = vmatprep.subr.mxu0 0.0
        %3519 = vmatpush1.msra.mxu0 0.0
        %3520 = vmatprep.subr.mxu0 0.0
        %3521 = vmatpush1.msra.mxu0 0.0
        %3522 = vmatprep.subr.mxu0 0.0
        %3523 = vmatpush1.msra.mxu0 0.0
        %3524 = vmatprep.subr.mxu0 0.0
        %3525 = vmatpush1.msra.mxu0 0.0
        %3526 = vmatprep.subr.mxu0 0.0
        %3527 = vmatpush1.msra.mxu0 0.0
        %3528 = vmatprep.subr.mxu0 0.0
        %3529 = vmatpush1.msra.mxu0 0.0
        %3530 = vmatprep.subr.mxu0 0.0
        %3531 = vmatpush1.msra.mxu0 0.0
        %3532 = vmatprep.subr.mxu0 0.0
        %3533 = vmatpush1.msra.mxu0 0.0
        %3534 = vmatprep.subr.mxu0 0.0
        %3535 = vmatpush1.msra.mxu0 0.0
        %3536 = vmatprep.subr.mxu0 0.0
        %3537 = vmatpush1.msra.mxu0 0.0
        %3538 = vmatprep.subr.mxu0 0.0
        %3539 = vmatpush1.msra.mxu0 0.0
        %3540 = vmatprep.subr.mxu0 0.0
        %3541 = vmatpush1.msra.mxu0 0.0
        %3542 = vmatprep.subr.mxu0 0.0
        %3543 = vmatpush1.msra.mxu0 0.0
        %3544 = vmatprep.subr.mxu0 0.0
        %3545 = vmatpush1.msra.mxu0 0.0
        %3546 = vmatprep.subr.mxu0 0.0
        %3547 = vmatpush1.msra.mxu0 0.0
        %3548 = vmatprep.mubr.f32.mxu0 0.0
        %3549 = vmatmul.mubr.f32.gmra.mrb[0].mxu0 %v3482
        %v3550 = vpop.f32.mrb[0].mxu0
        %v3551 = vadd.f32 0.0, %v3550
        %v3552 = vpop.f32.mrb[0].mxu0
        %3553 = vdwg.mxu0
        %3554 = vrot.lane.b32.xlu0 %v3223, 112
        %v3555 = vpop.permute.xlu0 %3554
        %3556 = vrot.lane.b32.xlu0 %v3306, 112
        %v3557 = vpop.permute.xlu0 %3556
        %v3558 = vsel %vm1541, %v3555, 0
        %v3560 = vsel %vm1541, %v3557, 0
        %3562 = vmatprep.subr.mxu0 0.0
        %3563 = vmatpush1.xpose.msra.mxu0 %v3560
        %3564 = vmatprep.subr.mxu0 0.0
        %3565 = vmatpush1.xpose.msra.mxu0 0.0
        %3566 = vmatprep.subr.mxu0 0.0
        %3567 = vmatpush1.xpose.msra.mxu0 0.0
        %3568 = vmatprep.subr.mxu0 0.0
        %3569 = vmatpush1.xpose.msra.mxu0 0.0
        %3570 = vmatprep.subr.mxu0 0.0
        %3571 = vmatpush1.xpose.msra.mxu0 0.0
        %3572 = vmatprep.subr.mxu0 0.0
        %3573 = vmatpush1.xpose.msra.mxu0 0.0
        %3574 = vmatprep.subr.mxu0 0.0
        %3575 = vmatpush1.xpose.msra.mxu0 0.0
        %3576 = vmatprep.subr.mxu0 0.0
        %3577 = vmatpush1.xpose.msra.mxu0 0.0
        %3578 = vmatprep.subr.mxu0 0.0
        %3579 = vmatpush1.xpose.msra.mxu0 0.0
        %3580 = vmatprep.subr.mxu0 0.0
        %3581 = vmatpush1.xpose.msra.mxu0 0.0
        %3582 = vmatprep.subr.mxu0 0.0
        %3583 = vmatpush1.xpose.msra.mxu0 0.0
        %3584 = vmatprep.subr.mxu0 0.0
        %3585 = vmatpush1.xpose.msra.mxu0 0.0
        %3586 = vmatprep.subr.mxu0 0.0
        %3587 = vmatpush1.xpose.msra.mxu0 0.0
        %3588 = vmatprep.subr.mxu0 0.0
        %3589 = vmatpush1.xpose.msra.mxu0 0.0
        %3590 = vmatprep.subr.mxu0 0.0
        %3591 = vmatpush1.xpose.msra.mxu0 0.0
        %3592 = vmatprep.subr.mxu0 0.0
        %3593 = vmatpush1.xpose.msra.mxu0 0.0
        %3594 = vmatprep.subr.mxu0 0.0
        %3595 = vmatpush1.xpose.msra.mxu0 0.0
        %3596 = vmatprep.subr.mxu0 0.0
        %3597 = vmatpush1.xpose.msra.mxu0 0.0
        %3598 = vmatprep.subr.mxu0 0.0
        %3599 = vmatpush1.xpose.msra.mxu0 0.0
        %3600 = vmatprep.subr.mxu0 0.0
        %3601 = vmatpush1.xpose.msra.mxu0 0.0
        %3602 = vmatprep.subr.mxu0 0.0
        %3603 = vmatpush1.xpose.msra.mxu0 0.0
        %3604 = vmatprep.subr.mxu0 0.0
        %3605 = vmatpush1.xpose.msra.mxu0 0.0
        %3606 = vmatprep.subr.mxu0 0.0
        %3607 = vmatpush1.xpose.msra.mxu0 0.0
        %3608 = vmatprep.subr.mxu0 0.0
        %3609 = vmatpush1.xpose.msra.mxu0 0.0
        %3610 = vmatprep.subr.mxu0 0.0
        %3611 = vmatpush1.xpose.msra.mxu0 0.0
        %3612 = vmatprep.subr.mxu0 0.0
        %3613 = vmatpush1.xpose.msra.mxu0 0.0
        %3614 = vmatprep.subr.mxu0 0.0
        %3615 = vmatpush1.xpose.msra.mxu0 0.0
        %3616 = vmatprep.subr.mxu0 0.0
        %3617 = vmatpush1.xpose.msra.mxu0 0.0
        %3618 = vmatprep.subr.mxu0 0.0
        %3619 = vmatpush1.xpose.msra.mxu0 0.0
        %3620 = vmatprep.subr.mxu0 0.0
        %3621 = vmatpush1.xpose.msra.mxu0 0.0
        %3622 = vmatprep.subr.mxu0 0.0
        %3623 = vmatpush1.xpose.msra.mxu0 0.0
        %3624 = vmatprep.subr.mxu0 0.0
        %3625 = vmatpush1.xpose.msra.mxu0 0.0
        %3626 = vmatprep.mubr.f32.mxu0 0.0
        %3627 = vmatmul.mubr.f32.gmra.mrb[0].mxu0 %v3558
        %v3628 = vpop.f32.mrb[0].mxu0
        %v3629 = vadd.f32 0.0, %v3628
        %v3630 = vpop.f32.mrb[0].mxu0
        %3631 = vdwg.mxu0
        %v3632 = vmul.f32 %v3629, 0.25
        %v3633 = vsel %vm1162, %v3632, -1e+09
        %v3634 = vsel %vm1620, %v3633, -inf
        %3635 = vmax.xlane.f32.xlu0 %v3634
        %v3636 = vpop.xlane.xlu0 %3635
        %v3637 = vsub.f32 %v3633, %v3636
        %v3638 = vmul.f32 %v3637, 1.442695
        %v3639 = vpow.pop %v3638
        %v3640 = vsel %vm1620, %v3639, 0.0
        %3641 = vadd.xlane.f32.xlu0 %v3640
        %v3642 = vpop.xlane.xlu0 %3641
        %v3643 = vrcp.pop %v3642
        %v3644 = vmul.f32 %v3639, %v3643
        %3646 = vrot.lane.b32.xlu0 %v3389, 112
        %v3647 = vpop.permute.xlu0 %3646
        %v3650 = vsel %vm1620, %v3644, 0
        %3652 = vmatprep.subr.mxu0 0.0
        %3653 = vmatpush1.msra.mxu0 %v3647
        %3654 = vmatprep.subr.mxu0 0.0
        %3655 = vmatpush1.msra.mxu0 0.0
        %3656 = vmatprep.subr.mxu0 0.0
        %3657 = vmatpush1.msra.mxu0 0.0
        %3658 = vmatprep.subr.mxu0 0.0
        %3659 = vmatpush1.msra.mxu0 0.0
        %3660 = vmatprep.subr.mxu0 0.0
        %3661 = vmatpush1.msra.mxu0 0.0
        %3662 = vmatprep.subr.mxu0 0.0
        %3663 = vmatpush1.msra.mxu0 0.0
        %3664 = vmatprep.subr.mxu0 0.0
        %3665 = vmatpush1.msra.mxu0 0.0
        %3666 = vmatprep.subr.mxu0 0.0
        %3667 = vmatpush1.msra.mxu0 0.0
        %3668 = vmatprep.subr.mxu0 0.0
        %3669 = vmatpush1.msra.mxu0 0.0
        %3670 = vmatprep.subr.mxu0 0.0
        %3671 = vmatpush1.msra.mxu0 0.0
        %3672 = vmatprep.subr.mxu0 0.0
        %3673 = vmatpush1.msra.mxu0 0.0
        %3674 = vmatprep.subr.mxu0 0.0
        %3675 = vmatpush1.msra.mxu0 0.0
        %3676 = vmatprep.subr.mxu0 0.0
        %3677 = vmatpush1.msra.mxu0 0.0
        %3678 = vmatprep.subr.mxu0 0.0
        %3679 = vmatpush1.msra.mxu0 0.0
        %3680 = vmatprep.subr.mxu0 0.0
        %3681 = vmatpush1.msra.mxu0 0.0
        %3682 = vmatprep.subr.mxu0 0.0
        %3683 = vmatpush1.msra.mxu0 0.0
        %3684 = vmatprep.subr.mxu0 0.0
        %3685 = vmatpush1.msra.mxu0 0.0
        %3686 = vmatprep.subr.mxu0 0.0
        %3687 = vmatpush1.msra.mxu0 0.0
        %3688 = vmatprep.subr.mxu0 0.0
        %3689 = vmatpush1.msra.mxu0 0.0
        %3690 = vmatprep.subr.mxu0 0.0
        %3691 = vmatpush1.msra.mxu0 0.0
        %3692 = vmatprep.subr.mxu0 0.0
        %3693 = vmatpush1.msra.mxu0 0.0
        %3694 = vmatprep.subr.mxu0 0.0
        %3695 = vmatpush1.msra.mxu0 0.0
        %3696 = vmatprep.subr.mxu0 0.0
        %3697 = vmatpush1.msra.mxu0 0.0
        %3698 = vmatprep.subr.mxu0 0.0
        %3699 = vmatpush1.msra.mxu0 0.0
        %3700 = vmatprep.subr.mxu0 0.0
        %3701 = vmatpush1.msra.mxu0 0.0
        %3702 = vmatprep.subr.mxu0 0.0
        %3703 = vmatpush1.msra.mxu0 0.0
        %3704 = vmatprep.subr.mxu0 0.0
        %3705 = vmatpush1.msra.mxu0 0.0
        %3706 = vmatprep.subr.mxu0 0.0
        %3707 = vmatpush1.msra.mxu0 0.0
        %3708 = vmatprep.subr.mxu0 0.0
        %3709 = vmatpush1.msra.mxu0 0.0
        %3710 = vmatprep.subr.mxu0 0.0
        %3711 = vmatpush1.msra.mxu0 0.0
        %3712 = vmatprep.subr.mxu0 0.0
        %3713 = vmatpush1.msra.mxu0 0.0
        %3714 = vmatprep.subr.mxu0 0.0
        %3715 = vmatpush1.msra.mxu0 0.0
        %3716 = vmatprep.mubr.f32.mxu0 0.0
        %3717 = vmatmul.mubr.f32.gmra.mrb[0].mxu0 %v3650
        %v3718 = vpop.f32.mrb[0].mxu0
        %v3719 = vadd.f32 0.0, %v3718
        %v3720 = vpop.f32.mrb[0].mxu0
        %3721 = vdwg.mxu0
        %3723 = vrot.lane.b32.xlu0 %v3719, 16
        %v3724 = vpop.permute.xlu0 %3723
        %v3726 = vsel %vm1541, %v3551, %v3724
        %s3727 = scalar_lea.vmem %s27, 64
        %v3728 = vld [vmem:[%s3727] sm:$0xff]
        %v3729 = vld [vmem:[%s3727 + $0x8] sm:$0xff]
        %v3730 = vld [vmem:[%s3727 + $0x10] sm:$0xff]
        %v3731 = vld [vmem:[%s3727 + $0x18] sm:$0xff]
        %s3732 = scalar_lea.vmem [#allocation15], 2
        %v3733 = vld [vmem:[%s3732] sm:$0x1]
        %v3735 = vlaneseq
        %v3736 = vshrl.u32 %v3735, 7
        %v3737 = vsub.s32 0, %v3736
        %v3738 = vrot.slane %v3733, %v3737
        %v3741 = vsel %vm1258, %v3726, 0
        %3743 = vmatprep.subr.mxu0 0.0
        %3744 = vmatpush1.msra.mxu0 %v3728
        %3745 = vmatprep.subr.mxu0 0.0
        %3746 = vmatpush1.msra.mxu0 %v3729
        %3747 = vmatprep.subr.mxu0 0.0
        %3748 = vmatpush1.msra.mxu0 %v3730
        %3749 = vmatprep.subr.mxu0 0.0
        %3750 = vmatpush1.msra.mxu0 %v3731
        %3751 = vmatprep.subr.mxu0 0.0
        %3752 = vmatpush1.msra.mxu0 0.0
        %3753 = vmatprep.subr.mxu0 0.0
        %3754 = vmatpush1.msra.mxu0 0.0
        %3755 = vmatprep.subr.mxu0 0.0
        %3756 = vmatpush1.msra.mxu0 0.0
        %3757 = vmatprep.subr.mxu0 0.0
        %3758 = vmatpush1.msra.mxu0 0.0
        %3759 = vmatprep.subr.mxu0 0.0
        %3760 = vmatpush1.msra.mxu0 0.0
        %3761 = vmatprep.subr.mxu0 0.0
        %3762 = vmatpush1.msra.mxu0 0.0
        %3763 = vmatprep.subr.mxu0 0.0
        %3764 = vmatpush1.msra.mxu0 0.0
        %3765 = vmatprep.subr.mxu0 0.0
        %3766 = vmatpush1.msra.mxu0 0.0
        %3767 = vmatprep.subr.mxu0 0.0
        %3768 = vmatpush1.msra.mxu0 0.0
        %3769 = vmatprep.subr.mxu0 0.0
        %3770 = vmatpush1.msra.mxu0 0.0
        %3771 = vmatprep.subr.mxu0 0.0
        %3772 = vmatpush1.msra.mxu0 0.0
        %3773 = vmatprep.subr.mxu0 0.0
        %3774 = vmatpush1.msra.mxu0 0.0
        %3775 = vmatprep.subr.mxu0 0.0
        %3776 = vmatpush1.msra.mxu0 0.0
        %3777 = vmatprep.subr.mxu0 0.0
        %3778 = vmatpush1.msra.mxu0 0.0
        %3779 = vmatprep.subr.mxu0 0.0
        %3780 = vmatpush1.msra.mxu0 0.0
        %3781 = vmatprep.subr.mxu0 0.0
        %3782 = vmatpush1.msra.mxu0 0.0
        %3783 = vmatprep.subr.mxu0 0.0
        %3784 = vmatpush1.msra.mxu0 0.0
        %3785 = vmatprep.subr.mxu0 0.0
        %3786 = vmatpush1.msra.mxu0 0.0
        %3787 = vmatprep.subr.mxu0 0.0
        %3788 = vmatpush1.msra.mxu0 0.0
        %3789 = vmatprep.subr.mxu0 0.0
        %3790 = vmatpush1.msra.mxu0 0.0
        %3791 = vmatprep.subr.mxu0 0.0
        %3792 = vmatpush1.msra.mxu0 0.0
        %3793 = vmatprep.subr.mxu0 0.0
        %3794 = vmatpush1.msra.mxu0 0.0
        %3795 = vmatprep.subr.mxu0 0.0
        %3796 = vmatpush1.msra.mxu0 0.0
        %3797 = vmatprep.subr.mxu0 0.0
        %3798 = vmatpush1.msra.mxu0 0.0
        %3799 = vmatprep.subr.mxu0 0.0
        %3800 = vmatpush1.msra.mxu0 0.0
        %3801 = vmatprep.subr.mxu0 0.0
        %3802 = vmatpush1.msra.mxu0 0.0
        %3803 = vmatprep.subr.mxu0 0.0
        %3804 = vmatpush1.msra.mxu0 0.0
        %3805 = vmatprep.subr.mxu0 0.0
        %3806 = vmatpush1.msra.mxu0 0.0
        %3807 = vmatprep.mubr.f32.mxu0 0.0
        %3808 = vmatmul.mubr.f32.gmra.mrb[0].mxu0 %v3741
        %v3809 = vpop.f32.mrb[0].mxu0
        %v3810 = vadd.f32 %v3738, %v3809
        %v3811 = vpop.f32.mrb[0].mxu0
        %3812 = vdwg.mxu0
        %v3813 = vadd.f32 %v3101, %v3810
        %s3814 = scalar_lea.vmem [#allocation17], 2
        %v3815 = vld [vmem:[%s3814] sm:$0x1]
        %s3816 = scalar_lea.vmem [#allocation18], 2
        %v3817 = vld [vmem:[%s3816] sm:$0x1]
        %v3818 = vsel %vm1258, %v3813, 0.0
        %3819 = vadd.xlane.f32.xlu0 %v3818
        %v3820 = vpop.xlane.xlu0 %3819
        %v3821 = vmul.f32 %v3820, %v1262
        %v3822 = vsub.f32 %v3813, %v3821
        %v3823 = vmul.f32 %v3822, %v3822
        %v3824 = vsel %vm1258, %v3823, 0.0
        %3825 = vadd.xlane.f32.xlu0 %v3824
        %v3826 = vpop.xlane.xlu0 %3825
        %v3827 = vmul.f32 %v3826, %v1269
        %v3829 = vlaneseq
        %v3830 = vshrl.u32 %v3829, 7
        %v3831 = vsub.s32 0, %v3830
        %v3832 = vrot.slane %v3815, %v3831
        %v3834 = vmul.f32 %v3832, %v3822
        %v3835 = vrsqrt.pop %v3827
        %v3836 = vmul.f32 %v3827, %v3835
        %vm3837 = vcmp.eq.f32.partialorder %v3827, inf
        %v3838 = vsel %vm3837, %v3827, %v3836
        %vm3839 = vcmp.eq.f32.partialorder %v3827, 0.0
        %v3840 = vand.u32 %v3827, 2147483648
        %v3841 = vsel %vm3839, %v3840, %v3838
        %v3842 = vadd.f32 %v3841, 1e-06
        %v3843 = vrcp.pop %v3842
        %v3844 = vmul.f32 %v3834, %v3843
        %v3846 = vlaneseq
        %v3847 = vshrl.u32 %v3846, 7
        %v3848 = vsub.s32 0, %v3847
        %v3849 = vrot.slane %v3817, %v3848
        %v3851 = vadd.f32 %v3844, %v3849
        %s3852 = scalar_lea.vmem [#allocation20], 64
        %v3853 = vld [vmem:[%s3852] sm:$0xff]
        %v3854 = vld [vmem:[%s3852 + $0x8] sm:$0xff]
        %v3855 = vld [vmem:[%s3852 + $0x10] sm:$0xff]
        %v3856 = vld [vmem:[%s3852 + $0x18] sm:$0xff]
        %s3857 = scalar_lea.vmem [#allocation21], 2
        %v3858 = vld [vmem:[%s3857] sm:$0x1]
        %v3860 = vlaneseq
        %v3861 = vshrl.u32 %v3860, 7
        %v3862 = vsub.s32 0, %v3861
        %v3863 = vrot.slane %v3858, %v3862
        %v3866 = vsel %vm1258, %v3851, 0
        %3868 = vmatprep.subr.mxu0 0.0
        %3869 = vmatpush1.msra.mxu0 %v3853
        %3870 = vmatprep.subr.mxu0 0.0
        %3871 = vmatpush1.msra.mxu0 %v3854
        %3872 = vmatprep.subr.mxu0 0.0
        %3873 = vmatpush1.msra.mxu0 %v3855
        %3874 = vmatprep.subr.mxu0 0.0
        %3875 = vmatpush1.msra.mxu0 %v3856
        %3876 = vmatprep.subr.mxu0 0.0
        %3877 = vmatpush1.msra.mxu0 0.0
        %3878 = vmatprep.subr.mxu0 0.0
        %3879 = vmatpush1.msra.mxu0 0.0
        %3880 = vmatprep.subr.mxu0 0.0
        %3881 = vmatpush1.msra.mxu0 0.0
        %3882 = vmatprep.subr.mxu0 0.0
        %3883 = vmatpush1.msra.mxu0 0.0
        %3884 = vmatprep.subr.mxu0 0.0
        %3885 = vmatpush1.msra.mxu0 0.0
        %3886 = vmatprep.subr.mxu0 0.0
        %3887 = vmatpush1.msra.mxu0 0.0
        %3888 = vmatprep.subr.mxu0 0.0
        %3889 = vmatpush1.msra.mxu0 0.0
        %3890 = vmatprep.subr.mxu0 0.0
        %3891 = vmatpush1.msra.mxu0 0.0
        %3892 = vmatprep.subr.mxu0 0.0
        %3893 = vmatpush1.msra.mxu0 0.0
        %3894 = vmatprep.subr.mxu0 0.0
        %3895 = vmatpush1.msra.mxu0 0.0
        %3896 = vmatprep.subr.mxu0 0.0
        %3897 = vmatpush1.msra.mxu0 0.0
        %3898 = vmatprep.subr.mxu0 0.0
        %3899 = vmatpush1.msra.mxu0 0.0
        %3900 = vmatprep.subr.mxu0 0.0
        %3901 = vmatpush1.msra.mxu0 0.0
        %3902 = vmatprep.subr.mxu0 0.0
        %3903 = vmatpush1.msra.mxu0 0.0
        %3904 = vmatprep.subr.mxu0 0.0
        %3905 = vmatpush1.msra.mxu0 0.0
        %3906 = vmatprep.subr.mxu0 0.0
        %3907 = vmatpush1.msra.mxu0 0.0
        %3908 = vmatprep.subr.mxu0 0.0
        %3909 = vmatpush1.msra.mxu0 0.0
        %3910 = vmatprep.subr.mxu0 0.0
        %3911 = vmatpush1.msra.mxu0 0.0
        %3912 = vmatprep.subr.mxu0 0.0
        %3913 = vmatpush1.msra.mxu0 0.0
        %3914 = vmatprep.subr.mxu0 0.0
        %3915 = vmatpush1.msra.mxu0 0.0
        %3916 = vmatprep.subr.mxu0 0.0
        %3917 = vmatpush1.msra.mxu0 0.0
        %3918 = vmatprep.subr.mxu0 0.0
        %3919 = vmatpush1.msra.mxu0 0.0
        %3920 = vmatprep.subr.mxu0 0.0
        %3921 = vmatpush1.msra.mxu0 0.0
        %3922 = vmatprep.subr.mxu0 0.0
        %3923 = vmatpush1.msra.mxu0 0.0
        %3924 = vmatprep.subr.mxu0 0.0
        %3925 = vmatpush1.msra.mxu0 0.0
        %3926 = vmatprep.subr.mxu0 0.0
        %3927 = vmatpush1.msra.mxu0 0.0
        %3928 = vmatprep.subr.mxu0 0.0
        %3929 = vmatpush1.msra.mxu0 0.0
        %3930 = vmatprep.subr.mxu0 0.0
        %3931 = vmatpush1.msra.mxu0 0.0
        %3932 = vmatprep.mubr.f32.mxu0 0.0
        %3933 = vmatmul.mubr.f32.gmra.mrb[0].mxu0 %v3866
        %v3934 = vpop.f32.mrb[0].mxu0
        %v3935 = vadd.f32 %v3863, %v3934
        %v3936 = vpop.f32.mrb[0].mxu0
        %3937 = vdwg.mxu0
        %v3938 = vmax.f32 %v3935, 0.0
        %s3939 = scalar_lea.vmem %s39, 128
        %v3940 = vld [vmem:[%s3939] sm:$0xff]
        %v3941 = vld [vmem:[%s3939 + $0x8] sm:$0xff]
        %v3942 = vld [vmem:[%s3939 + $0x10] sm:$0xff]
        %v3943 = vld [vmem:[%s3939 + $0x18] sm:$0xff]
        %v3944 = vld [vmem:[%s3939 + $0x20] sm:$0xff]
        %v3945 = vld [vmem:[%s3939 + $0x28] sm:$0xff]
        %v3946 = vld [vmem:[%s3939 + $0x30] sm:$0xff]
        %v3947 = vld [vmem:[%s3939 + $0x38] sm:$0xff]
        %s3948 = scalar_lea.vmem [#allocation23], 2
        %v3949 = vld [vmem:[%s3948] sm:$0x1]
        %v3951 = vlaneseq
        %v3952 = vshrl.u32 %v3951, 7
        %v3953 = vsub.s32 0, %v3952
        %v3954 = vrot.slane %v3949, %v3953
        %v3957 = vsel %vm2099, %v3938, 0
        %3959 = vmatprep.subr.mxu0 0.0
        %3960 = vmatpush1.msra.mxu0 %v3940
        %3961 = vmatprep.subr.mxu0 0.0
        %3962 = vmatpush1.msra.mxu0 %v3941
        %3963 = vmatprep.subr.mxu0 0.0
        %3964 = vmatpush1.msra.mxu0 %v3942
        %3965 = vmatprep.subr.mxu0 0.0
        %3966 = vmatpush1.msra.mxu0 %v3943
        %3967 = vmatprep.subr.mxu0 0.0
        %3968 = vmatpush1.msra.mxu0 %v3944
        %3969 = vmatprep.subr.mxu0 0.0
        %3970 = vmatpush1.msra.mxu0 %v3945
        %3971 = vmatprep.subr.mxu0 0.0
        %3972 = vmatpush1.msra.mxu0 %v3946
        %3973 = vmatprep.subr.mxu0 0.0
        %3974 = vmatpush1.msra.mxu0 %v3947
        %3975 = vmatprep.subr.mxu0 0.0
        %3976 = vmatpush1.msra.mxu0 0.0
        %3977 = vmatprep.subr.mxu0 0.0
        %3978 = vmatpush1.msra.mxu0 0.0
        %3979 = vmatprep.subr.mxu0 0.0
        %3980 = vmatpush1.msra.mxu0 0.0
        %3981 = vmatprep.subr.mxu0 0.0
        %3982 = vmatpush1.msra.mxu0 0.0
        %3983 = vmatprep.subr.mxu0 0.0
        %3984 = vmatpush1.msra.mxu0 0.0
        %3985 = vmatprep.subr.mxu0 0.0
        %3986 = vmatpush1.msra.mxu0 0.0
        %3987 = vmatprep.subr.mxu0 0.0
        %3988 = vmatpush1.msra.mxu0 0.0
        %3989 = vmatprep.subr.mxu0 0.0
        %3990 = vmatpush1.msra.mxu0 0.0
        %3991 = vmatprep.subr.mxu0 0.0
        %3992 = vmatpush1.msra.mxu0 0.0
        %3993 = vmatprep.subr.mxu0 0.0
        %3994 = vmatpush1.msra.mxu0 0.0
        %3995 = vmatprep.subr.mxu0 0.0
        %3996 = vmatpush1.msra.mxu0 0.0
        %3997 = vmatprep.subr.mxu0 0.0
        %3998 = vmatpush1.msra.mxu0 0.0
        %3999 = vmatprep.subr.mxu0 0.0
        %4000 = vmatpush1.msra.mxu0 0.0
        %4001 = vmatprep.subr.mxu0 0.0
        %4002 = vmatpush1.msra.mxu0 0.0
        %4003 = vmatprep.subr.mxu0 0.0
        %4004 = vmatpush1.msra.mxu0 0.0
        %4005 = vmatprep.subr.mxu0 0.0
        %4006 = vmatpush1.msra.mxu0 0.0
        %4007 = vmatprep.subr.mxu0 0.0
        %4008 = vmatpush1.msra.mxu0 0.0
        %4009 = vmatprep.subr.mxu0 0.0
        %4010 = vmatpush1.msra.mxu0 0.0
        %4011 = vmatprep.subr.mxu0 0.0
        %4012 = vmatpush1.msra.mxu0 0.0
        %4013 = vmatprep.subr.mxu0 0.0
        %4014 = vmatpush1.msra.mxu0 0.0
        %4015 = vmatprep.subr.mxu0 0.0
        %4016 = vmatpush1.msra.mxu0 0.0
        %4017 = vmatprep.subr.mxu0 0.0
        %4018 = vmatpush1.msra.mxu0 0.0
        %4019 = vmatprep.subr.mxu0 0.0
        %4020 = vmatpush1.msra.mxu0 0.0
        %4021 = vmatprep.subr.mxu0 0.0
        %4022 = vmatpush1.msra.mxu0 0.0
        %4023 = vmatprep.mubr.f32.mxu0 0.0
        %4024 = vmatmul.mubr.f32.gmra.mrb[0].mxu0 %v3957
        %v4025 = vpop.f32.mrb[0].mxu0
        %v4026 = vadd.f32 %v3954, %v4025
        %v4027 = vpop.f32.mrb[0].mxu0
        %4028 = vdwg.mxu0
        %v4029 = vadd.f32 %v3813, %v4026
        %v4030 = vld [vmem:[%s43] sm:$0xff]
        %v4031 = vld [vmem:[%s43 + $0x8] sm:$0xff]
        %v4032 = vld [vmem:[%s43 + $0x10] sm:$0xff]
        %v4033 = vld [vmem:[%s43 + $0x18] sm:$0xff]
        %v4034 = vld [vmem:[#allocation24] sm:$0x1]
        %v4036 = vlaneseq
        %v4037 = vshrl.u32 %v4036, 7
        %v4038 = vsub.s32 0, %v4037
        %v4039 = vrot.slane %v4034, %v4038
        %v4042 = vsel %vm1258, %v4029, 0
        %4044 = vmatprep.subr.mxu0 0.0
        %4045 = vmatpush1.msra.mxu0 %v4030
        %4046 = vmatprep.subr.mxu0 0.0
        %4047 = vmatpush1.msra.mxu0 %v4031
        %4048 = vmatprep.subr.mxu0 0.0
        %4049 = vmatpush1.msra.mxu0 %v4032
        %4050 = vmatprep.subr.mxu0 0.0
        %4051 = vmatpush1.msra.mxu0 %v4033
        %4052 = vmatprep.subr.mxu0 0.0
        %4053 = vmatpush1.msra.mxu0 0.0
        %4054 = vmatprep.subr.mxu0 0.0
        %4055 = vmatpush1.msra.mxu0 0.0
        %4056 = vmatprep.subr.mxu0 0.0
        %4057 = vmatpush1.msra.mxu0 0.0
        %4058 = vmatprep.subr.mxu0 0.0
        %4059 = vmatpush1.msra.mxu0 0.0
        %4060 = vmatprep.subr.mxu0 0.0
        %4061 = vmatpush1.msra.mxu0 0.0
        %4062 = vmatprep.subr.mxu0 0.0
        %4063 = vmatpush1.msra.mxu0 0.0
        %4064 = vmatprep.subr.mxu0 0.0
        %4065 = vmatpush1.msra.mxu0 0.0
        %4066 = vmatprep.subr.mxu0 0.0
        %4067 = vmatpush1.msra.mxu0 0.0
        %4068 = vmatprep.subr.mxu0 0.0
        %4069 = vmatpush1.msra.mxu0 0.0
        %4070 = vmatprep.subr.mxu0 0.0
        %4071 = vmatpush1.msra.mxu0 0.0
        %4072 = vmatprep.subr.mxu0 0.0
        %4073 = vmatpush1.msra.mxu0 0.0
        %4074 = vmatprep.subr.mxu0 0.0
        %4075 = vmatpush1.msra.mxu0 0.0
        %4076 = vmatprep.subr.mxu0 0.0
        %4077 = vmatpush1.msra.mxu0 0.0
        %4078 = vmatprep.subr.mxu0 0.0
        %4079 = vmatpush1.msra.mxu0 0.0
        %4080 = vmatprep.subr.mxu0 0.0
        %4081 = vmatpush1.msra.mxu0 0.0
        %4082 = vmatprep.subr.mxu0 0.0
        %4083 = vmatpush1.msra.mxu0 0.0
        %4084 = vmatprep.subr.mxu0 0.0
        %4085 = vmatpush1.msra.mxu0 0.0
        %4086 = vmatprep.subr.mxu0 0.0
        %4087 = vmatpush1.msra.mxu0 0.0
        %4088 = vmatprep.subr.mxu0 0.0
        %4089 = vmatpush1.msra.mxu0 0.0
        %4090 = vmatprep.subr.mxu0 0.0
        %4091 = vmatpush1.msra.mxu0 0.0
        %4092 = vmatprep.subr.mxu0 0.0
        %4093 = vmatpush1.msra.mxu0 0.0
        %4094 = vmatprep.subr.mxu0 0.0
        %4095 = vmatpush1.msra.mxu0 0.0
        %4096 = vmatprep.subr.mxu0 0.0
        %4097 = vmatpush1.msra.mxu0 0.0
        %4098 = vmatprep.subr.mxu0 0.0
        %4099 = vmatpush1.msra.mxu0 0.0
        %4100 = vmatprep.subr.mxu0 0.0
        %4101 = vmatpush1.msra.mxu0 0.0
        %4102 = vmatprep.subr.mxu0 0.0
        %4103 = vmatpush1.msra.mxu0 0.0
        %4104 = vmatprep.subr.mxu0 0.0
        %4105 = vmatpush1.msra.mxu0 0.0
        %4106 = vmatprep.subr.mxu0 0.0
        %4107 = vmatpush1.msra.mxu0 0.0
        %4108 = vmatprep.mubr.f32.mxu0 0.0
        %4109 = vmatmul.mubr.f32.gmra.mrb[0].mxu0 %v4042
        %v4110 = vpop.f32.mrb[0].mxu0
        %v4111 = vadd.f32 %v4039, %v4110
        %v4112 = vpop.f32.mrb[0].mxu0
        %4113 = vdwg.mxu0
        %v4114 = vmax.f32 %v4111, 0.0
        %v4115 = vld [vmem:[%s47] sm:$0xff]
        %v4116 = vld [vmem:[%s47 + $0x8] sm:$0xff]
        %v4117 = vld [vmem:[#allocation26] sm:$0x1]
        %v4119 = vlaneseq
        %v4120 = vshrl.u32 %v4119, 7
        %v4121 = vsub.s32 0, %v4120
        %v4122 = vrot.slane %v4117, %v4121
        %v4125 = vsel %vm1541, %v4114, 0
        %4127 = vmatprep.subr.mxu0 0.0
        %4128 = vmatpush1.msra.mxu0 %v4115
        %4129 = vmatprep.subr.mxu0 0.0
        %4130 = vmatpush1.msra.mxu0 %v4116
        %4131 = vmatprep.subr.mxu0 0.0
        %4132 = vmatpush1.msra.mxu0 0.0
        %4133 = vmatprep.subr.mxu0 0.0
        %4134 = vmatpush1.msra.mxu0 0.0
        %4135 = vmatprep.subr.mxu0 0.0
        %4136 = vmatpush1.msra.mxu0 0.0
        %4137 = vmatprep.subr.mxu0 0.0
        %4138 = vmatpush1.msra.mxu0 0.0
        %4139 = vmatprep.subr.mxu0 0.0
        %4140 = vmatpush1.msra.mxu0 0.0
        %4141 = vmatprep.subr.mxu0 0.0
        %4142 = vmatpush1.msra.mxu0 0.0
        %4143 = vmatprep.subr.mxu0 0.0
        %4144 = vmatpush1.msra.mxu0 0.0
        %4145 = vmatprep.subr.mxu0 0.0
        %4146 = vmatpush1.msra.mxu0 0.0
        %4147 = vmatprep.subr.mxu0 0.0
        %4148 = vmatpush1.msra.mxu0 0.0
        %4149 = vmatprep.subr.mxu0 0.0
        %4150 = vmatpush1.msra.mxu0 0.0
        %4151 = vmatprep.subr.mxu0 0.0
        %4152 = vmatpush1.msra.mxu0 0.0
        %4153 = vmatprep.subr.mxu0 0.0
        %4154 = vmatpush1.msra.mxu0 0.0
        %4155 = vmatprep.subr.mxu0 0.0
        %4156 = vmatpush1.msra.mxu0 0.0
        %4157 = vmatprep.subr.mxu0 0.0
        %4158 = vmatpush1.msra.mxu0 0.0
        %4159 = vmatprep.subr.mxu0 0.0
        %4160 = vmatpush1.msra.mxu0 0.0
        %4161 = vmatprep.subr.mxu0 0.0
        %4162 = vmatpush1.msra.mxu0 0.0
        %4163 = vmatprep.subr.mxu0 0.0
        %4164 = vmatpush1.msra.mxu0 0.0
        %4165 = vmatprep.subr.mxu0 0.0
        %4166 = vmatpush1.msra.mxu0 0.0
        %4167 = vmatprep.subr.mxu0 0.0
        %4168 = vmatpush1.msra.mxu0 0.0
        %4169 = vmatprep.subr.mxu0 0.0
        %4170 = vmatpush1.msra.mxu0 0.0
        %4171 = vmatprep.subr.mxu0 0.0
        %4172 = vmatpush1.msra.mxu0 0.0
        %4173 = vmatprep.subr.mxu0 0.0
        %4174 = vmatpush1.msra.mxu0 0.0
        %4175 = vmatprep.subr.mxu0 0.0
        %4176 = vmatpush1.msra.mxu0 0.0
        %4177 = vmatprep.subr.mxu0 0.0
        %4178 = vmatpush1.msra.mxu0 0.0
        %4179 = vmatprep.subr.mxu0 0.0
        %4180 = vmatpush1.msra.mxu0 0.0
        %4181 = vmatprep.subr.mxu0 0.0
        %4182 = vmatpush1.msra.mxu0 0.0
        %4183 = vmatprep.subr.mxu0 0.0
        %4184 = vmatpush1.msra.mxu0 0.0
        %4185 = vmatprep.subr.mxu0 0.0
        %4186 = vmatpush1.msra.mxu0 0.0
        %4187 = vmatprep.subr.mxu0 0.0
        %4188 = vmatpush1.msra.mxu0 0.0
        %4189 = vmatprep.subr.mxu0 0.0
        %4190 = vmatpush1.msra.mxu0 0.0
        %4191 = vmatprep.mubr.f32.mxu0 0.0
        %4192 = vmatmul.mubr.f32.gmra.mrb[0].mxu0 %v4125
        %v4193 = vpop.f32.mrb[0].mxu0
        %v4194 = vadd.f32 %v4122, %v4193
        %v4195 = vpop.f32.mrb[0].mxu0
        %4196 = vdwg.mxu0
        %v4197 = vxor.u32 %v4194, 2147483648
        %v4198 = vmul.f32 %v4197, 1.442695
        %v4199 = vpow.pop %v4198
        %v4200 = vadd.f32 %v4199, 1.0
        %v4201 = vrcp.pop %v4200
        %v4202 = vmul.f32 1.0, %v4201
        %vm4203 = vcmask 31744
        %4204 = vst.msk [vmem:[%s1149] sm:$0xff] %vm4203, %v4202
        %v4205 = vld [vmem:[%s51] sm:$0xff]
        %v4206 = vld [vmem:[%s51 + $0x8] sm:$0xff]
        %v4207 = vld [vmem:[%s51 + $0x10] sm:$0xff]
        %v4208 = vld [vmem:[%s51 + $0x18] sm:$0xff]
        %v4209 = vld [vmem:[#allocation27] sm:$0x1]
        %v4211 = vlaneseq
        %v4212 = vshrl.u32 %v4211, 7
        %v4213 = vsub.s32 0, %v4212
        %v4214 = vrot.slane %v4209, %v4213
        %4216 = vmatprep.subr.mxu0 0.0
        %4217 = vmatpush1.msra.mxu0 %v4205
        %4218 = vmatprep.subr.mxu0 0.0
        %4219 = vmatpush1.msra.mxu0 %v4206
        %4220 = vmatprep.subr.mxu0 0.0
        %4221 = vmatpush1.msra.mxu0 %v4207
        %4222 = vmatprep.subr.mxu0 0.0
        %4223 = vmatpush1.msra.mxu0 %v4208
        %4224 = vmatprep.subr.mxu0 0.0
        %4225 = vmatpush1.msra.mxu0 0.0
        %4226 = vmatprep.subr.mxu0 0.0
        %4227 = vmatpush1.msra.mxu0 0.0
        %4228 = vmatprep.subr.mxu0 0.0
        %4229 = vmatpush1.msra.mxu0 0.0
        %4230 = vmatprep.subr.mxu0 0.0
        %4231 = vmatpush1.msra.mxu0 0.0
        %4232 = vmatprep.subr.mxu0 0.0
        %4233 = vmatpush1.msra.mxu0 0.0
        %4234 = vmatprep.subr.mxu0 0.0
        %4235 = vmatpush1.msra.mxu0 0.0
        %4236 = vmatprep.subr.mxu0 0.0
        %4237 = vmatpush1.msra.mxu0 0.0
        %4238 = vmatprep.subr.mxu0 0.0
        %4239 = vmatpush1.msra.mxu0 0.0
        %4240 = vmatprep.subr.mxu0 0.0
        %4241 = vmatpush1.msra.mxu0 0.0
        %4242 = vmatprep.subr.mxu0 0.0
        %4243 = vmatpush1.msra.mxu0 0.0
        %4244 = vmatprep.subr.mxu0 0.0
        %4245 = vmatpush1.msra.mxu0 0.0
        %4246 = vmatprep.subr.mxu0 0.0
        %4247 = vmatpush1.msra.mxu0 0.0
        %4248 = vmatprep.subr.mxu0 0.0
        %4249 = vmatpush1.msra.mxu0 0.0
        %4250 = vmatprep.subr.mxu0 0.0
        %4251 = vmatpush1.msra.mxu0 0.0
        %4252 = vmatprep.subr.mxu0 0.0
        %4253 = vmatpush1.msra.mxu0 0.0
        %4254 = vmatprep.subr.mxu0 0.0
        %4255 = vmatpush1.msra.mxu0 0.0
        %4256 = vmatprep.subr.mxu0 0.0
        %4257 = vmatpush1.msra.mxu0 0.0
        %4258 = vmatprep.subr.mxu0 0.0
        %4259 = vmatpush1.msra.mxu0 0.0
        %4260 = vmatprep.subr.mxu0 0.0
        %4261 = vmatpush1.msra.mxu0 0.0
        %4262 = vmatprep.subr.mxu0 0.0
        %4263 = vmatpush1.msra.mxu0 0.0
        %4264 = vmatprep.subr.mxu0 0.0
        %4265 = vmatpush1.msra.mxu0 0.0
        %4266 = vmatprep.subr.mxu0 0.0
        %4267 = vmatpush1.msra.mxu0 0.0
        %4268 = vmatprep.subr.mxu0 0.0
        %4269 = vmatpush1.msra.mxu0 0.0
        %4270 = vmatprep.subr.mxu0 0.0
        %4271 = vmatpush1.msra.mxu0 0.0
        %4272 = vmatprep.subr.mxu0 0.0
        %4273 = vmatpush1.msra.mxu0 0.0
        %4274 = vmatprep.subr.mxu0 0.0
        %4275 = vmatpush1.msra.mxu0 0.0
        %4276 = vmatprep.subr.mxu0 0.0
        %4277 = vmatpush1.msra.mxu0 0.0
        %4278 = vmatprep.subr.mxu0 0.0
        %4279 = vmatpush1.msra.mxu0 0.0
        %4280 = vmatprep.mubr.f32.mxu0 0.0
        %4281 = vmatmul.mubr.f32.gmra.mrb[0].mxu0 %v4042
        %v4282 = vpop.f32.mrb[0].mxu0
        %v4283 = vadd.f32 %v4214, %v4282
        %v4284 = vpop.f32.mrb[0].mxu0
        %4285 = vdwg.mxu0
        %v4286 = vmax.f32 %v4283, 0.0
        %v4287 = vld [vmem:[%s55] sm:$0xff]
        %v4288 = vld [vmem:[%s55 + $0x8] sm:$0xff]
        %v4289 = vld [vmem:[#allocation29] sm:$0x1]
        %v4291 = vlaneseq
        %v4292 = vshrl.u32 %v4291, 7
        %v4293 = vsub.s32 0, %v4292
        %v4294 = vrot.slane %v4289, %v4293
        %v4297 = vsel %vm1541, %v4286, 0
        %4299 = vmatprep.subr.mxu0 0.0
        %4300 = vmatpush1.msra.mxu0 %v4287
        %4301 = vmatprep.subr.mxu0 0.0
        %4302 = vmatpush1.msra.mxu0 %v4288
        %4303 = vmatprep.subr.mxu0 0.0
        %4304 = vmatpush1.msra.mxu0 0.0
        %4305 = vmatprep.subr.mxu0 0.0
        %4306 = vmatpush1.msra.mxu0 0.0
        %4307 = vmatprep.subr.mxu0 0.0
        %4308 = vmatpush1.msra.mxu0 0.0
        %4309 = vmatprep.subr.mxu0 0.0
        %4310 = vmatpush1.msra.mxu0 0.0
        %4311 = vmatprep.subr.mxu0 0.0
        %4312 = vmatpush1.msra.mxu0 0.0
        %4313 = vmatprep.subr.mxu0 0.0
        %4314 = vmatpush1.msra.mxu0 0.0
        %4315 = vmatprep.subr.mxu0 0.0
        %4316 = vmatpush1.msra.mxu0 0.0
        %4317 = vmatprep.subr.mxu0 0.0
        %4318 = vmatpush1.msra.mxu0 0.0
        %4319 = vmatprep.subr.mxu0 0.0
        %4320 = vmatpush1.msra.mxu0 0.0
        %4321 = vmatprep.subr.mxu0 0.0
        %4322 = vmatpush1.msra.mxu0 0.0
        %4323 = vmatprep.subr.mxu0 0.0
        %4324 = vmatpush1.msra.mxu0 0.0
        %4325 = vmatprep.subr.mxu0 0.0
        %4326 = vmatpush1.msra.mxu0 0.0
        %4327 = vmatprep.subr.mxu0 0.0
        %4328 = vmatpush1.msra.mxu0 0.0
        %4329 = vmatprep.subr.mxu0 0.0
        %4330 = vmatpush1.msra.mxu0 0.0
        %4331 = vmatprep.subr.mxu0 0.0
        %4332 = vmatpush1.msra.mxu0 0.0
        %4333 = vmatprep.subr.mxu0 0.0
        %4334 = vmatpush1.msra.mxu0 0.0
        %4335 = vmatprep.subr.mxu0 0.0
        %4336 = vmatpush1.msra.mxu0 0.0
        %4337 = vmatprep.subr.mxu0 0.0
        %4338 = vmatpush1.msra.mxu0 0.0
        %4339 = vmatprep.subr.mxu0 0.0
        %4340 = vmatpush1.msra.mxu0 0.0
        %4341 = vmatprep.subr.mxu0 0.0
        %4342 = vmatpush1.msra.mxu0 0.0
        %4343 = vmatprep.subr.mxu0 0.0
        %4344 = vmatpush1.msra.mxu0 0.0
        %4345 = vmatprep.subr.mxu0 0.0
        %4346 = vmatpush1.msra.mxu0 0.0
        %4347 = vmatprep.subr.mxu0 0.0
        %4348 = vmatpush1.msra.mxu0 0.0
        %4349 = vmatprep.subr.mxu0 0.0
        %4350 = vmatpush1.msra.mxu0 0.0
        %4351 = vmatprep.subr.mxu0 0.0
        %4352 = vmatpush1.msra.mxu0 0.0
        %4353 = vmatprep.subr.mxu0 0.0
        %4354 = vmatpush1.msra.mxu0 0.0
        %4355 = vmatprep.subr.mxu0 0.0
        %4356 = vmatpush1.msra.mxu0 0.0
        %4357 = vmatprep.subr.mxu0 0.0
        %4358 = vmatpush1.msra.mxu0 0.0
        %4359 = vmatprep.subr.mxu0 0.0
        %4360 = vmatpush1.msra.mxu0 0.0
        %4361 = vmatprep.subr.mxu0 0.0
        %4362 = vmatpush1.msra.mxu0 0.0
        %4363 = vmatprep.mubr.f32.mxu0 0.0
        %4364 = vmatmul.mubr.f32.gmra.mrb[0].mxu0 %v4297
        %v4365 = vpop.f32.mrb[0].mxu0
        %v4366 = vadd.f32 %v4294, %v4365
        %v4367 = vpop.f32.mrb[0].mxu0
        %4368 = vdwg.mxu0
        %v4369 = vtanh.pop %v4366
        %vm4370 = vcmask 15360
        %4371 = vst.msk [vmem:[%s1153] sm:$0xff] %vm4370, %v4369
        %p4372 = scmp.lt.s32.totalorder %s88, 1
        %s4373 = scalar_select %p4372, %s88, 1
        %s4374 = smul.addr %s4373, 8
        %s4375 = scalar_lea.vmem %s59, %s4374
        %p4376 = scmp.lt.s32.totalorder %s88, 1
        %s4377 = scalar_select %p4376, %s88, 1
        %s4378 = smul.addr %s4377, 8
        %s4379 = scalar_lea.vmem %s61, %s4378
        // Predicated region
        $region201: #{forward.1} parent=131 // pred_check
          %p4380 = pneg %p699
        $region202: #{forward.1} parent=131 // pred_check_branch
          %4382 = sbr.rel (%p4380) target = $region204
        $region203: #{forward.1} parent=131 // pred_region
          _
        $region204: #{forward.1} parent=131 // pred_fallthru
          _
        // Predicated region
        $region205: #{forward.1} parent=131 // pred_check
          %p4383 = pneg %p725
        $region206: #{forward.1} parent=131 // pred_check_branch
          %4385 = sbr.rel (%p4383) target = $region208
        $region207: #{forward.1} parent=131 // pred_region
          _
        $region208: #{forward.1} parent=131 // pred_fallthru
          _
      $region132: #{forward.1} parent=5 // pred_fallthru
        _
      %p4386 = scmp.le.s32.totalorder 2, %s83
      // Predicated region
      $region209: #{forward.1} parent=5 // pred_check
        %p4387 = pneg %p4386
      $region210: #{forward.1} parent=5 // pred_check_branch
        %4389 = sbr.rel (%p4387) target = $region212
      $region211: #{forward.1} parent=5 // pred_region
        %s4390 = ssub.s32 %s83, 2
        // Predicated region
        $region213: #{forward.1} parent=211 // pred_check
          %p4391 = pneg %p705
        $region214: #{forward.1} parent=211 // pred_check_branch
          %4393 = sbr.rel (%p4391) target = $region216
        $region215: #{forward.1} parent=211 // pred_region
          %p4394 = scmp.lt.s32.totalorder %s89, 1
          %s4395 = scalar_select %p4394, %s89, 1
          %s4396 = smul.addr %s4395, 8
          %s4397 = scalar_lea.vmem %s59, %s4396
        $region216: #{forward.1} parent=211 // pred_fallthru
          _
        // Predicated region
        $region217: #{forward.1} parent=211 // pred_check
          %p4398 = pneg %p731
        $region218: #{forward.1} parent=211 // pred_check_branch
          %4400 = sbr.rel (%p4398) target = $region220
        $region219: #{forward.1} parent=211 // pred_region
          %p4401 = scmp.lt.s32.totalorder %s89, 1
          %s4402 = scalar_select %p4401, %s89, 1
          %s4403 = smul.addr %s4402, 8
          %s4404 = scalar_lea.vmem %s61, %s4403
        $region220: #{forward.1} parent=211 // pred_fallthru
          _
      $region212: #{forward.1} parent=5 // pred_fallthru
        _
    $region6: #{forward.1} parent=1 // loop_footer
      %s87 = sadd.s32 1, %s83
    $region7: #{forward.1} parent=1 // loop_footer_branch
      %82 = sbr.rel target = $region3
    $region8: #{forward.1} parent=1 // loop_exit
      _
    %4405 = vsyncpa [#allocation5], 1
    %s4406 = scalar_lea.sflag [#allocation5], 1
    %4407 = vsyncpa %s4406, 1
    %4408 = vsyncpa [#allocation7], 1
    %4409 = vsyncpa [#allocation10], 1
    %4410 = vsyncpa [#allocation13], 1
    %4411 = vsyncpa [#allocation16], 1
    %4412 = vsyncpa [#allocation19], 1
    %4413 = vsyncpa [#allocation22], 1
    %4414 = vsyncpa [#allocation25], 1
    %4415 = vsyncpa [#allocation28], 1

</llo_original>
